<compile_context>
chip_gen: v7x
topology: tpu7x:2x2x1
jax: 0.10.0
libtpu: 0.0.40
codegen_flags: <defaults>
</compile_context>

<pallas_src>
import functools

import jax
import jax.numpy as jnp
from jax.experimental import pallas as pl
from jax.experimental.pallas import tpu as pltpu


# ----------------------------------------------------------------------------
# Fused kernel: all LSTM layers + FC + ReLU in one pallas_call
# ----------------------------------------------------------------------------
def _fused_lstm_kernel(*refs, T, B, H, ndir, layers, unroll):
    G = 4 * H
    NB = ndir * B

    # refs = [x, (w_ih, w_hh_bd, b) * layers, w_fc, b_fc] + [out] + scratch
    x_ref = refs[0]
    n_in = 1 + 3 * layers + 2
    w_fc_ref = refs[n_in - 2]
    b_fc_ref = refs[n_in - 1]
    out_ref = refs[n_in]
    scratch = refs[n_in + 1:]
    xp_planes = scratch[0:ndir]            # per-direction x-projection, (T*B, 4H)
    seq_planes = scratch[ndir:2 * ndir]    # per-direction hidden seq,   (T*B, H)
    h_sc = scratch[2 * ndir]               # (ndir*B, ndir*H) block-diagonal h
    c_sc = scratch[2 * ndir + 1]           # (ndir*B, H)

    # ---- Static masks, hoisted out of all loops.
    lane = jax.lax.broadcasted_iota(jnp.int32, (NB, G), 1)
    g_mask = jnp.logical_and(lane >= 2 * H, lane < 3 * H)     # tanh-gate lanes
    if ndir == 2:
        row = jax.lax.broadcasted_iota(jnp.int32, (NB, ndir * H), 0)
        col = jax.lax.broadcasted_iota(jnp.int32, (NB, ndir * H), 1)
        bd_mask = ((row < B) == (col < H)).astype(jnp.float32)  # block-diag mask

    for l in range(layers):
        w_ih_ref = refs[1 + 3 * l]         # (D_l, ndir*4H)   pre-transposed
        w_hh_ref = refs[2 + 3 * l]         # (ndir*H, 4H)     block-stacked
        b_ref = refs[3 + 3 * l]            # (1, ndir*4H)     b_ih + b_hh

        # -- Hoisted input projection: whole sequence, both directions, one pass.
        if l == 0:
            xp_all = jnp.dot(x_ref[...], w_ih_ref[...],
                             preferred_element_type=jnp.float32) + b_ref[...]
        else:
            xp_all = jnp.dot(seq_planes[0][...], w_ih_ref[0:H, :],
                             preferred_element_type=jnp.float32) + b_ref[...]
            if ndir == 2:
                xp_all = xp_all + jnp.dot(seq_planes[1][...], w_ih_ref[H:2 * H, :],
                                          preferred_element_type=jnp.float32)
        for d in range(ndir):
            xp_planes[d][...] = xp_all[:, d * G:(d + 1) * G]

        h_sc[...] = jnp.zeros_like(h_sc)
        c_sc[...] = jnp.zeros_like(c_sc)
        w_hh = w_hh_ref[...]               # loop-invariant recurrent weight

        # -- Serial recurrence: 1 MXU push + 3 EUP passes per timestep.
        @pl.loop(0, T, unroll=unroll)
        def _timestep(t):
            hw = jnp.dot(h_sc[...], w_hh, preferred_element_type=jnp.float32)
            xp_t = xp_planes[0][pl.ds(t * B, B), :]              # fwd dir @ time t
            if ndir == 2:
                xp_r = xp_planes[1][pl.ds((T - 1 - t) * B, B), :]  # rev dir @ T-1-t
                xp_t = jnp.concatenate([xp_t, xp_r], axis=0)
            gates = hw + xp_t                                    # (ndir*B, 4H)

            sig = jax.nn.sigmoid(gates)                          # full-vreg EUP
            th = jnp.tanh(gates)                                 # full-vreg EUP
            act = jnp.where(g_mask, th, sig)
            i_g = act[:, 0:H]
            f_g = act[:, H:2 * H]
            g_g = act[:, 2 * H:3 * H]
            o_g = act[:, 3 * H:4 * H]

            c_new = f_g * c_sc[...] + i_g * g_g
            h_new = o_g * jnp.tanh(c_new)
            c_sc[...] = c_new
            if ndir == 2:
                # Rebuild block-diagonal h for the next step's single matmul.
                h_sc[...] = jnp.concatenate([h_new, h_new], axis=-1) * bd_mask
                seq_planes[0][pl.ds(t * B, B), :] = h_new[0:B]
                seq_planes[1][pl.ds((T - 1 - t) * B, B), :] = h_new[B:NB]
            else:
                h_sc[...] = h_new
                seq_planes[0][pl.ds(t * B, B), :] = h_new

    # ---- Fused Linear + ReLU epilogue (per-direction partial matmuls summed).
    y = jnp.dot(seq_planes[0][...], w_fc_ref[0:H, :],
                preferred_element_type=jnp.float32)
    if ndir == 2:
        y = y + jnp.dot(seq_planes[1][...], w_fc_ref[H:2 * H, :],
                        preferred_element_type=jnp.float32)
    y = y + b_fc_ref[...]
    out_ref[...] = jnp.maximum(y, 0.0).astype(out_ref.dtype)


# ----------------------------------------------------------------------------
# Wrapper
# ----------------------------------------------------------------------------
def _full_spec(shape):
    nd = len(shape)
    return pl.BlockSpec(shape, lambda: (0,) * nd)


def simple_lstm_forward(x, lstm_params, w_fc_t, b_fc):
    """x: (T, B, D) [batch_first=False].  lstm_params[l] = (w_ih, w_hh_bd, b):
       w_ih (D_l, ndir*4H), w_hh_bd (ndir*H, 4H), b (1, ndir*4H).
       w_fc_t: (ndir*H, C), b_fc: (1, C)."""
    T, B, D0 = x.shape
    layers = len(lstm_params)
    w_hh_bd0 = lstm_params[0][1]
    H = w_hh_bd0.shape[-1] // 4
    ndir = w_hh_bd0.shape[0] // H
    G = 4 * H
    C = w_fc_t.shape[-1]

    x_flat = x.reshape(T * B, D0)          # free in XLA; kernel works flat

    in_arrays = [x_flat]
    for (w_ih, w_hh_bd, b) in lstm_params:
        in_arrays += [w_ih, w_hh_bd, b]
    in_arrays += [w_fc_t, b_fc]
    in_specs = [_full_spec(a.shape) for a in in_arrays]

    out_shape = jax.ShapeDtypeStruct((T * B, C), jnp.float32)
    out_spec = _full_spec((T * B, C))

    scratch = ([pltpu.VMEM((T * B, G), jnp.float32) for _ in range(ndir)]
               + [pltpu.VMEM((T * B, H), jnp.float32) for _ in range(ndir)]
               + [pltpu.VMEM((ndir * B, ndir * H), jnp.float32),
                  pltpu.VMEM((ndir * B, H), jnp.float32)])

    kernel = functools.partial(_fused_lstm_kernel, T=T, B=B, H=H, ndir=ndir,
                               layers=layers, unroll=bool(T <= 16))

    # Explicit VMEM budget from the actual footprint (with margin), clamped so
    # it stays valid on v5e/v6e (128 MiB phys) and v7x (64 MiB phys).
    arg_bytes = sum(a.size * a.dtype.itemsize for a in in_arrays) + (T * B) * C * 4
    scr_bytes = (ndir * (T * B) * (G + H) + ndir * B * (ndir + 1) * H) * 4
    vmem_limit = int(min(max(4 * (arg_bytes + scr_bytes), 4 << 20), 48 << 20))

    out = pl.pallas_call(
        kernel,
        out_shape=out_shape,
        in_specs=in_specs,
        out_specs=out_spec,
        scratch_shapes=scratch,
        compiler_params=pltpu.CompilerParams(vmem_limit_bytes=vmem_limit),
    )(*in_arrays)
    return out.reshape(T, B, C)


# ----------------------------------------------------------------------------
# Pure-JAX reference (same pre-transposed parameter layout)
# ----------------------------------------------------------------------------
def _ref_lstm_layer(x, w_ih_all, w_hh_bd, b_all, ndir):
    T, B, _ = x.shape
    G = w_hh_bd.shape[-1]
    H = G // 4
    outs = []
    for d in range(ndir):
        w_ih_d = w_ih_all[:, d * G:(d + 1) * G]
        w_hh_d = w_hh_bd[d * H:(d + 1) * H]
        b_d = b_all[:, d * G:(d + 1) * G]

        def step(carry, xt, w_ih_d=w_ih_d, w_hh_d=w_hh_d, b_d=b_d):
            h, c = carry
            gates = xt @ w_ih_d + h @ w_hh_d + b_d
            i, f, g, o = jnp.split(gates, 4, axis=-1)
            i, f, o = jax.nn.sigmoid(i), jax.nn.sigmoid(f), jax.nn.sigmoid(o)
            g = jnp.tanh(g)
            c = f * c + i * g
            h = o * jnp.tanh(c)
            return (h, c), h

        xs = x[::-1] if d == 1 else x
        _, hs = jax.lax.scan(step, (jnp.zeros((B, H)), jnp.zeros((B, H))), xs)
        outs.append(hs[::-1] if d == 1 else hs)
    return jnp.concatenate(outs, axis=-1) if ndir == 2 else outs[0]


def _ref_forward(x, lstm_params, w_fc_t, b_fc, *, ndir):
    h = x
    for p in lstm_params:
        h = _ref_lstm_layer(h, *p, ndir)
    T, B, F = h.shape
    y = h.reshape(T * B, F) @ w_fc_t + b_fc
    return jnp.maximum(y, 0.0).reshape(T, B, -1)


# ----------------------------------------------------------------------------
# Main
# ----------------------------------------------------------------------------
if __name__ == "__main__":
    IN_DIM, HIDDEN, LAYERS, NUM_CLASSES, BIDIRECTIONAL = 16, 32, 2, 8, True
    T, B = 8, 2
    ndir = 2 if BIDIRECTIONAL else 1

    key = jax.random.PRNGKey(0)
    bound = 1.0 / jnp.sqrt(HIDDEN)

    # PyTorch-shaped params, pre-transposed / stacked to the kernel layout:
    #   W_ih -> (D_l, ndir*4H), W_hh -> (ndir*H, 4H) block-stack, b -> b_ih+b_hh.
    lstm_params = []
    for l in range(LAYERS):
        d_in = IN_DIM if l == 0 else HIDDEN * ndir
        w_ih_cols, w_hh_rows, b_cols = [], [], []
        for d in range(ndir):
            key, k1, k2, k3, k4 = jax.random.split(key, 5)
            w_ih = jax.random.uniform(k1, (4 * HIDDEN, d_in), jnp.float32, -bound, bound)
            w_hh = jax.random.uniform(k2, (4 * HIDDEN, HIDDEN), jnp.float32, -bound, bound)
            b_ih = jax.random.uniform(k3, (4 * HIDDEN,), jnp.float32, -bound, bound)
            b_hh = jax.random.uniform(k4, (4 * HIDDEN,), jnp.float32, -bound, bound)
            w_ih_cols.append(w_ih.T)                 # (d_in, 4H)
            w_hh_rows.append(w_hh.T)                 # (H, 4H)
            b_cols.append(b_ih + b_hh)               # (4H,)
        w_ih_all = jnp.concatenate(w_ih_cols, axis=-1)        # (d_in, ndir*4H)
        w_hh_bd = jnp.concatenate(w_hh_rows, axis=0)          # (ndir*H, 4H)
        b_all = jnp.concatenate(b_cols, axis=-1)[None, :]     # (1, ndir*4H)
        lstm_params.append((w_ih_all, w_hh_bd, b_all))

    # FC parameters (pre-transposed to (ndir*H, C)).
    key, k1, k2 = jax.random.split(key, 3)
    fc_in = HIDDEN * ndir
    fc_bound = 1.0 / jnp.sqrt(fc_in)
    w_fc = jax.random.uniform(k1, (NUM_CLASSES, fc_in), jnp.float32, -fc_bound, fc_bound)
    b_fc = jax.random.uniform(k2, (1, NUM_CLASSES), jnp.float32, -fc_bound, fc_bound)
    w_fc_t = w_fc.T                                            # (ndir*H, C)

    # Input: (T, B, IN_DIM)  (PyTorch LSTM default layout, batch_first=False)
    key, kx = jax.random.split(key)
    x = jax.random.normal(kx, (T, B, IN_DIM), jnp.float32)

    out = jax.jit(simple_lstm_forward)(x, lstm_params, w_fc_t, b_fc)
    out = jax.block_until_ready(out)
    assert out.shape == (T, B, NUM_CLASSES), out.shape

    # Sanity check against a pure-JAX reference (all-f32 path -> tight tolerance).
    ref = _ref_forward(x, lstm_params, w_fc_t, b_fc, ndir=ndir)
    err = float(jnp.abs(out - ref).max())
    assert jnp.allclose(out, ref, atol=1e-4, rtol=1e-4), err

    print("KERNEL_OK")
</pallas_src>

<mosaic_0001>
module attributes {stable_mosaic.version = 11 : i64} {
  func.func @_fused_lstm_kernel(%arg0: memref<16x16xf32, #tpu.memory_space<vmem>>, %arg1: memref<16x256xf32, #tpu.memory_space<vmem>>, %arg2: memref<64x128xf32, #tpu.memory_space<vmem>>, %arg3: memref<1x256xf32, #tpu.memory_space<vmem>>, %arg4: memref<64x256xf32, #tpu.memory_space<vmem>>, %arg5: memref<64x128xf32, #tpu.memory_space<vmem>>, %arg6: memref<1x256xf32, #tpu.memory_space<vmem>>, %arg7: memref<64x8xf32, #tpu.memory_space<vmem>>, %arg8: memref<1x8xf32, #tpu.memory_space<vmem>>, %arg9: memref<16x8xf32, #tpu.memory_space<vmem>>, %arg10: memref<16x128xf32, #tpu.memory_space<vmem>>, %arg11: memref<16x128xf32, #tpu.memory_space<vmem>>, %arg12: memref<16x32xf32, #tpu.memory_space<vmem>>, %arg13: memref<16x32xf32, #tpu.memory_space<vmem>>, %arg14: memref<4x64xf32, #tpu.memory_space<vmem>>, %arg15: memref<4x32xf32, #tpu.memory_space<vmem>>) attributes {dimension_semantics = [], scalar_prefetch = 0 : i64, scratch_operands = 6 : i64, tpu.core_type = #tpu.core_type<tc>} {
    %0 = tpu.iota {dimensions = array<i32: 1>} : vector<4x128xi32>
    %c64_i32 = arith.constant 64 : i32
    %1 = vector.broadcast %c64_i32 : i32 to vector<4x128xi32>
    %2 = arith.cmpi sge, %0, %1 : vector<4x128xi32>
    %c96_i32 = arith.constant 96 : i32
    %3 = vector.broadcast %c96_i32 : i32 to vector<4x128xi32>
    %4 = arith.cmpi slt, %0, %3 : vector<4x128xi32>
    %5 = arith.andi %2, %4 : vector<4x128xi1>
    %6 = tpu.iota {dimensions = array<i32: 0>} : vector<4x64xi32>
    %7 = tpu.iota {dimensions = array<i32: 1>} : vector<4x64xi32>
    %c2_i32 = arith.constant 2 : i32
    %8 = vector.broadcast %c2_i32 : i32 to vector<4x64xi32>
    %9 = arith.cmpi slt, %6, %8 : vector<4x64xi32>
    %c32_i32 = arith.constant 32 : i32
    %10 = vector.broadcast %c32_i32 : i32 to vector<4x64xi32>
    %11 = arith.cmpi slt, %7, %10 : vector<4x64xi32>
    %12 = arith.xori %9, %11 : vector<4x64xi1>
    %cst = arith.constant dense<true> : vector<4x64xi1>
    %13 = arith.xori %12, %cst : vector<4x64xi1>
    %14 = arith.extui %13 : vector<4x64xi1> to vector<4x64xi32>
    %15 = arith.sitofp %14 : vector<4x64xi32> to vector<4x64xf32>
    %c0 = arith.constant 0 : index
    %c0_0 = arith.constant 0 : index
    %16 = vector.load %arg0[%c0, %c0_0] : memref<16x16xf32, #tpu.memory_space<vmem>>, vector<16x16xf32>
    %c0_1 = arith.constant 0 : index
    %c0_2 = arith.constant 0 : index
    %17 = vector.load %arg1[%c0_1, %c0_2] : memref<16x256xf32, #tpu.memory_space<vmem>>, vector<16x256xf32>
    %cst_3 = arith.constant dense<0.000000e+00> : vector<16x256xf32>
    %18 = tpu.matmul %16, %17, %cst_3 {dimension_numbers = #tpu.dot_dimension_numbers<[1], [0], [0], [1], [0, 0, 1, 1], [], []>} : vector<16x16xf32>, vector<16x256xf32>, vector<16x256xf32> -> vector<16x256xf32>
    %c0_4 = arith.constant 0 : index
    %c0_5 = arith.constant 0 : index
    %19 = vector.load %arg3[%c0_4, %c0_5] : memref<1x256xf32, #tpu.memory_space<vmem>>, vector<1x256xf32>
    %20 = vector.broadcast %19 : vector<1x256xf32> to vector<16x256xf32>
    %21 = arith.addf %18, %20 : vector<16x256xf32>
    %22 = vector.extract_strided_slice %21 {offsets = [0, 0], sizes = [16, 128], strides = [1, 1]} : vector<16x256xf32> to vector<16x128xf32>
    %c0_6 = arith.constant 0 : index
    %c0_7 = arith.constant 0 : index
    %23 = vector.load %arg10[%c0_6, %c0_7] : memref<16x128xf32, #tpu.memory_space<vmem>>, vector<16x128xf32>
    tpu.vector_store %arg10[%c0_6, %c0_7], %22 {strides = array<i32>} : memref<16x128xf32, #tpu.memory_space<vmem>>, vector<16x128xf32>,
    %24 = vector.extract_strided_slice %21 {offsets = [0, 128], sizes = [16, 128], strides = [1, 1]} : vector<16x256xf32> to vector<16x128xf32>
    %c0_8 = arith.constant 0 : index
    %c0_9 = arith.constant 0 : index
    %25 = vector.load %arg11[%c0_8, %c0_9] : memref<16x128xf32, #tpu.memory_space<vmem>>, vector<16x128xf32>
    tpu.vector_store %arg11[%c0_8, %c0_9], %24 {strides = array<i32>} : memref<16x128xf32, #tpu.memory_space<vmem>>, vector<16x128xf32>,
    %cst_10 = arith.constant 0.000000e+00 : f32
    %26 = vector.broadcast %cst_10 : f32 to vector<4x64xf32>
    %c0_11 = arith.constant 0 : index
    %c0_12 = arith.constant 0 : index
    %27 = vector.load %arg14[%c0_11, %c0_12] : memref<4x64xf32, #tpu.memory_space<vmem>>, vector<4x64xf32>
    tpu.vector_store %arg14[%c0_11, %c0_12], %26 {strides = array<i32>} : memref<4x64xf32, #tpu.memory_space<vmem>>, vector<4x64xf32>,
    %cst_13 = arith.constant 0.000000e+00 : f32
    %28 = vector.broadcast %cst_13 : f32 to vector<4x32xf32>
    %c0_14 = arith.constant 0 : index
    %c0_15 = arith.constant 0 : index
    %29 = vector.load %arg15[%c0_14, %c0_15] : memref<4x32xf32, #tpu.memory_space<vmem>>, vector<4x32xf32>
    tpu.vector_store %arg15[%c0_14, %c0_15], %28 {strides = array<i32>} : memref<4x32xf32, #tpu.memory_space<vmem>>, vector<4x32xf32>,
    %c0_16 = arith.constant 0 : index
    %c0_17 = arith.constant 0 : index
    %30 = vector.load %arg2[%c0_16, %c0_17] : memref<64x128xf32, #tpu.memory_space<vmem>>, vector<64x128xf32>
    %c0_i32 = arith.constant 0 : i32
    %c1_i32 = arith.constant 1 : i32
    %31 = arith.muli %c0_i32, %c1_i32 : i32
    %c0_i32_18 = arith.constant 0 : i32
    %32 = arith.addi %c0_i32_18, %31 : i32
    %c0_19 = arith.constant 0 : index
    %c0_20 = arith.constant 0 : index
    %33 = vector.load %arg14[%c0_19, %c0_20] : memref<4x64xf32, #tpu.memory_space<vmem>>, vector<4x64xf32>
    %cst_21 = arith.constant dense<0.000000e+00> : vector<4x128xf32>
    %34 = tpu.matmul %33, %30, %cst_21 {dimension_numbers = #tpu.dot_dimension_numbers<[1], [0], [0], [1], [0, 0, 1, 1], [], []>} : vector<4x64xf32>, vector<64x128xf32>, vector<4x128xf32> -> vector<4x128xf32>
    %c2_i32_22 = arith.constant 2 : i32
    %35 = arith.muli %32, %c2_i32_22 : i32
    %36 = arith.index_cast %35 : i32 to index
    %c0_23 = arith.constant 0 : index
    %37 = vector.load %arg10[%36, %c0_23] : memref<16x128xf32, #tpu.memory_space<vmem>>, vector<2x128xf32>
    %c7_i32 = arith.constant 7 : i32
    %38 = arith.subi %c7_i32, %32 : i32
    %c2_i32_24 = arith.constant 2 : i32
    %39 = arith.muli %38, %c2_i32_24 : i32
    %40 = arith.index_cast %39 : i32 to index
    %c0_25 = arith.constant 0 : index
    %41 = vector.load %arg11[%40, %c0_25] : memref<16x128xf32, #tpu.memory_space<vmem>>, vector<2x128xf32>
    %42 = tpu.concatenate %37, %41 in 0 : vector<2x128xf32>, vector<2x128xf32> -> vector<4x128xf32>
    %43 = arith.addf %34, %42 : vector<4x128xf32>
    %44 = arith.negf %43 : vector<4x128xf32>
    %45 = math.exp %44 : vector<4x128xf32>
    %cst_26 = arith.constant 1.000000e+00 : f32
    %46 = vector.broadcast %cst_26 : f32 to vector<4x128xf32>
    %47 = arith.addf %46, %45 : vector<4x128xf32>
    %48 = arith.divf %46, %47 : vector<4x128xf32>
    %49 = math.tanh %43 : vector<4x128xf32>
    %50 = arith.select %5, %49, %48 : vector<4x128xi1>, vector<4x128xf32>
    %51 = vector.extract_strided_slice %50 {offsets = [0, 0], sizes = [4, 32], strides = [1, 1]} : vector<4x128xf32> to vector<4x32xf32>
    %52 = vector.extract_strided_slice %50 {offsets = [0, 32], sizes = [4, 32], strides = [1, 1]} : vector<4x128xf32> to vector<4x32xf32>
    %53 = vector.extract_strided_slice %50 {offsets = [0, 64], sizes = [4, 32], strides = [1, 1]} : vector<4x128xf32> to vector<4x32xf32>
    %54 = vector.extract_strided_slice %50 {offsets = [0, 96], sizes = [4, 32], strides = [1, 1]} : vector<4x128xf32> to vector<4x32xf32>
    %c0_27 = arith.constant 0 : index
    %c0_28 = arith.constant 0 : index
    %55 = vector.load %arg15[%c0_27, %c0_28] : memref<4x32xf32, #tpu.memory_space<vmem>>, vector<4x32xf32>
    %56 = arith.mulf %52, %55 : vector<4x32xf32>
    %57 = arith.mulf %51, %53 : vector<4x32xf32>
    %58 = arith.addf %56, %57 : vector<4x32xf32>
    %59 = math.tanh %58 : vector<4x32xf32>
    %60 = arith.mulf %54, %59 : vector<4x32xf32>
    %c0_29 = arith.constant 0 : index
    %c0_30 = arith.constant 0 : index
    %61 = vector.load %arg15[%c0_29, %c0_30] : memref<4x32xf32, #tpu.memory_space<vmem>>, vector<4x32xf32>
    tpu.vector_store %arg15[%c0_29, %c0_30], %58 {strides = array<i32>} : memref<4x32xf32, #tpu.memory_space<vmem>>, vector<4x32xf32>,
    %62 = tpu.concatenate %60, %60 in 1 : vector<4x32xf32>, vector<4x32xf32> -> vector<4x64xf32>
    %63 = arith.mulf %62, %15 : vector<4x64xf32>
    %c0_31 = arith.constant 0 : index
    %c0_32 = arith.constant 0 : index
    %64 = vector.load %arg14[%c0_31, %c0_32] : memref<4x64xf32, #tpu.memory_space<vmem>>, vector<4x64xf32>
    tpu.vector_store %arg14[%c0_31, %c0_32], %63 {strides = array<i32>} : memref<4x64xf32, #tpu.memory_space<vmem>>, vector<4x64xf32>,
    %65 = vector.extract_strided_slice %60 {offsets = [0, 0], sizes = [2, 32], strides = [1, 1]} : vector<4x32xf32> to vector<2x32xf32>
    %c2_i32_33 = arith.constant 2 : i32
    %66 = arith.muli %32, %c2_i32_33 : i32
    %67 = arith.index_cast %66 : i32 to index
    %c0_34 = arith.constant 0 : index
    %68 = vector.load %arg12[%67, %c0_34] : memref<16x32xf32, #tpu.memory_space<vmem>>, vector<2x32xf32>
    tpu.vector_store %arg12[%67, %c0_34], %65 {strides = array<i32>} : memref<16x32xf32, #tpu.memory_space<vmem>>, vector<2x32xf32>,
    %69 = vector.extract_strided_slice %60 {offsets = [2, 0], sizes = [2, 32], strides = [1, 1]} : vector<4x32xf32> to vector<2x32xf32>
    %c7_i32_35 = arith.constant 7 : i32
    %70 = arith.subi %c7_i32_35, %32 : i32
    %c2_i32_36 = arith.constant 2 : i32
    %71 = arith.muli %70, %c2_i32_36 : i32
    %72 = arith.index_cast %71 : i32 to index
    %c0_37 = arith.constant 0 : index
    %73 = vector.load %arg13[%72, %c0_37] : memref<16x32xf32, #tpu.memory_space<vmem>>, vector<2x32xf32>
    tpu.vector_store %arg13[%72, %c0_37], %69 {strides = array<i32>} : memref<16x32xf32, #tpu.memory_space<vmem>>, vector<2x32xf32>,
    %c1_i32_38 = arith.constant 1 : i32
    %c1_i32_39 = arith.constant 1 : i32
    %74 = arith.muli %c1_i32_38, %c1_i32_39 : i32
    %c0_i32_40 = arith.constant 0 : i32
    %75 = arith.addi %c0_i32_40, %74 : i32
    %c0_41 = arith.constant 0 : index
    %c0_42 = arith.constant 0 : index
    %76 = vector.load %arg14[%c0_41, %c0_42] : memref<4x64xf32, #tpu.memory_space<vmem>>, vector<4x64xf32>
    %cst_43 = arith.constant dense<0.000000e+00> : vector<4x128xf32>
    %77 = tpu.matmul %76, %30, %cst_43 {dimension_numbers = #tpu.dot_dimension_numbers<[1], [0], [0], [1], [0, 0, 1, 1], [], []>} : vector<4x64xf32>, vector<64x128xf32>, vector<4x128xf32> -> vector<4x128xf32>
    %c2_i32_44 = arith.constant 2 : i32
    %78 = arith.muli %75, %c2_i32_44 : i32
    %79 = arith.index_cast %78 : i32 to index
    %c0_45 = arith.constant 0 : index
    %80 = vector.load %arg10[%79, %c0_45] : memref<16x128xf32, #tpu.memory_space<vmem>>, vector<2x128xf32>
    %c7_i32_46 = arith.constant 7 : i32
    %81 = arith.subi %c7_i32_46, %75 : i32
    %c2_i32_47 = arith.constant 2 : i32
    %82 = arith.muli %81, %c2_i32_47 : i32
    %83 = arith.index_cast %82 : i32 to index
    %c0_48 = arith.constant 0 : index
    %84 = vector.load %arg11[%83, %c0_48] : memref<16x128xf32, #tpu.memory_space<vmem>>, vector<2x128xf32>
    %85 = tpu.concatenate %80, %84 in 0 : vector<2x128xf32>, vector<2x128xf32> -> vector<4x128xf32>
    %86 = arith.addf %77, %85 : vector<4x128xf32>
    %87 = arith.negf %86 : vector<4x128xf32>
    %88 = math.exp %87 : vector<4x128xf32>
    %cst_49 = arith.constant 1.000000e+00 : f32
    %89 = vector.broadcast %cst_49 : f32 to vector<4x128xf32>
    %90 = arith.addf %89, %88 : vector<4x128xf32>
    %91 = arith.divf %89, %90 : vector<4x128xf32>
    %92 = math.tanh %86 : vector<4x128xf32>
    %93 = arith.select %5, %92, %91 : vector<4x128xi1>, vector<4x128xf32>
    %94 = vector.extract_strided_slice %93 {offsets = [0, 0], sizes = [4, 32], strides = [1, 1]} : vector<4x128xf32> to vector<4x32xf32>
    %95 = vector.extract_strided_slice %93 {offsets = [0, 32], sizes = [4, 32], strides = [1, 1]} : vector<4x128xf32> to vector<4x32xf32>
    %96 = vector.extract_strided_slice %93 {offsets = [0, 64], sizes = [4, 32], strides = [1, 1]} : vector<4x128xf32> to vector<4x32xf32>
    %97 = vector.extract_strided_slice %93 {offsets = [0, 96], sizes = [4, 32], strides = [1, 1]} : vector<4x128xf32> to vector<4x32xf32>
    %c0_50 = arith.constant 0 : index
    %c0_51 = arith.constant 0 : index
    %98 = vector.load %arg15[%c0_50, %c0_51] : memref<4x32xf32, #tpu.memory_space<vmem>>, vector<4x32xf32>
    %99 = arith.mulf %95, %98 : vector<4x32xf32>
    %100 = arith.mulf %94, %96 : vector<4x32xf32>
    %101 = arith.addf %99, %100 : vector<4x32xf32>
    %102 = math.tanh %101 : vector<4x32xf32>
    %103 = arith.mulf %97, %102 : vector<4x32xf32>
    %c0_52 = arith.constant 0 : index
    %c0_53 = arith.constant 0 : index
    %104 = vector.load %arg15[%c0_52, %c0_53] : memref<4x32xf32, #tpu.memory_space<vmem>>, vector<4x32xf32>
    tpu.vector_store %arg15[%c0_52, %c0_53], %101 {strides = array<i32>} : memref<4x32xf32, #tpu.memory_space<vmem>>, vector<4x32xf32>,
    %105 = tpu.concatenate %103, %103 in 1 : vector<4x32xf32>, vector<4x32xf32> -> vector<4x64xf32>
    %106 = arith.mulf %105, %15 : vector<4x64xf32>
    %c0_54 = arith.constant 0 : index
    %c0_55 = arith.constant 0 : index
    %107 = vector.load %arg14[%c0_54, %c0_55] : memref<4x64xf32, #tpu.memory_space<vmem>>, vector<4x64xf32>
    tpu.vector_store %arg14[%c0_54, %c0_55], %106 {strides = array<i32>} : memref<4x64xf32, #tpu.memory_space<vmem>>, vector<4x64xf32>,
    %108 = vector.extract_strided_slice %103 {offsets = [0, 0], sizes = [2, 32], strides = [1, 1]} : vector<4x32xf32> to vector<2x32xf32>
    %c2_i32_56 = arith.constant 2 : i32
    %109 = arith.muli %75, %c2_i32_56 : i32
    %110 = arith.index_cast %109 : i32 to index
    %c0_57 = arith.constant 0 : index
    %111 = vector.load %arg12[%110, %c0_57] : memref<16x32xf32, #tpu.memory_space<vmem>>, vector<2x32xf32>
    tpu.vector_store %arg12[%110, %c0_57], %108 {strides = array<i32>} : memref<16x32xf32, #tpu.memory_space<vmem>>, vector<2x32xf32>,
    %112 = vector.extract_strided_slice %103 {offsets = [2, 0], sizes = [2, 32], strides = [1, 1]} : vector<4x32xf32> to vector<2x32xf32>
    %c7_i32_58 = arith.constant 7 : i32
    %113 = arith.subi %c7_i32_58, %75 : i32
    %c2_i32_59 = arith.constant 2 : i32
    %114 = arith.muli %113, %c2_i32_59 : i32
    %115 = arith.index_cast %114 : i32 to index
    %c0_60 = arith.constant 0 : index
    %116 = vector.load %arg13[%115, %c0_60] : memref<16x32xf32, #tpu.memory_space<vmem>>, vector<2x32xf32>
    tpu.vector_store %arg13[%115, %c0_60], %112 {strides = array<i32>} : memref<16x32xf32, #tpu.memory_space<vmem>>, vector<2x32xf32>,
    %c2_i32_61 = arith.constant 2 : i32
    %c1_i32_62 = arith.constant 1 : i32
    %117 = arith.muli %c2_i32_61, %c1_i32_62 : i32
    %c0_i32_63 = arith.constant 0 : i32
    %118 = arith.addi %c0_i32_63, %117 : i32
    %c0_64 = arith.constant 0 : index
    %c0_65 = arith.constant 0 : index
    %119 = vector.load %arg14[%c0_64, %c0_65] : memref<4x64xf32, #tpu.memory_space<vmem>>, vector<4x64xf32>
    %cst_66 = arith.constant dense<0.000000e+00> : vector<4x128xf32>
    %120 = tpu.matmul %119, %30, %cst_66 {dimension_numbers = #tpu.dot_dimension_numbers<[1], [0], [0], [1], [0, 0, 1, 1], [], []>} : vector<4x64xf32>, vector<64x128xf32>, vector<4x128xf32> -> vector<4x128xf32>
    %c2_i32_67 = arith.constant 2 : i32
    %121 = arith.muli %118, %c2_i32_67 : i32
    %122 = arith.index_cast %121 : i32 to index
    %c0_68 = arith.constant 0 : index
    %123 = vector.load %arg10[%122, %c0_68] : memref<16x128xf32, #tpu.memory_space<vmem>>, vector<2x128xf32>
    %c7_i32_69 = arith.constant 7 : i32
    %124 = arith.subi %c7_i32_69, %118 : i32
    %c2_i32_70 = arith.constant 2 : i32
    %125 = arith.muli %124, %c2_i32_70 : i32
    %126 = arith.index_cast %125 : i32 to index
    %c0_71 = arith.constant 0 : index
    %127 = vector.load %arg11[%126, %c0_71] : memref<16x128xf32, #tpu.memory_space<vmem>>, vector<2x128xf32>
    %128 = tpu.concatenate %123, %127 in 0 : vector<2x128xf32>, vector<2x128xf32> -> vector<4x128xf32>
    %129 = arith.addf %120, %128 : vector<4x128xf32>
    %130 = arith.negf %129 : vector<4x128xf32>
    %131 = math.exp %130 : vector<4x128xf32>
    %cst_72 = arith.constant 1.000000e+00 : f32
    %132 = vector.broadcast %cst_72 : f32 to vector<4x128xf32>
    %133 = arith.addf %132, %131 : vector<4x128xf32>
    %134 = arith.divf %132, %133 : vector<4x128xf32>
    %135 = math.tanh %129 : vector<4x128xf32>
    %136 = arith.select %5, %135, %134 : vector<4x128xi1>, vector<4x128xf32>
    %137 = vector.extract_strided_slice %136 {offsets = [0, 0], sizes = [4, 32], strides = [1, 1]} : vector<4x128xf32> to vector<4x32xf32>
    %138 = vector.extract_strided_slice %136 {offsets = [0, 32], sizes = [4, 32], strides = [1, 1]} : vector<4x128xf32> to vector<4x32xf32>
    %139 = vector.extract_strided_slice %136 {offsets = [0, 64], sizes = [4, 32], strides = [1, 1]} : vector<4x128xf32> to vector<4x32xf32>
    %140 = vector.extract_strided_slice %136 {offsets = [0, 96], sizes = [4, 32], strides = [1, 1]} : vector<4x128xf32> to vector<4x32xf32>
    %c0_73 = arith.constant 0 : index
    %c0_74 = arith.constant 0 : index
    %141 = vector.load %arg15[%c0_73, %c0_74] : memref<4x32xf32, #tpu.memory_space<vmem>>, vector<4x32xf32>
    %142 = arith.mulf %138, %141 : vector<4x32xf32>
    %143 = arith.mulf %137, %139 : vector<4x32xf32>
    %144 = arith.addf %142, %143 : vector<4x32xf32>
    %145 = math.tanh %144 : vector<4x32xf32>
    %146 = arith.mulf %140, %145 : vector<4x32xf32>
    %c0_75 = arith.constant 0 : index
    %c0_76 = arith.constant 0 : index
    %147 = vector.load %arg15[%c0_75, %c0_76] : memref<4x32xf32, #tpu.memory_space<vmem>>, vector<4x32xf32>
    tpu.vector_store %arg15[%c0_75, %c0_76], %144 {strides = array<i32>} : memref<4x32xf32, #tpu.memory_space<vmem>>, vector<4x32xf32>,
    %148 = tpu.concatenate %146, %146 in 1 : vector<4x32xf32>, vector<4x32xf32> -> vector<4x64xf32>
    %149 = arith.mulf %148, %15 : vector<4x64xf32>
    %c0_77 = arith.constant 0 : index
    %c0_78 = arith.constant 0 : index
    %150 = vector.load %arg14[%c0_77, %c0_78] : memref<4x64xf32, #tpu.memory_space<vmem>>, vector<4x64xf32>
    tpu.vector_store %arg14[%c0_77, %c0_78], %149 {strides = array<i32>} : memref<4x64xf32, #tpu.memory_space<vmem>>, vector<4x64xf32>,
    %151 = vector.extract_strided_slice %146 {offsets = [0, 0], sizes = [2, 32], strides = [1, 1]} : vector<4x32xf32> to vector<2x32xf32>
    %c2_i32_79 = arith.constant 2 : i32
    %152 = arith.muli %118, %c2_i32_79 : i32
    %153 = arith.index_cast %152 : i32 to index
    %c0_80 = arith.constant 0 : index
    %154 = vector.load %arg12[%153, %c0_80] : memref<16x32xf32, #tpu.memory_space<vmem>>, vector<2x32xf32>
    tpu.vector_store %arg12[%153, %c0_80], %151 {strides = array<i32>} : memref<16x32xf32, #tpu.memory_space<vmem>>, vector<2x32xf32>,
    %155 = vector.extract_strided_slice %146 {offsets = [2, 0], sizes = [2, 32], strides = [1, 1]} : vector<4x32xf32> to vector<2x32xf32>
    %c7_i32_81 = arith.constant 7 : i32
    %156 = arith.subi %c7_i32_81, %118 : i32
    %c2_i32_82 = arith.constant 2 : i32
    %157 = arith.muli %156, %c2_i32_82 : i32
    %158 = arith.index_cast %157 : i32 to index
    %c0_83 = arith.constant 0 : index
    %159 = vector.load %arg13[%158, %c0_83] : memref<16x32xf32, #tpu.memory_space<vmem>>, vector<2x32xf32>
    tpu.vector_store %arg13[%158, %c0_83], %155 {strides = array<i32>} : memref<16x32xf32, #tpu.memory_space<vmem>>, vector<2x32xf32>,
    %c3_i32 = arith.constant 3 : i32
    %c1_i32_84 = arith.constant 1 : i32
    %160 = arith.muli %c3_i32, %c1_i32_84 : i32
    %c0_i32_85 = arith.constant 0 : i32
    %161 = arith.addi %c0_i32_85, %160 : i32
    %c0_86 = arith.constant 0 : index
    %c0_87 = arith.constant 0 : index
    %162 = vector.load %arg14[%c0_86, %c0_87] : memref<4x64xf32, #tpu.memory_space<vmem>>, vector<4x64xf32>
    %cst_88 = arith.constant dense<0.000000e+00> : vector<4x128xf32>
    %163 = tpu.matmul %162, %30, %cst_88 {dimension_numbers = #tpu.dot_dimension_numbers<[1], [0], [0], [1], [0, 0, 1, 1], [], []>} : vector<4x64xf32>, vector<64x128xf32>, vector<4x128xf32> -> vector<4x128xf32>
    %c2_i32_89 = arith.constant 2 : i32
    %164 = arith.muli %161, %c2_i32_89 : i32
    %165 = arith.index_cast %164 : i32 to index
    %c0_90 = arith.constant 0 : index
    %166 = vector.load %arg10[%165, %c0_90] : memref<16x128xf32, #tpu.memory_space<vmem>>, vector<2x128xf32>
    %c7_i32_91 = arith.constant 7 : i32
    %167 = arith.subi %c7_i32_91, %161 : i32
    %c2_i32_92 = arith.constant 2 : i32
    %168 = arith.muli %167, %c2_i32_92 : i32
    %169 = arith.index_cast %168 : i32 to index
    %c0_93 = arith.constant 0 : index
    %170 = vector.load %arg11[%169, %c0_93] : memref<16x128xf32, #tpu.memory_space<vmem>>, vector<2x128xf32>
    %171 = tpu.concatenate %166, %170 in 0 : vector<2x128xf32>, vector<2x128xf32> -> vector<4x128xf32>
    %172 = arith.addf %163, %171 : vector<4x128xf32>
    %173 = arith.negf %172 : vector<4x128xf32>
    %174 = math.exp %173 : vector<4x128xf32>
    %cst_94 = arith.constant 1.000000e+00 : f32
    %175 = vector.broadcast %cst_94 : f32 to vector<4x128xf32>
    %176 = arith.addf %175, %174 : vector<4x128xf32>
    %177 = arith.divf %175, %176 : vector<4x128xf32>
    %178 = math.tanh %172 : vector<4x128xf32>
    %179 = arith.select %5, %178, %177 : vector<4x128xi1>, vector<4x128xf32>
    %180 = vector.extract_strided_slice %179 {offsets = [0, 0], sizes = [4, 32], strides = [1, 1]} : vector<4x128xf32> to vector<4x32xf32>
    %181 = vector.extract_strided_slice %179 {offsets = [0, 32], sizes = [4, 32], strides = [1, 1]} : vector<4x128xf32> to vector<4x32xf32>
    %182 = vector.extract_strided_slice %179 {offsets = [0, 64], sizes = [4, 32], strides = [1, 1]} : vector<4x128xf32> to vector<4x32xf32>
    %183 = vector.extract_strided_slice %179 {offsets = [0, 96], sizes = [4, 32], strides = [1, 1]} : vector<4x128xf32> to vector<4x32xf32>
    %c0_95 = arith.constant 0 : index
    %c0_96 = arith.constant 0 : index
    %184 = vector.load %arg15[%c0_95, %c0_96] : memref<4x32xf32, #tpu.memory_space<vmem>>, vector<4x32xf32>
    %185 = arith.mulf %181, %184 : vector<4x32xf32>
    %186 = arith.mulf %180, %182 : vector<4x32xf32>
    %187 = arith.addf %185, %186 : vector<4x32xf32>
    %188 = math.tanh %187 : vector<4x32xf32>
    %189 = arith.mulf %183, %188 : vector<4x32xf32>
    %c0_97 = arith.constant 0 : index
    %c0_98 = arith.constant 0 : index
    %190 = vector.load %arg15[%c0_97, %c0_98] : memref<4x32xf32, #tpu.memory_space<vmem>>, vector<4x32xf32>
    tpu.vector_store %arg15[%c0_97, %c0_98], %187 {strides = array<i32>} : memref<4x32xf32, #tpu.memory_space<vmem>>, vector<4x32xf32>,
    %191 = tpu.concatenate %189, %189 in 1 : vector<4x32xf32>, vector<4x32xf32> -> vector<4x64xf32>
    %192 = arith.mulf %191, %15 : vector<4x64xf32>
    %c0_99 = arith.constant 0 : index
    %c0_100 = arith.constant 0 : index
    %193 = vector.load %arg14[%c0_99, %c0_100] : memref<4x64xf32, #tpu.memory_space<vmem>>, vector<4x64xf32>
    tpu.vector_store %arg14[%c0_99, %c0_100], %192 {strides = array<i32>} : memref<4x64xf32, #tpu.memory_space<vmem>>, vector<4x64xf32>,
    %194 = vector.extract_strided_slice %189 {offsets = [0, 0], sizes = [2, 32], strides = [1, 1]} : vector<4x32xf32> to vector<2x32xf32>
    %c2_i32_101 = arith.constant 2 : i32
    %195 = arith.muli %161, %c2_i32_101 : i32
    %196 = arith.index_cast %195 : i32 to index
    %c0_102 = arith.constant 0 : index
    %197 = vector.load %arg12[%196, %c0_102] : memref<16x32xf32, #tpu.memory_space<vmem>>, vector<2x32xf32>
    tpu.vector_store %arg12[%196, %c0_102], %194 {strides = array<i32>} : memref<16x32xf32, #tpu.memory_space<vmem>>, vector<2x32xf32>,
    %198 = vector.extract_strided_slice %189 {offsets = [2, 0], sizes = [2, 32], strides = [1, 1]} : vector<4x32xf32> to vector<2x32xf32>
    %c7_i32_103 = arith.constant 7 : i32
    %199 = arith.subi %c7_i32_103, %161 : i32
    %c2_i32_104 = arith.constant 2 : i32
    %200 = arith.muli %199, %c2_i32_104 : i32
    %201 = arith.index_cast %200 : i32 to index
    %c0_105 = arith.constant 0 : index
    %202 = vector.load %arg13[%201, %c0_105] : memref<16x32xf32, #tpu.memory_space<vmem>>, vector<2x32xf32>
    tpu.vector_store %arg13[%201, %c0_105], %198 {strides = array<i32>} : memref<16x32xf32, #tpu.memory_space<vmem>>, vector<2x32xf32>,
    %c4_i32 = arith.constant 4 : i32
    %c1_i32_106 = arith.constant 1 : i32
    %203 = arith.muli %c4_i32, %c1_i32_106 : i32
    %c0_i32_107 = arith.constant 0 : i32
    %204 = arith.addi %c0_i32_107, %203 : i32
    %c0_108 = arith.constant 0 : index
    %c0_109 = arith.constant 0 : index
    %205 = vector.load %arg14[%c0_108, %c0_109] : memref<4x64xf32, #tpu.memory_space<vmem>>, vector<4x64xf32>
    %cst_110 = arith.constant dense<0.000000e+00> : vector<4x128xf32>
    %206 = tpu.matmul %205, %30, %cst_110 {dimension_numbers = #tpu.dot_dimension_numbers<[1], [0], [0], [1], [0, 0, 1, 1], [], []>} : vector<4x64xf32>, vector<64x128xf32>, vector<4x128xf32> -> vector<4x128xf32>
    %c2_i32_111 = arith.constant 2 : i32
    %207 = arith.muli %204, %c2_i32_111 : i32
    %208 = arith.index_cast %207 : i32 to index
    %c0_112 = arith.constant 0 : index
    %209 = vector.load %arg10[%208, %c0_112] : memref<16x128xf32, #tpu.memory_space<vmem>>, vector<2x128xf32>
    %c7_i32_113 = arith.constant 7 : i32
    %210 = arith.subi %c7_i32_113, %204 : i32
    %c2_i32_114 = arith.constant 2 : i32
    %211 = arith.muli %210, %c2_i32_114 : i32
    %212 = arith.index_cast %211 : i32 to index
    %c0_115 = arith.constant 0 : index
    %213 = vector.load %arg11[%212, %c0_115] : memref<16x128xf32, #tpu.memory_space<vmem>>, vector<2x128xf32>
    %214 = tpu.concatenate %209, %213 in 0 : vector<2x128xf32>, vector<2x128xf32> -> vector<4x128xf32>
    %215 = arith.addf %206, %214 : vector<4x128xf32>
    %216 = arith.negf %215 : vector<4x128xf32>
    %217 = math.exp %216 : vector<4x128xf32>
    %cst_116 = arith.constant 1.000000e+00 : f32
    %218 = vector.broadcast %cst_116 : f32 to vector<4x128xf32>
    %219 = arith.addf %218, %217 : vector<4x128xf32>
    %220 = arith.divf %218, %219 : vector<4x128xf32>
    %221 = math.tanh %215 : vector<4x128xf32>
    %222 = arith.select %5, %221, %220 : vector<4x128xi1>, vector<4x128xf32>
    %223 = vector.extract_strided_slice %222 {offsets = [0, 0], sizes = [4, 32], strides = [1, 1]} : vector<4x128xf32> to vector<4x32xf32>
    %224 = vector.extract_strided_slice %222 {offsets = [0, 32], sizes = [4, 32], strides = [1, 1]} : vector<4x128xf32> to vector<4x32xf32>
    %225 = vector.extract_strided_slice %222 {offsets = [0, 64], sizes = [4, 32], strides = [1, 1]} : vector<4x128xf32> to vector<4x32xf32>
    %226 = vector.extract_strided_slice %222 {offsets = [0, 96], sizes = [4, 32], strides = [1, 1]} : vector<4x128xf32> to vector<4x32xf32>
    %c0_117 = arith.constant 0 : index
    %c0_118 = arith.constant 0 : index
    %227 = vector.load %arg15[%c0_117, %c0_118] : memref<4x32xf32, #tpu.memory_space<vmem>>, vector<4x32xf32>
    %228 = arith.mulf %224, %227 : vector<4x32xf32>
    %229 = arith.mulf %223, %225 : vector<4x32xf32>
    %230 = arith.addf %228, %229 : vector<4x32xf32>
    %231 = math.tanh %230 : vector<4x32xf32>
    %232 = arith.mulf %226, %231 : vector<4x32xf32>
    %c0_119 = arith.constant 0 : index
    %c0_120 = arith.constant 0 : index
    %233 = vector.load %arg15[%c0_119, %c0_120] : memref<4x32xf32, #tpu.memory_space<vmem>>, vector<4x32xf32>
    tpu.vector_store %arg15[%c0_119, %c0_120], %230 {strides = array<i32>} : memref<4x32xf32, #tpu.memory_space<vmem>>, vector<4x32xf32>,
    %234 = tpu.concatenate %232, %232 in 1 : vector<4x32xf32>, vector<4x32xf32> -> vector<4x64xf32>
    %235 = arith.mulf %234, %15 : vector<4x64xf32>
    %c0_121 = arith.constant 0 : index
    %c0_122 = arith.constant 0 : index
    %236 = vector.load %arg14[%c0_121, %c0_122] : memref<4x64xf32, #tpu.memory_space<vmem>>, vector<4x64xf32>
    tpu.vector_store %arg14[%c0_121, %c0_122], %235 {strides = array<i32>} : memref<4x64xf32, #tpu.memory_space<vmem>>, vector<4x64xf32>,
    %237 = vector.extract_strided_slice %232 {offsets = [0, 0], sizes = [2, 32], strides = [1, 1]} : vector<4x32xf32> to vector<2x32xf32>
    %c2_i32_123 = arith.constant 2 : i32
    %238 = arith.muli %204, %c2_i32_123 : i32
    %239 = arith.index_cast %238 : i32 to index
    %c0_124 = arith.constant 0 : index
    %240 = vector.load %arg12[%239, %c0_124] : memref<16x32xf32, #tpu.memory_space<vmem>>, vector<2x32xf32>
    tpu.vector_store %arg12[%239, %c0_124], %237 {strides = array<i32>} : memref<16x32xf32, #tpu.memory_space<vmem>>, vector<2x32xf32>,
    %241 = vector.extract_strided_slice %232 {offsets = [2, 0], sizes = [2, 32], strides = [1, 1]} : vector<4x32xf32> to vector<2x32xf32>
    %c7_i32_125 = arith.constant 7 : i32
    %242 = arith.subi %c7_i32_125, %204 : i32
    %c2_i32_126 = arith.constant 2 : i32
    %243 = arith.muli %242, %c2_i32_126 : i32
    %244 = arith.index_cast %243 : i32 to index
    %c0_127 = arith.constant 0 : index
    %245 = vector.load %arg13[%244, %c0_127] : memref<16x32xf32, #tpu.memory_space<vmem>>, vector<2x32xf32>
    tpu.vector_store %arg13[%244, %c0_127], %241 {strides = array<i32>} : memref<16x32xf32, #tpu.memory_space<vmem>>, vector<2x32xf32>,
    %c5_i32 = arith.constant 5 : i32
    %c1_i32_128 = arith.constant 1 : i32
    %246 = arith.muli %c5_i32, %c1_i32_128 : i32
    %c0_i32_129 = arith.constant 0 : i32
    %247 = arith.addi %c0_i32_129, %246 : i32
    %c0_130 = arith.constant 0 : index
    %c0_131 = arith.constant 0 : index
    %248 = vector.load %arg14[%c0_130, %c0_131] : memref<4x64xf32, #tpu.memory_space<vmem>>, vector<4x64xf32>
    %cst_132 = arith.constant dense<0.000000e+00> : vector<4x128xf32>
    %249 = tpu.matmul %248, %30, %cst_132 {dimension_numbers = #tpu.dot_dimension_numbers<[1], [0], [0], [1], [0, 0, 1, 1], [], []>} : vector<4x64xf32>, vector<64x128xf32>, vector<4x128xf32> -> vector<4x128xf32>
    %c2_i32_133 = arith.constant 2 : i32
    %250 = arith.muli %247, %c2_i32_133 : i32
    %251 = arith.index_cast %250 : i32 to index
    %c0_134 = arith.constant 0 : index
    %252 = vector.load %arg10[%251, %c0_134] : memref<16x128xf32, #tpu.memory_space<vmem>>, vector<2x128xf32>
    %c7_i32_135 = arith.constant 7 : i32
    %253 = arith.subi %c7_i32_135, %247 : i32
    %c2_i32_136 = arith.constant 2 : i32
    %254 = arith.muli %253, %c2_i32_136 : i32
    %255 = arith.index_cast %254 : i32 to index
    %c0_137 = arith.constant 0 : index
    %256 = vector.load %arg11[%255, %c0_137] : memref<16x128xf32, #tpu.memory_space<vmem>>, vector<2x128xf32>
    %257 = tpu.concatenate %252, %256 in 0 : vector<2x128xf32>, vector<2x128xf32> -> vector<4x128xf32>
    %258 = arith.addf %249, %257 : vector<4x128xf32>
    %259 = arith.negf %258 : vector<4x128xf32>
    %260 = math.exp %259 : vector<4x128xf32>
    %cst_138 = arith.constant 1.000000e+00 : f32
    %261 = vector.broadcast %cst_138 : f32 to vector<4x128xf32>
    %262 = arith.addf %261, %260 : vector<4x128xf32>
    %263 = arith.divf %261, %262 : vector<4x128xf32>
    %264 = math.tanh %258 : vector<4x128xf32>
    %265 = arith.select %5, %264, %263 : vector<4x128xi1>, vector<4x128xf32>
    %266 = vector.extract_strided_slice %265 {offsets = [0, 0], sizes = [4, 32], strides = [1, 1]} : vector<4x128xf32> to vector<4x32xf32>
    %267 = vector.extract_strided_slice %265 {offsets = [0, 32], sizes = [4, 32], strides = [1, 1]} : vector<4x128xf32> to vector<4x32xf32>
    %268 = vector.extract_strided_slice %265 {offsets = [0, 64], sizes = [4, 32], strides = [1, 1]} : vector<4x128xf32> to vector<4x32xf32>
    %269 = vector.extract_strided_slice %265 {offsets = [0, 96], sizes = [4, 32], strides = [1, 1]} : vector<4x128xf32> to vector<4x32xf32>
    %c0_139 = arith.constant 0 : index
    %c0_140 = arith.constant 0 : index
    %270 = vector.load %arg15[%c0_139, %c0_140] : memref<4x32xf32, #tpu.memory_space<vmem>>, vector<4x32xf32>
    %271 = arith.mulf %267, %270 : vector<4x32xf32>
    %272 = arith.mulf %266, %268 : vector<4x32xf32>
    %273 = arith.addf %271, %272 : vector<4x32xf32>
    %274 = math.tanh %273 : vector<4x32xf32>
    %275 = arith.mulf %269, %274 : vector<4x32xf32>
    %c0_141 = arith.constant 0 : index
    %c0_142 = arith.constant 0 : index
    %276 = vector.load %arg15[%c0_141, %c0_142] : memref<4x32xf32, #tpu.memory_space<vmem>>, vector<4x32xf32>
    tpu.vector_store %arg15[%c0_141, %c0_142], %273 {strides = array<i32>} : memref<4x32xf32, #tpu.memory_space<vmem>>, vector<4x32xf32>,
    %277 = tpu.concatenate %275, %275 in 1 : vector<4x32xf32>, vector<4x32xf32> -> vector<4x64xf32>
    %278 = arith.mulf %277, %15 : vector<4x64xf32>
    %c0_143 = arith.constant 0 : index
    %c0_144 = arith.constant 0 : index
    %279 = vector.load %arg14[%c0_143, %c0_144] : memref<4x64xf32, #tpu.memory_space<vmem>>, vector<4x64xf32>
    tpu.vector_store %arg14[%c0_143, %c0_144], %278 {strides = array<i32>} : memref<4x64xf32, #tpu.memory_space<vmem>>, vector<4x64xf32>,
    %280 = vector.extract_strided_slice %275 {offsets = [0, 0], sizes = [2, 32], strides = [1, 1]} : vector<4x32xf32> to vector<2x32xf32>
    %c2_i32_145 = arith.constant 2 : i32
    %281 = arith.muli %247, %c2_i32_145 : i32
    %282 = arith.index_cast %281 : i32 to index
    %c0_146 = arith.constant 0 : index
    %283 = vector.load %arg12[%282, %c0_146] : memref<16x32xf32, #tpu.memory_space<vmem>>, vector<2x32xf32>
    tpu.vector_store %arg12[%282, %c0_146], %280 {strides = array<i32>} : memref<16x32xf32, #tpu.memory_space<vmem>>, vector<2x32xf32>,
    %284 = vector.extract_strided_slice %275 {offsets = [2, 0], sizes = [2, 32], strides = [1, 1]} : vector<4x32xf32> to vector<2x32xf32>
    %c7_i32_147 = arith.constant 7 : i32
    %285 = arith.subi %c7_i32_147, %247 : i32
    %c2_i32_148 = arith.constant 2 : i32
    %286 = arith.muli %285, %c2_i32_148 : i32
    %287 = arith.index_cast %286 : i32 to index
    %c0_149 = arith.constant 0 : index
    %288 = vector.load %arg13[%287, %c0_149] : memref<16x32xf32, #tpu.memory_space<vmem>>, vector<2x32xf32>
    tpu.vector_store %arg13[%287, %c0_149], %284 {strides = array<i32>} : memref<16x32xf32, #tpu.memory_space<vmem>>, vector<2x32xf32>,
    %c6_i32 = arith.constant 6 : i32
    %c1_i32_150 = arith.constant 1 : i32
    %289 = arith.muli %c6_i32, %c1_i32_150 : i32
    %c0_i32_151 = arith.constant 0 : i32
    %290 = arith.addi %c0_i32_151, %289 : i32
    %c0_152 = arith.constant 0 : index
    %c0_153 = arith.constant 0 : index
    %291 = vector.load %arg14[%c0_152, %c0_153] : memref<4x64xf32, #tpu.memory_space<vmem>>, vector<4x64xf32>
    %cst_154 = arith.constant dense<0.000000e+00> : vector<4x128xf32>
    %292 = tpu.matmul %291, %30, %cst_154 {dimension_numbers = #tpu.dot_dimension_numbers<[1], [0], [0], [1], [0, 0, 1, 1], [], []>} : vector<4x64xf32>, vector<64x128xf32>, vector<4x128xf32> -> vector<4x128xf32>
    %c2_i32_155 = arith.constant 2 : i32
    %293 = arith.muli %290, %c2_i32_155 : i32
    %294 = arith.index_cast %293 : i32 to index
    %c0_156 = arith.constant 0 : index
    %295 = vector.load %arg10[%294, %c0_156] : memref<16x128xf32, #tpu.memory_space<vmem>>, vector<2x128xf32>
    %c7_i32_157 = arith.constant 7 : i32
    %296 = arith.subi %c7_i32_157, %290 : i32
    %c2_i32_158 = arith.constant 2 : i32
    %297 = arith.muli %296, %c2_i32_158 : i32
    %298 = arith.index_cast %297 : i32 to index
    %c0_159 = arith.constant 0 : index
    %299 = vector.load %arg11[%298, %c0_159] : memref<16x128xf32, #tpu.memory_space<vmem>>, vector<2x128xf32>
    %300 = tpu.concatenate %295, %299 in 0 : vector<2x128xf32>, vector<2x128xf32> -> vector<4x128xf32>
    %301 = arith.addf %292, %300 : vector<4x128xf32>
    %302 = arith.negf %301 : vector<4x128xf32>
    %303 = math.exp %302 : vector<4x128xf32>
    %cst_160 = arith.constant 1.000000e+00 : f32
    %304 = vector.broadcast %cst_160 : f32 to vector<4x128xf32>
    %305 = arith.addf %304, %303 : vector<4x128xf32>
    %306 = arith.divf %304, %305 : vector<4x128xf32>
    %307 = math.tanh %301 : vector<4x128xf32>
    %308 = arith.select %5, %307, %306 : vector<4x128xi1>, vector<4x128xf32>
    %309 = vector.extract_strided_slice %308 {offsets = [0, 0], sizes = [4, 32], strides = [1, 1]} : vector<4x128xf32> to vector<4x32xf32>
    %310 = vector.extract_strided_slice %308 {offsets = [0, 32], sizes = [4, 32], strides = [1, 1]} : vector<4x128xf32> to vector<4x32xf32>
    %311 = vector.extract_strided_slice %308 {offsets = [0, 64], sizes = [4, 32], strides = [1, 1]} : vector<4x128xf32> to vector<4x32xf32>
    %312 = vector.extract_strided_slice %308 {offsets = [0, 96], sizes = [4, 32], strides = [1, 1]} : vector<4x128xf32> to vector<4x32xf32>
    %c0_161 = arith.constant 0 : index
    %c0_162 = arith.constant 0 : index
    %313 = vector.load %arg15[%c0_161, %c0_162] : memref<4x32xf32, #tpu.memory_space<vmem>>, vector<4x32xf32>
    %314 = arith.mulf %310, %313 : vector<4x32xf32>
    %315 = arith.mulf %309, %311 : vector<4x32xf32>
    %316 = arith.addf %314, %315 : vector<4x32xf32>
    %317 = math.tanh %316 : vector<4x32xf32>
    %318 = arith.mulf %312, %317 : vector<4x32xf32>
    %c0_163 = arith.constant 0 : index
    %c0_164 = arith.constant 0 : index
    %319 = vector.load %arg15[%c0_163, %c0_164] : memref<4x32xf32, #tpu.memory_space<vmem>>, vector<4x32xf32>
    tpu.vector_store %arg15[%c0_163, %c0_164], %316 {strides = array<i32>} : memref<4x32xf32, #tpu.memory_space<vmem>>, vector<4x32xf32>,
    %320 = tpu.concatenate %318, %318 in 1 : vector<4x32xf32>, vector<4x32xf32> -> vector<4x64xf32>
    %321 = arith.mulf %320, %15 : vector<4x64xf32>
    %c0_165 = arith.constant 0 : index
    %c0_166 = arith.constant 0 : index
    %322 = vector.load %arg14[%c0_165, %c0_166] : memref<4x64xf32, #tpu.memory_space<vmem>>, vector<4x64xf32>
    tpu.vector_store %arg14[%c0_165, %c0_166], %321 {strides = array<i32>} : memref<4x64xf32, #tpu.memory_space<vmem>>, vector<4x64xf32>,
    %323 = vector.extract_strided_slice %318 {offsets = [0, 0], sizes = [2, 32], strides = [1, 1]} : vector<4x32xf32> to vector<2x32xf32>
    %c2_i32_167 = arith.constant 2 : i32
    %324 = arith.muli %290, %c2_i32_167 : i32
    %325 = arith.index_cast %324 : i32 to index
    %c0_168 = arith.constant 0 : index
    %326 = vector.load %arg12[%325, %c0_168] : memref<16x32xf32, #tpu.memory_space<vmem>>, vector<2x32xf32>
    tpu.vector_store %arg12[%325, %c0_168], %323 {strides = array<i32>} : memref<16x32xf32, #tpu.memory_space<vmem>>, vector<2x32xf32>,
    %327 = vector.extract_strided_slice %318 {offsets = [2, 0], sizes = [2, 32], strides = [1, 1]} : vector<4x32xf32> to vector<2x32xf32>
    %c7_i32_169 = arith.constant 7 : i32
    %328 = arith.subi %c7_i32_169, %290 : i32
    %c2_i32_170 = arith.constant 2 : i32
    %329 = arith.muli %328, %c2_i32_170 : i32
    %330 = arith.index_cast %329 : i32 to index
    %c0_171 = arith.constant 0 : index
    %331 = vector.load %arg13[%330, %c0_171] : memref<16x32xf32, #tpu.memory_space<vmem>>, vector<2x32xf32>
    tpu.vector_store %arg13[%330, %c0_171], %327 {strides = array<i32>} : memref<16x32xf32, #tpu.memory_space<vmem>>, vector<2x32xf32>,
    %c7_i32_172 = arith.constant 7 : i32
    %c1_i32_173 = arith.constant 1 : i32
    %332 = arith.muli %c7_i32_172, %c1_i32_173 : i32
    %c0_i32_174 = arith.constant 0 : i32
    %333 = arith.addi %c0_i32_174, %332 : i32
    %c0_175 = arith.constant 0 : index
    %c0_176 = arith.constant 0 : index
    %334 = vector.load %arg14[%c0_175, %c0_176] : memref<4x64xf32, #tpu.memory_space<vmem>>, vector<4x64xf32>
    %cst_177 = arith.constant dense<0.000000e+00> : vector<4x128xf32>
    %335 = tpu.matmul %334, %30, %cst_177 {dimension_numbers = #tpu.dot_dimension_numbers<[1], [0], [0], [1], [0, 0, 1, 1], [], []>} : vector<4x64xf32>, vector<64x128xf32>, vector<4x128xf32> -> vector<4x128xf32>
    %c2_i32_178 = arith.constant 2 : i32
    %336 = arith.muli %333, %c2_i32_178 : i32
    %337 = arith.index_cast %336 : i32 to index
    %c0_179 = arith.constant 0 : index
    %338 = vector.load %arg10[%337, %c0_179] : memref<16x128xf32, #tpu.memory_space<vmem>>, vector<2x128xf32>
    %c7_i32_180 = arith.constant 7 : i32
    %339 = arith.subi %c7_i32_180, %333 : i32
    %c2_i32_181 = arith.constant 2 : i32
    %340 = arith.muli %339, %c2_i32_181 : i32
    %341 = arith.index_cast %340 : i32 to index
    %c0_182 = arith.constant 0 : index
    %342 = vector.load %arg11[%341, %c0_182] : memref<16x128xf32, #tpu.memory_space<vmem>>, vector<2x128xf32>
    %343 = tpu.concatenate %338, %342 in 0 : vector<2x128xf32>, vector<2x128xf32> -> vector<4x128xf32>
    %344 = arith.addf %335, %343 : vector<4x128xf32>
    %345 = arith.negf %344 : vector<4x128xf32>
    %346 = math.exp %345 : vector<4x128xf32>
    %cst_183 = arith.constant 1.000000e+00 : f32
    %347 = vector.broadcast %cst_183 : f32 to vector<4x128xf32>
    %348 = arith.addf %347, %346 : vector<4x128xf32>
    %349 = arith.divf %347, %348 : vector<4x128xf32>
    %350 = math.tanh %344 : vector<4x128xf32>
    %351 = arith.select %5, %350, %349 : vector<4x128xi1>, vector<4x128xf32>
    %352 = vector.extract_strided_slice %351 {offsets = [0, 0], sizes = [4, 32], strides = [1, 1]} : vector<4x128xf32> to vector<4x32xf32>
    %353 = vector.extract_strided_slice %351 {offsets = [0, 32], sizes = [4, 32], strides = [1, 1]} : vector<4x128xf32> to vector<4x32xf32>
    %354 = vector.extract_strided_slice %351 {offsets = [0, 64], sizes = [4, 32], strides = [1, 1]} : vector<4x128xf32> to vector<4x32xf32>
    %355 = vector.extract_strided_slice %351 {offsets = [0, 96], sizes = [4, 32], strides = [1, 1]} : vector<4x128xf32> to vector<4x32xf32>
    %c0_184 = arith.constant 0 : index
    %c0_185 = arith.constant 0 : index
    %356 = vector.load %arg15[%c0_184, %c0_185] : memref<4x32xf32, #tpu.memory_space<vmem>>, vector<4x32xf32>
    %357 = arith.mulf %353, %356 : vector<4x32xf32>
    %358 = arith.mulf %352, %354 : vector<4x32xf32>
    %359 = arith.addf %357, %358 : vector<4x32xf32>
    %360 = math.tanh %359 : vector<4x32xf32>
    %361 = arith.mulf %355, %360 : vector<4x32xf32>
    %c0_186 = arith.constant 0 : index
    %c0_187 = arith.constant 0 : index
    %362 = vector.load %arg15[%c0_186, %c0_187] : memref<4x32xf32, #tpu.memory_space<vmem>>, vector<4x32xf32>
    tpu.vector_store %arg15[%c0_186, %c0_187], %359 {strides = array<i32>} : memref<4x32xf32, #tpu.memory_space<vmem>>, vector<4x32xf32>,
    %363 = tpu.concatenate %361, %361 in 1 : vector<4x32xf32>, vector<4x32xf32> -> vector<4x64xf32>
    %364 = arith.mulf %363, %15 : vector<4x64xf32>
    %c0_188 = arith.constant 0 : index
    %c0_189 = arith.constant 0 : index
    %365 = vector.load %arg14[%c0_188, %c0_189] : memref<4x64xf32, #tpu.memory_space<vmem>>, vector<4x64xf32>
    tpu.vector_store %arg14[%c0_188, %c0_189], %364 {strides = array<i32>} : memref<4x64xf32, #tpu.memory_space<vmem>>, vector<4x64xf32>,
    %366 = vector.extract_strided_slice %361 {offsets = [0, 0], sizes = [2, 32], strides = [1, 1]} : vector<4x32xf32> to vector<2x32xf32>
    %c2_i32_190 = arith.constant 2 : i32
    %367 = arith.muli %333, %c2_i32_190 : i32
    %368 = arith.index_cast %367 : i32 to index
    %c0_191 = arith.constant 0 : index
    %369 = vector.load %arg12[%368, %c0_191] : memref<16x32xf32, #tpu.memory_space<vmem>>, vector<2x32xf32>
    tpu.vector_store %arg12[%368, %c0_191], %366 {strides = array<i32>} : memref<16x32xf32, #tpu.memory_space<vmem>>, vector<2x32xf32>,
    %370 = vector.extract_strided_slice %361 {offsets = [2, 0], sizes = [2, 32], strides = [1, 1]} : vector<4x32xf32> to vector<2x32xf32>
    %c7_i32_192 = arith.constant 7 : i32
    %371 = arith.subi %c7_i32_192, %333 : i32
    %c2_i32_193 = arith.constant 2 : i32
    %372 = arith.muli %371, %c2_i32_193 : i32
    %373 = arith.index_cast %372 : i32 to index
    %c0_194 = arith.constant 0 : index
    %374 = vector.load %arg13[%373, %c0_194] : memref<16x32xf32, #tpu.memory_space<vmem>>, vector<2x32xf32>
    tpu.vector_store %arg13[%373, %c0_194], %370 {strides = array<i32>} : memref<16x32xf32, #tpu.memory_space<vmem>>, vector<2x32xf32>,
    %c8_i32 = arith.constant 8 : i32
    %c0_195 = arith.constant 0 : index
    %c0_196 = arith.constant 0 : index
    %375 = vector.load %arg12[%c0_195, %c0_196] : memref<16x32xf32, #tpu.memory_space<vmem>>, vector<16x32xf32>
    %c0_197 = arith.constant 0 : index
    %c0_198 = arith.constant 0 : index
    %376 = vector.load %arg4[%c0_197, %c0_198] : memref<64x256xf32, #tpu.memory_space<vmem>>, vector<32x256xf32>
    %cst_199 = arith.constant dense<0.000000e+00> : vector<16x256xf32>
    %377 = tpu.matmul %375, %376, %cst_199 {dimension_numbers = #tpu.dot_dimension_numbers<[1], [0], [0], [1], [0, 0, 1, 1], [], []>} : vector<16x32xf32>, vector<32x256xf32>, vector<16x256xf32> -> vector<16x256xf32>
    %c0_200 = arith.constant 0 : index
    %c0_201 = arith.constant 0 : index
    %378 = vector.load %arg6[%c0_200, %c0_201] : memref<1x256xf32, #tpu.memory_space<vmem>>, vector<1x256xf32>
    %379 = vector.broadcast %378 : vector<1x256xf32> to vector<16x256xf32>
    %380 = arith.addf %377, %379 : vector<16x256xf32>
    %c0_202 = arith.constant 0 : index
    %c0_203 = arith.constant 0 : index
    %381 = vector.load %arg13[%c0_202, %c0_203] : memref<16x32xf32, #tpu.memory_space<vmem>>, vector<16x32xf32>
    %c32 = arith.constant 32 : index
    %c0_204 = arith.constant 0 : index
    %382 = vector.load %arg4[%c32, %c0_204] : memref<64x256xf32, #tpu.memory_space<vmem>>, vector<32x256xf32>
    %cst_205 = arith.constant dense<0.000000e+00> : vector<16x256xf32>
    %383 = tpu.matmul %381, %382, %cst_205 {dimension_numbers = #tpu.dot_dimension_numbers<[1], [0], [0], [1], [0, 0, 1, 1], [], []>} : vector<16x32xf32>, vector<32x256xf32>, vector<16x256xf32> -> vector<16x256xf32>
    %384 = arith.addf %380, %383 : vector<16x256xf32>
    %385 = vector.extract_strided_slice %384 {offsets = [0, 0], sizes = [16, 128], strides = [1, 1]} : vector<16x256xf32> to vector<16x128xf32>
    %c0_206 = arith.constant 0 : index
    %c0_207 = arith.constant 0 : index
    %386 = vector.load %arg10[%c0_206, %c0_207] : memref<16x128xf32, #tpu.memory_space<vmem>>, vector<16x128xf32>
    tpu.vector_store %arg10[%c0_206, %c0_207], %385 {strides = array<i32>} : memref<16x128xf32, #tpu.memory_space<vmem>>, vector<16x128xf32>,
    %387 = vector.extract_strided_slice %384 {offsets = [0, 128], sizes = [16, 128], strides = [1, 1]} : vector<16x256xf32> to vector<16x128xf32>
    %c0_208 = arith.constant 0 : index
    %c0_209 = arith.constant 0 : index
    %388 = vector.load %arg11[%c0_208, %c0_209] : memref<16x128xf32, #tpu.memory_space<vmem>>, vector<16x128xf32>
    tpu.vector_store %arg11[%c0_208, %c0_209], %387 {strides = array<i32>} : memref<16x128xf32, #tpu.memory_space<vmem>>, vector<16x128xf32>,
    %cst_210 = arith.constant 0.000000e+00 : f32
    %389 = vector.broadcast %cst_210 : f32 to vector<4x64xf32>
    %c0_211 = arith.constant 0 : index
    %c0_212 = arith.constant 0 : index
    %390 = vector.load %arg14[%c0_211, %c0_212] : memref<4x64xf32, #tpu.memory_space<vmem>>, vector<4x64xf32>
    tpu.vector_store %arg14[%c0_211, %c0_212], %389 {strides = array<i32>} : memref<4x64xf32, #tpu.memory_space<vmem>>, vector<4x64xf32>,
    %cst_213 = arith.constant 0.000000e+00 : f32
    %391 = vector.broadcast %cst_213 : f32 to vector<4x32xf32>
    %c0_214 = arith.constant 0 : index
    %c0_215 = arith.constant 0 : index
    %392 = vector.load %arg15[%c0_214, %c0_215] : memref<4x32xf32, #tpu.memory_space<vmem>>, vector<4x32xf32>
    tpu.vector_store %arg15[%c0_214, %c0_215], %391 {strides = array<i32>} : memref<4x32xf32, #tpu.memory_space<vmem>>, vector<4x32xf32>,
    %c0_216 = arith.constant 0 : index
    %c0_217 = arith.constant 0 : index
    %393 = vector.load %arg5[%c0_216, %c0_217] : memref<64x128xf32, #tpu.memory_space<vmem>>, vector<64x128xf32>
    %c0_i32_218 = arith.constant 0 : i32
    %c1_i32_219 = arith.constant 1 : i32
    %394 = arith.muli %c0_i32_218, %c1_i32_219 : i32
    %c0_i32_220 = arith.constant 0 : i32
    %395 = arith.addi %c0_i32_220, %394 : i32
    %c0_221 = arith.constant 0 : index
    %c0_222 = arith.constant 0 : index
    %396 = vector.load %arg14[%c0_221, %c0_222] : memref<4x64xf32, #tpu.memory_space<vmem>>, vector<4x64xf32>
    %cst_223 = arith.constant dense<0.000000e+00> : vector<4x128xf32>
    %397 = tpu.matmul %396, %393, %cst_223 {dimension_numbers = #tpu.dot_dimension_numbers<[1], [0], [0], [1], [0, 0, 1, 1], [], []>} : vector<4x64xf32>, vector<64x128xf32>, vector<4x128xf32> -> vector<4x128xf32>
    %c2_i32_224 = arith.constant 2 : i32
    %398 = arith.muli %395, %c2_i32_224 : i32
    %399 = arith.index_cast %398 : i32 to index
    %c0_225 = arith.constant 0 : index
    %400 = vector.load %arg10[%399, %c0_225] : memref<16x128xf32, #tpu.memory_space<vmem>>, vector<2x128xf32>
    %c7_i32_226 = arith.constant 7 : i32
    %401 = arith.subi %c7_i32_226, %395 : i32
    %c2_i32_227 = arith.constant 2 : i32
    %402 = arith.muli %401, %c2_i32_227 : i32
    %403 = arith.index_cast %402 : i32 to index
    %c0_228 = arith.constant 0 : index
    %404 = vector.load %arg11[%403, %c0_228] : memref<16x128xf32, #tpu.memory_space<vmem>>, vector<2x128xf32>
    %405 = tpu.concatenate %400, %404 in 0 : vector<2x128xf32>, vector<2x128xf32> -> vector<4x128xf32>
    %406 = arith.addf %397, %405 : vector<4x128xf32>
    %407 = arith.negf %406 : vector<4x128xf32>
    %408 = math.exp %407 : vector<4x128xf32>
    %cst_229 = arith.constant 1.000000e+00 : f32
    %409 = vector.broadcast %cst_229 : f32 to vector<4x128xf32>
    %410 = arith.addf %409, %408 : vector<4x128xf32>
    %411 = arith.divf %409, %410 : vector<4x128xf32>
    %412 = math.tanh %406 : vector<4x128xf32>
    %413 = arith.select %5, %412, %411 : vector<4x128xi1>, vector<4x128xf32>
    %414 = vector.extract_strided_slice %413 {offsets = [0, 0], sizes = [4, 32], strides = [1, 1]} : vector<4x128xf32> to vector<4x32xf32>
    %415 = vector.extract_strided_slice %413 {offsets = [0, 32], sizes = [4, 32], strides = [1, 1]} : vector<4x128xf32> to vector<4x32xf32>
    %416 = vector.extract_strided_slice %413 {offsets = [0, 64], sizes = [4, 32], strides = [1, 1]} : vector<4x128xf32> to vector<4x32xf32>
    %417 = vector.extract_strided_slice %413 {offsets = [0, 96], sizes = [4, 32], strides = [1, 1]} : vector<4x128xf32> to vector<4x32xf32>
    %c0_230 = arith.constant 0 : index
    %c0_231 = arith.constant 0 : index
    %418 = vector.load %arg15[%c0_230, %c0_231] : memref<4x32xf32, #tpu.memory_space<vmem>>, vector<4x32xf32>
    %419 = arith.mulf %415, %418 : vector<4x32xf32>
    %420 = arith.mulf %414, %416 : vector<4x32xf32>
    %421 = arith.addf %419, %420 : vector<4x32xf32>
    %422 = math.tanh %421 : vector<4x32xf32>
    %423 = arith.mulf %417, %422 : vector<4x32xf32>
    %c0_232 = arith.constant 0 : index
    %c0_233 = arith.constant 0 : index
    %424 = vector.load %arg15[%c0_232, %c0_233] : memref<4x32xf32, #tpu.memory_space<vmem>>, vector<4x32xf32>
    tpu.vector_store %arg15[%c0_232, %c0_233], %421 {strides = array<i32>} : memref<4x32xf32, #tpu.memory_space<vmem>>, vector<4x32xf32>,
    %425 = tpu.concatenate %423, %423 in 1 : vector<4x32xf32>, vector<4x32xf32> -> vector<4x64xf32>
    %426 = arith.mulf %425, %15 : vector<4x64xf32>
    %c0_234 = arith.constant 0 : index
    %c0_235 = arith.constant 0 : index
    %427 = vector.load %arg14[%c0_234, %c0_235] : memref<4x64xf32, #tpu.memory_space<vmem>>, vector<4x64xf32>
    tpu.vector_store %arg14[%c0_234, %c0_235], %426 {strides = array<i32>} : memref<4x64xf32, #tpu.memory_space<vmem>>, vector<4x64xf32>,
    %428 = vector.extract_strided_slice %423 {offsets = [0, 0], sizes = [2, 32], strides = [1, 1]} : vector<4x32xf32> to vector<2x32xf32>
    %c2_i32_236 = arith.constant 2 : i32
    %429 = arith.muli %395, %c2_i32_236 : i32
    %430 = arith.index_cast %429 : i32 to index
    %c0_237 = arith.constant 0 : index
    %431 = vector.load %arg12[%430, %c0_237] : memref<16x32xf32, #tpu.memory_space<vmem>>, vector<2x32xf32>
    tpu.vector_store %arg12[%430, %c0_237], %428 {strides = array<i32>} : memref<16x32xf32, #tpu.memory_space<vmem>>, vector<2x32xf32>,
    %432 = vector.extract_strided_slice %423 {offsets = [2, 0], sizes = [2, 32], strides = [1, 1]} : vector<4x32xf32> to vector<2x32xf32>
    %c7_i32_238 = arith.constant 7 : i32
    %433 = arith.subi %c7_i32_238, %395 : i32
    %c2_i32_239 = arith.constant 2 : i32
    %434 = arith.muli %433, %c2_i32_239 : i32
    %435 = arith.index_cast %434 : i32 to index
    %c0_240 = arith.constant 0 : index
    %436 = vector.load %arg13[%435, %c0_240] : memref<16x32xf32, #tpu.memory_space<vmem>>, vector<2x32xf32>
    tpu.vector_store %arg13[%435, %c0_240], %432 {strides = array<i32>} : memref<16x32xf32, #tpu.memory_space<vmem>>, vector<2x32xf32>,
    %c1_i32_241 = arith.constant 1 : i32
    %c1_i32_242 = arith.constant 1 : i32
    %437 = arith.muli %c1_i32_241, %c1_i32_242 : i32
    %c0_i32_243 = arith.constant 0 : i32
    %438 = arith.addi %c0_i32_243, %437 : i32
    %c0_244 = arith.constant 0 : index
    %c0_245 = arith.constant 0 : index
    %439 = vector.load %arg14[%c0_244, %c0_245] : memref<4x64xf32, #tpu.memory_space<vmem>>, vector<4x64xf32>
    %cst_246 = arith.constant dense<0.000000e+00> : vector<4x128xf32>
    %440 = tpu.matmul %439, %393, %cst_246 {dimension_numbers = #tpu.dot_dimension_numbers<[1], [0], [0], [1], [0, 0, 1, 1], [], []>} : vector<4x64xf32>, vector<64x128xf32>, vector<4x128xf32> -> vector<4x128xf32>
    %c2_i32_247 = arith.constant 2 : i32
    %441 = arith.muli %438, %c2_i32_247 : i32
    %442 = arith.index_cast %441 : i32 to index
    %c0_248 = arith.constant 0 : index
    %443 = vector.load %arg10[%442, %c0_248] : memref<16x128xf32, #tpu.memory_space<vmem>>, vector<2x128xf32>
    %c7_i32_249 = arith.constant 7 : i32
    %444 = arith.subi %c7_i32_249, %438 : i32
    %c2_i32_250 = arith.constant 2 : i32
    %445 = arith.muli %444, %c2_i32_250 : i32
    %446 = arith.index_cast %445 : i32 to index
    %c0_251 = arith.constant 0 : index
    %447 = vector.load %arg11[%446, %c0_251] : memref<16x128xf32, #tpu.memory_space<vmem>>, vector<2x128xf32>
    %448 = tpu.concatenate %443, %447 in 0 : vector<2x128xf32>, vector<2x128xf32> -> vector<4x128xf32>
    %449 = arith.addf %440, %448 : vector<4x128xf32>
    %450 = arith.negf %449 : vector<4x128xf32>
    %451 = math.exp %450 : vector<4x128xf32>
    %cst_252 = arith.constant 1.000000e+00 : f32
    %452 = vector.broadcast %cst_252 : f32 to vector<4x128xf32>
    %453 = arith.addf %452, %451 : vector<4x128xf32>
    %454 = arith.divf %452, %453 : vector<4x128xf32>
    %455 = math.tanh %449 : vector<4x128xf32>
    %456 = arith.select %5, %455, %454 : vector<4x128xi1>, vector<4x128xf32>
    %457 = vector.extract_strided_slice %456 {offsets = [0, 0], sizes = [4, 32], strides = [1, 1]} : vector<4x128xf32> to vector<4x32xf32>
    %458 = vector.extract_strided_slice %456 {offsets = [0, 32], sizes = [4, 32], strides = [1, 1]} : vector<4x128xf32> to vector<4x32xf32>
    %459 = vector.extract_strided_slice %456 {offsets = [0, 64], sizes = [4, 32], strides = [1, 1]} : vector<4x128xf32> to vector<4x32xf32>
    %460 = vector.extract_strided_slice %456 {offsets = [0, 96], sizes = [4, 32], strides = [1, 1]} : vector<4x128xf32> to vector<4x32xf32>
    %c0_253 = arith.constant 0 : index
    %c0_254 = arith.constant 0 : index
    %461 = vector.load %arg15[%c0_253, %c0_254] : memref<4x32xf32, #tpu.memory_space<vmem>>, vector<4x32xf32>
    %462 = arith.mulf %458, %461 : vector<4x32xf32>
    %463 = arith.mulf %457, %459 : vector<4x32xf32>
    %464 = arith.addf %462, %463 : vector<4x32xf32>
    %465 = math.tanh %464 : vector<4x32xf32>
    %466 = arith.mulf %460, %465 : vector<4x32xf32>
    %c0_255 = arith.constant 0 : index
    %c0_256 = arith.constant 0 : index
    %467 = vector.load %arg15[%c0_255, %c0_256] : memref<4x32xf32, #tpu.memory_space<vmem>>, vector<4x32xf32>
    tpu.vector_store %arg15[%c0_255, %c0_256], %464 {strides = array<i32>} : memref<4x32xf32, #tpu.memory_space<vmem>>, vector<4x32xf32>,
    %468 = tpu.concatenate %466, %466 in 1 : vector<4x32xf32>, vector<4x32xf32> -> vector<4x64xf32>
    %469 = arith.mulf %468, %15 : vector<4x64xf32>
    %c0_257 = arith.constant 0 : index
    %c0_258 = arith.constant 0 : index
    %470 = vector.load %arg14[%c0_257, %c0_258] : memref<4x64xf32, #tpu.memory_space<vmem>>, vector<4x64xf32>
    tpu.vector_store %arg14[%c0_257, %c0_258], %469 {strides = array<i32>} : memref<4x64xf32, #tpu.memory_space<vmem>>, vector<4x64xf32>,
    %471 = vector.extract_strided_slice %466 {offsets = [0, 0], sizes = [2, 32], strides = [1, 1]} : vector<4x32xf32> to vector<2x32xf32>
    %c2_i32_259 = arith.constant 2 : i32
    %472 = arith.muli %438, %c2_i32_259 : i32
    %473 = arith.index_cast %472 : i32 to index
    %c0_260 = arith.constant 0 : index
    %474 = vector.load %arg12[%473, %c0_260] : memref<16x32xf32, #tpu.memory_space<vmem>>, vector<2x32xf32>
    tpu.vector_store %arg12[%473, %c0_260], %471 {strides = array<i32>} : memref<16x32xf32, #tpu.memory_space<vmem>>, vector<2x32xf32>,
    %475 = vector.extract_strided_slice %466 {offsets = [2, 0], sizes = [2, 32], strides = [1, 1]} : vector<4x32xf32> to vector<2x32xf32>
    %c7_i32_261 = arith.constant 7 : i32
    %476 = arith.subi %c7_i32_261, %438 : i32
    %c2_i32_262 = arith.constant 2 : i32
    %477 = arith.muli %476, %c2_i32_262 : i32
    %478 = arith.index_cast %477 : i32 to index
    %c0_263 = arith.constant 0 : index
    %479 = vector.load %arg13[%478, %c0_263] : memref<16x32xf32, #tpu.memory_space<vmem>>, vector<2x32xf32>
    tpu.vector_store %arg13[%478, %c0_263], %475 {strides = array<i32>} : memref<16x32xf32, #tpu.memory_space<vmem>>, vector<2x32xf32>,
    %c2_i32_264 = arith.constant 2 : i32
    %c1_i32_265 = arith.constant 1 : i32
    %480 = arith.muli %c2_i32_264, %c1_i32_265 : i32
    %c0_i32_266 = arith.constant 0 : i32
    %481 = arith.addi %c0_i32_266, %480 : i32
    %c0_267 = arith.constant 0 : index
    %c0_268 = arith.constant 0 : index
    %482 = vector.load %arg14[%c0_267, %c0_268] : memref<4x64xf32, #tpu.memory_space<vmem>>, vector<4x64xf32>
    %cst_269 = arith.constant dense<0.000000e+00> : vector<4x128xf32>
    %483 = tpu.matmul %482, %393, %cst_269 {dimension_numbers = #tpu.dot_dimension_numbers<[1], [0], [0], [1], [0, 0, 1, 1], [], []>} : vector<4x64xf32>, vector<64x128xf32>, vector<4x128xf32> -> vector<4x128xf32>
    %c2_i32_270 = arith.constant 2 : i32
    %484 = arith.muli %481, %c2_i32_270 : i32
    %485 = arith.index_cast %484 : i32 to index
    %c0_271 = arith.constant 0 : index
    %486 = vector.load %arg10[%485, %c0_271] : memref<16x128xf32, #tpu.memory_space<vmem>>, vector<2x128xf32>
    %c7_i32_272 = arith.constant 7 : i32
    %487 = arith.subi %c7_i32_272, %481 : i32
    %c2_i32_273 = arith.constant 2 : i32
    %488 = arith.muli %487, %c2_i32_273 : i32
    %489 = arith.index_cast %488 : i32 to index
    %c0_274 = arith.constant 0 : index
    %490 = vector.load %arg11[%489, %c0_274] : memref<16x128xf32, #tpu.memory_space<vmem>>, vector<2x128xf32>
    %491 = tpu.concatenate %486, %490 in 0 : vector<2x128xf32>, vector<2x128xf32> -> vector<4x128xf32>
    %492 = arith.addf %483, %491 : vector<4x128xf32>
    %493 = arith.negf %492 : vector<4x128xf32>
    %494 = math.exp %493 : vector<4x128xf32>
    %cst_275 = arith.constant 1.000000e+00 : f32
    %495 = vector.broadcast %cst_275 : f32 to vector<4x128xf32>
    %496 = arith.addf %495, %494 : vector<4x128xf32>
    %497 = arith.divf %495, %496 : vector<4x128xf32>
    %498 = math.tanh %492 : vector<4x128xf32>
    %499 = arith.select %5, %498, %497 : vector<4x128xi1>, vector<4x128xf32>
    %500 = vector.extract_strided_slice %499 {offsets = [0, 0], sizes = [4, 32], strides = [1, 1]} : vector<4x128xf32> to vector<4x32xf32>
    %501 = vector.extract_strided_slice %499 {offsets = [0, 32], sizes = [4, 32], strides = [1, 1]} : vector<4x128xf32> to vector<4x32xf32>
    %502 = vector.extract_strided_slice %499 {offsets = [0, 64], sizes = [4, 32], strides = [1, 1]} : vector<4x128xf32> to vector<4x32xf32>
    %503 = vector.extract_strided_slice %499 {offsets = [0, 96], sizes = [4, 32], strides = [1, 1]} : vector<4x128xf32> to vector<4x32xf32>
    %c0_276 = arith.constant 0 : index
    %c0_277 = arith.constant 0 : index
    %504 = vector.load %arg15[%c0_276, %c0_277] : memref<4x32xf32, #tpu.memory_space<vmem>>, vector<4x32xf32>
    %505 = arith.mulf %501, %504 : vector<4x32xf32>
    %506 = arith.mulf %500, %502 : vector<4x32xf32>
    %507 = arith.addf %505, %506 : vector<4x32xf32>
    %508 = math.tanh %507 : vector<4x32xf32>
    %509 = arith.mulf %503, %508 : vector<4x32xf32>
    %c0_278 = arith.constant 0 : index
    %c0_279 = arith.constant 0 : index
    %510 = vector.load %arg15[%c0_278, %c0_279] : memref<4x32xf32, #tpu.memory_space<vmem>>, vector<4x32xf32>
    tpu.vector_store %arg15[%c0_278, %c0_279], %507 {strides = array<i32>} : memref<4x32xf32, #tpu.memory_space<vmem>>, vector<4x32xf32>,
    %511 = tpu.concatenate %509, %509 in 1 : vector<4x32xf32>, vector<4x32xf32> -> vector<4x64xf32>
    %512 = arith.mulf %511, %15 : vector<4x64xf32>
    %c0_280 = arith.constant 0 : index
    %c0_281 = arith.constant 0 : index
    %513 = vector.load %arg14[%c0_280, %c0_281] : memref<4x64xf32, #tpu.memory_space<vmem>>, vector<4x64xf32>
    tpu.vector_store %arg14[%c0_280, %c0_281], %512 {strides = array<i32>} : memref<4x64xf32, #tpu.memory_space<vmem>>, vector<4x64xf32>,
    %514 = vector.extract_strided_slice %509 {offsets = [0, 0], sizes = [2, 32], strides = [1, 1]} : vector<4x32xf32> to vector<2x32xf32>
    %c2_i32_282 = arith.constant 2 : i32
    %515 = arith.muli %481, %c2_i32_282 : i32
    %516 = arith.index_cast %515 : i32 to index
    %c0_283 = arith.constant 0 : index
    %517 = vector.load %arg12[%516, %c0_283] : memref<16x32xf32, #tpu.memory_space<vmem>>, vector<2x32xf32>
    tpu.vector_store %arg12[%516, %c0_283], %514 {strides = array<i32>} : memref<16x32xf32, #tpu.memory_space<vmem>>, vector<2x32xf32>,
    %518 = vector.extract_strided_slice %509 {offsets = [2, 0], sizes = [2, 32], strides = [1, 1]} : vector<4x32xf32> to vector<2x32xf32>
    %c7_i32_284 = arith.constant 7 : i32
    %519 = arith.subi %c7_i32_284, %481 : i32
    %c2_i32_285 = arith.constant 2 : i32
    %520 = arith.muli %519, %c2_i32_285 : i32
    %521 = arith.index_cast %520 : i32 to index
    %c0_286 = arith.constant 0 : index
    %522 = vector.load %arg13[%521, %c0_286] : memref<16x32xf32, #tpu.memory_space<vmem>>, vector<2x32xf32>
    tpu.vector_store %arg13[%521, %c0_286], %518 {strides = array<i32>} : memref<16x32xf32, #tpu.memory_space<vmem>>, vector<2x32xf32>,
    %c3_i32_287 = arith.constant 3 : i32
    %c1_i32_288 = arith.constant 1 : i32
    %523 = arith.muli %c3_i32_287, %c1_i32_288 : i32
    %c0_i32_289 = arith.constant 0 : i32
    %524 = arith.addi %c0_i32_289, %523 : i32
    %c0_290 = arith.constant 0 : index
    %c0_291 = arith.constant 0 : index
    %525 = vector.load %arg14[%c0_290, %c0_291] : memref<4x64xf32, #tpu.memory_space<vmem>>, vector<4x64xf32>
    %cst_292 = arith.constant dense<0.000000e+00> : vector<4x128xf32>
    %526 = tpu.matmul %525, %393, %cst_292 {dimension_numbers = #tpu.dot_dimension_numbers<[1], [0], [0], [1], [0, 0, 1, 1], [], []>} : vector<4x64xf32>, vector<64x128xf32>, vector<4x128xf32> -> vector<4x128xf32>
    %c2_i32_293 = arith.constant 2 : i32
    %527 = arith.muli %524, %c2_i32_293 : i32
    %528 = arith.index_cast %527 : i32 to index
    %c0_294 = arith.constant 0 : index
    %529 = vector.load %arg10[%528, %c0_294] : memref<16x128xf32, #tpu.memory_space<vmem>>, vector<2x128xf32>
    %c7_i32_295 = arith.constant 7 : i32
    %530 = arith.subi %c7_i32_295, %524 : i32
    %c2_i32_296 = arith.constant 2 : i32
    %531 = arith.muli %530, %c2_i32_296 : i32
    %532 = arith.index_cast %531 : i32 to index
    %c0_297 = arith.constant 0 : index
    %533 = vector.load %arg11[%532, %c0_297] : memref<16x128xf32, #tpu.memory_space<vmem>>, vector<2x128xf32>
    %534 = tpu.concatenate %529, %533 in 0 : vector<2x128xf32>, vector<2x128xf32> -> vector<4x128xf32>
    %535 = arith.addf %526, %534 : vector<4x128xf32>
    %536 = arith.negf %535 : vector<4x128xf32>
    %537 = math.exp %536 : vector<4x128xf32>
    %cst_298 = arith.constant 1.000000e+00 : f32
    %538 = vector.broadcast %cst_298 : f32 to vector<4x128xf32>
    %539 = arith.addf %538, %537 : vector<4x128xf32>
    %540 = arith.divf %538, %539 : vector<4x128xf32>
    %541 = math.tanh %535 : vector<4x128xf32>
    %542 = arith.select %5, %541, %540 : vector<4x128xi1>, vector<4x128xf32>
    %543 = vector.extract_strided_slice %542 {offsets = [0, 0], sizes = [4, 32], strides = [1, 1]} : vector<4x128xf32> to vector<4x32xf32>
    %544 = vector.extract_strided_slice %542 {offsets = [0, 32], sizes = [4, 32], strides = [1, 1]} : vector<4x128xf32> to vector<4x32xf32>
    %545 = vector.extract_strided_slice %542 {offsets = [0, 64], sizes = [4, 32], strides = [1, 1]} : vector<4x128xf32> to vector<4x32xf32>
    %546 = vector.extract_strided_slice %542 {offsets = [0, 96], sizes = [4, 32], strides = [1, 1]} : vector<4x128xf32> to vector<4x32xf32>
    %c0_299 = arith.constant 0 : index
    %c0_300 = arith.constant 0 : index
    %547 = vector.load %arg15[%c0_299, %c0_300] : memref<4x32xf32, #tpu.memory_space<vmem>>, vector<4x32xf32>
    %548 = arith.mulf %544, %547 : vector<4x32xf32>
    %549 = arith.mulf %543, %545 : vector<4x32xf32>
    %550 = arith.addf %548, %549 : vector<4x32xf32>
    %551 = math.tanh %550 : vector<4x32xf32>
    %552 = arith.mulf %546, %551 : vector<4x32xf32>
    %c0_301 = arith.constant 0 : index
    %c0_302 = arith.constant 0 : index
    %553 = vector.load %arg15[%c0_301, %c0_302] : memref<4x32xf32, #tpu.memory_space<vmem>>, vector<4x32xf32>
    tpu.vector_store %arg15[%c0_301, %c0_302], %550 {strides = array<i32>} : memref<4x32xf32, #tpu.memory_space<vmem>>, vector<4x32xf32>,
    %554 = tpu.concatenate %552, %552 in 1 : vector<4x32xf32>, vector<4x32xf32> -> vector<4x64xf32>
    %555 = arith.mulf %554, %15 : vector<4x64xf32>
    %c0_303 = arith.constant 0 : index
    %c0_304 = arith.constant 0 : index
    %556 = vector.load %arg14[%c0_303, %c0_304] : memref<4x64xf32, #tpu.memory_space<vmem>>, vector<4x64xf32>
    tpu.vector_store %arg14[%c0_303, %c0_304], %555 {strides = array<i32>} : memref<4x64xf32, #tpu.memory_space<vmem>>, vector<4x64xf32>,
    %557 = vector.extract_strided_slice %552 {offsets = [0, 0], sizes = [2, 32], strides = [1, 1]} : vector<4x32xf32> to vector<2x32xf32>
    %c2_i32_305 = arith.constant 2 : i32
    %558 = arith.muli %524, %c2_i32_305 : i32
    %559 = arith.index_cast %558 : i32 to index
    %c0_306 = arith.constant 0 : index
    %560 = vector.load %arg12[%559, %c0_306] : memref<16x32xf32, #tpu.memory_space<vmem>>, vector<2x32xf32>
    tpu.vector_store %arg12[%559, %c0_306], %557 {strides = array<i32>} : memref<16x32xf32, #tpu.memory_space<vmem>>, vector<2x32xf32>,
    %561 = vector.extract_strided_slice %552 {offsets = [2, 0], sizes = [2, 32], strides = [1, 1]} : vector<4x32xf32> to vector<2x32xf32>
    %c7_i32_307 = arith.constant 7 : i32
    %562 = arith.subi %c7_i32_307, %524 : i32
    %c2_i32_308 = arith.constant 2 : i32
    %563 = arith.muli %562, %c2_i32_308 : i32
    %564 = arith.index_cast %563 : i32 to index
    %c0_309 = arith.constant 0 : index
    %565 = vector.load %arg13[%564, %c0_309] : memref<16x32xf32, #tpu.memory_space<vmem>>, vector<2x32xf32>
    tpu.vector_store %arg13[%564, %c0_309], %561 {strides = array<i32>} : memref<16x32xf32, #tpu.memory_space<vmem>>, vector<2x32xf32>,
    %c4_i32_310 = arith.constant 4 : i32
    %c1_i32_311 = arith.constant 1 : i32
    %566 = arith.muli %c4_i32_310, %c1_i32_311 : i32
    %c0_i32_312 = arith.constant 0 : i32
    %567 = arith.addi %c0_i32_312, %566 : i32
    %c0_313 = arith.constant 0 : index
    %c0_314 = arith.constant 0 : index
    %568 = vector.load %arg14[%c0_313, %c0_314] : memref<4x64xf32, #tpu.memory_space<vmem>>, vector<4x64xf32>
    %cst_315 = arith.constant dense<0.000000e+00> : vector<4x128xf32>
    %569 = tpu.matmul %568, %393, %cst_315 {dimension_numbers = #tpu.dot_dimension_numbers<[1], [0], [0], [1], [0, 0, 1, 1], [], []>} : vector<4x64xf32>, vector<64x128xf32>, vector<4x128xf32> -> vector<4x128xf32>
    %c2_i32_316 = arith.constant 2 : i32
    %570 = arith.muli %567, %c2_i32_316 : i32
    %571 = arith.index_cast %570 : i32 to index
    %c0_317 = arith.constant 0 : index
    %572 = vector.load %arg10[%571, %c0_317] : memref<16x128xf32, #tpu.memory_space<vmem>>, vector<2x128xf32>
    %c7_i32_318 = arith.constant 7 : i32
    %573 = arith.subi %c7_i32_318, %567 : i32
    %c2_i32_319 = arith.constant 2 : i32
    %574 = arith.muli %573, %c2_i32_319 : i32
    %575 = arith.index_cast %574 : i32 to index
    %c0_320 = arith.constant 0 : index
    %576 = vector.load %arg11[%575, %c0_320] : memref<16x128xf32, #tpu.memory_space<vmem>>, vector<2x128xf32>
    %577 = tpu.concatenate %572, %576 in 0 : vector<2x128xf32>, vector<2x128xf32> -> vector<4x128xf32>
    %578 = arith.addf %569, %577 : vector<4x128xf32>
    %579 = arith.negf %578 : vector<4x128xf32>
    %580 = math.exp %579 : vector<4x128xf32>
    %cst_321 = arith.constant 1.000000e+00 : f32
    %581 = vector.broadcast %cst_321 : f32 to vector<4x128xf32>
    %582 = arith.addf %581, %580 : vector<4x128xf32>
    %583 = arith.divf %581, %582 : vector<4x128xf32>
    %584 = math.tanh %578 : vector<4x128xf32>
    %585 = arith.select %5, %584, %583 : vector<4x128xi1>, vector<4x128xf32>
    %586 = vector.extract_strided_slice %585 {offsets = [0, 0], sizes = [4, 32], strides = [1, 1]} : vector<4x128xf32> to vector<4x32xf32>
    %587 = vector.extract_strided_slice %585 {offsets = [0, 32], sizes = [4, 32], strides = [1, 1]} : vector<4x128xf32> to vector<4x32xf32>
    %588 = vector.extract_strided_slice %585 {offsets = [0, 64], sizes = [4, 32], strides = [1, 1]} : vector<4x128xf32> to vector<4x32xf32>
    %589 = vector.extract_strided_slice %585 {offsets = [0, 96], sizes = [4, 32], strides = [1, 1]} : vector<4x128xf32> to vector<4x32xf32>
    %c0_322 = arith.constant 0 : index
    %c0_323 = arith.constant 0 : index
    %590 = vector.load %arg15[%c0_322, %c0_323] : memref<4x32xf32, #tpu.memory_space<vmem>>, vector<4x32xf32>
    %591 = arith.mulf %587, %590 : vector<4x32xf32>
    %592 = arith.mulf %586, %588 : vector<4x32xf32>
    %593 = arith.addf %591, %592 : vector<4x32xf32>
    %594 = math.tanh %593 : vector<4x32xf32>
    %595 = arith.mulf %589, %594 : vector<4x32xf32>
    %c0_324 = arith.constant 0 : index
    %c0_325 = arith.constant 0 : index
    %596 = vector.load %arg15[%c0_324, %c0_325] : memref<4x32xf32, #tpu.memory_space<vmem>>, vector<4x32xf32>
    tpu.vector_store %arg15[%c0_324, %c0_325], %593 {strides = array<i32>} : memref<4x32xf32, #tpu.memory_space<vmem>>, vector<4x32xf32>,
    %597 = tpu.concatenate %595, %595 in 1 : vector<4x32xf32>, vector<4x32xf32> -> vector<4x64xf32>
    %598 = arith.mulf %597, %15 : vector<4x64xf32>
    %c0_326 = arith.constant 0 : index
    %c0_327 = arith.constant 0 : index
    %599 = vector.load %arg14[%c0_326, %c0_327] : memref<4x64xf32, #tpu.memory_space<vmem>>, vector<4x64xf32>
    tpu.vector_store %arg14[%c0_326, %c0_327], %598 {strides = array<i32>} : memref<4x64xf32, #tpu.memory_space<vmem>>, vector<4x64xf32>,
    %600 = vector.extract_strided_slice %595 {offsets = [0, 0], sizes = [2, 32], strides = [1, 1]} : vector<4x32xf32> to vector<2x32xf32>
    %c2_i32_328 = arith.constant 2 : i32
    %601 = arith.muli %567, %c2_i32_328 : i32
    %602 = arith.index_cast %601 : i32 to index
    %c0_329 = arith.constant 0 : index
    %603 = vector.load %arg12[%602, %c0_329] : memref<16x32xf32, #tpu.memory_space<vmem>>, vector<2x32xf32>
    tpu.vector_store %arg12[%602, %c0_329], %600 {strides = array<i32>} : memref<16x32xf32, #tpu.memory_space<vmem>>, vector<2x32xf32>,
    %604 = vector.extract_strided_slice %595 {offsets = [2, 0], sizes = [2, 32], strides = [1, 1]} : vector<4x32xf32> to vector<2x32xf32>
    %c7_i32_330 = arith.constant 7 : i32
    %605 = arith.subi %c7_i32_330, %567 : i32
    %c2_i32_331 = arith.constant 2 : i32
    %606 = arith.muli %605, %c2_i32_331 : i32
    %607 = arith.index_cast %606 : i32 to index
    %c0_332 = arith.constant 0 : index
    %608 = vector.load %arg13[%607, %c0_332] : memref<16x32xf32, #tpu.memory_space<vmem>>, vector<2x32xf32>
    tpu.vector_store %arg13[%607, %c0_332], %604 {strides = array<i32>} : memref<16x32xf32, #tpu.memory_space<vmem>>, vector<2x32xf32>,
    %c5_i32_333 = arith.constant 5 : i32
    %c1_i32_334 = arith.constant 1 : i32
    %609 = arith.muli %c5_i32_333, %c1_i32_334 : i32
    %c0_i32_335 = arith.constant 0 : i32
    %610 = arith.addi %c0_i32_335, %609 : i32
    %c0_336 = arith.constant 0 : index
    %c0_337 = arith.constant 0 : index
    %611 = vector.load %arg14[%c0_336, %c0_337] : memref<4x64xf32, #tpu.memory_space<vmem>>, vector<4x64xf32>
    %cst_338 = arith.constant dense<0.000000e+00> : vector<4x128xf32>
    %612 = tpu.matmul %611, %393, %cst_338 {dimension_numbers = #tpu.dot_dimension_numbers<[1], [0], [0], [1], [0, 0, 1, 1], [], []>} : vector<4x64xf32>, vector<64x128xf32>, vector<4x128xf32> -> vector<4x128xf32>
    %c2_i32_339 = arith.constant 2 : i32
    %613 = arith.muli %610, %c2_i32_339 : i32
    %614 = arith.index_cast %613 : i32 to index
    %c0_340 = arith.constant 0 : index
    %615 = vector.load %arg10[%614, %c0_340] : memref<16x128xf32, #tpu.memory_space<vmem>>, vector<2x128xf32>
    %c7_i32_341 = arith.constant 7 : i32
    %616 = arith.subi %c7_i32_341, %610 : i32
    %c2_i32_342 = arith.constant 2 : i32
    %617 = arith.muli %616, %c2_i32_342 : i32
    %618 = arith.index_cast %617 : i32 to index
    %c0_343 = arith.constant 0 : index
    %619 = vector.load %arg11[%618, %c0_343] : memref<16x128xf32, #tpu.memory_space<vmem>>, vector<2x128xf32>
    %620 = tpu.concatenate %615, %619 in 0 : vector<2x128xf32>, vector<2x128xf32> -> vector<4x128xf32>
    %621 = arith.addf %612, %620 : vector<4x128xf32>
    %622 = arith.negf %621 : vector<4x128xf32>
    %623 = math.exp %622 : vector<4x128xf32>
    %cst_344 = arith.constant 1.000000e+00 : f32
    %624 = vector.broadcast %cst_344 : f32 to vector<4x128xf32>
    %625 = arith.addf %624, %623 : vector<4x128xf32>
    %626 = arith.divf %624, %625 : vector<4x128xf32>
    %627 = math.tanh %621 : vector<4x128xf32>
    %628 = arith.select %5, %627, %626 : vector<4x128xi1>, vector<4x128xf32>
    %629 = vector.extract_strided_slice %628 {offsets = [0, 0], sizes = [4, 32], strides = [1, 1]} : vector<4x128xf32> to vector<4x32xf32>
    %630 = vector.extract_strided_slice %628 {offsets = [0, 32], sizes = [4, 32], strides = [1, 1]} : vector<4x128xf32> to vector<4x32xf32>
    %631 = vector.extract_strided_slice %628 {offsets = [0, 64], sizes = [4, 32], strides = [1, 1]} : vector<4x128xf32> to vector<4x32xf32>
    %632 = vector.extract_strided_slice %628 {offsets = [0, 96], sizes = [4, 32], strides = [1, 1]} : vector<4x128xf32> to vector<4x32xf32>
    %c0_345 = arith.constant 0 : index
    %c0_346 = arith.constant 0 : index
    %633 = vector.load %arg15[%c0_345, %c0_346] : memref<4x32xf32, #tpu.memory_space<vmem>>, vector<4x32xf32>
    %634 = arith.mulf %630, %633 : vector<4x32xf32>
    %635 = arith.mulf %629, %631 : vector<4x32xf32>
    %636 = arith.addf %634, %635 : vector<4x32xf32>
    %637 = math.tanh %636 : vector<4x32xf32>
    %638 = arith.mulf %632, %637 : vector<4x32xf32>
    %c0_347 = arith.constant 0 : index
    %c0_348 = arith.constant 0 : index
    %639 = vector.load %arg15[%c0_347, %c0_348] : memref<4x32xf32, #tpu.memory_space<vmem>>, vector<4x32xf32>
    tpu.vector_store %arg15[%c0_347, %c0_348], %636 {strides = array<i32>} : memref<4x32xf32, #tpu.memory_space<vmem>>, vector<4x32xf32>,
    %640 = tpu.concatenate %638, %638 in 1 : vector<4x32xf32>, vector<4x32xf32> -> vector<4x64xf32>
    %641 = arith.mulf %640, %15 : vector<4x64xf32>
    %c0_349 = arith.constant 0 : index
    %c0_350 = arith.constant 0 : index
    %642 = vector.load %arg14[%c0_349, %c0_350] : memref<4x64xf32, #tpu.memory_space<vmem>>, vector<4x64xf32>
    tpu.vector_store %arg14[%c0_349, %c0_350], %641 {strides = array<i32>} : memref<4x64xf32, #tpu.memory_space<vmem>>, vector<4x64xf32>,
    %643 = vector.extract_strided_slice %638 {offsets = [0, 0], sizes = [2, 32], strides = [1, 1]} : vector<4x32xf32> to vector<2x32xf32>
    %c2_i32_351 = arith.constant 2 : i32
    %644 = arith.muli %610, %c2_i32_351 : i32
    %645 = arith.index_cast %644 : i32 to index
    %c0_352 = arith.constant 0 : index
    %646 = vector.load %arg12[%645, %c0_352] : memref<16x32xf32, #tpu.memory_space<vmem>>, vector<2x32xf32>
    tpu.vector_store %arg12[%645, %c0_352], %643 {strides = array<i32>} : memref<16x32xf32, #tpu.memory_space<vmem>>, vector<2x32xf32>,
    %647 = vector.extract_strided_slice %638 {offsets = [2, 0], sizes = [2, 32], strides = [1, 1]} : vector<4x32xf32> to vector<2x32xf32>
    %c7_i32_353 = arith.constant 7 : i32
    %648 = arith.subi %c7_i32_353, %610 : i32
    %c2_i32_354 = arith.constant 2 : i32
    %649 = arith.muli %648, %c2_i32_354 : i32
    %650 = arith.index_cast %649 : i32 to index
    %c0_355 = arith.constant 0 : index
    %651 = vector.load %arg13[%650, %c0_355] : memref<16x32xf32, #tpu.memory_space<vmem>>, vector<2x32xf32>
    tpu.vector_store %arg13[%650, %c0_355], %647 {strides = array<i32>} : memref<16x32xf32, #tpu.memory_space<vmem>>, vector<2x32xf32>,
    %c6_i32_356 = arith.constant 6 : i32
    %c1_i32_357 = arith.constant 1 : i32
    %652 = arith.muli %c6_i32_356, %c1_i32_357 : i32
    %c0_i32_358 = arith.constant 0 : i32
    %653 = arith.addi %c0_i32_358, %652 : i32
    %c0_359 = arith.constant 0 : index
    %c0_360 = arith.constant 0 : index
    %654 = vector.load %arg14[%c0_359, %c0_360] : memref<4x64xf32, #tpu.memory_space<vmem>>, vector<4x64xf32>
    %cst_361 = arith.constant dense<0.000000e+00> : vector<4x128xf32>
    %655 = tpu.matmul %654, %393, %cst_361 {dimension_numbers = #tpu.dot_dimension_numbers<[1], [0], [0], [1], [0, 0, 1, 1], [], []>} : vector<4x64xf32>, vector<64x128xf32>, vector<4x128xf32> -> vector<4x128xf32>
    %c2_i32_362 = arith.constant 2 : i32
    %656 = arith.muli %653, %c2_i32_362 : i32
    %657 = arith.index_cast %656 : i32 to index
    %c0_363 = arith.constant 0 : index
    %658 = vector.load %arg10[%657, %c0_363] : memref<16x128xf32, #tpu.memory_space<vmem>>, vector<2x128xf32>
    %c7_i32_364 = arith.constant 7 : i32
    %659 = arith.subi %c7_i32_364, %653 : i32
    %c2_i32_365 = arith.constant 2 : i32
    %660 = arith.muli %659, %c2_i32_365 : i32
    %661 = arith.index_cast %660 : i32 to index
    %c0_366 = arith.constant 0 : index
    %662 = vector.load %arg11[%661, %c0_366] : memref<16x128xf32, #tpu.memory_space<vmem>>, vector<2x128xf32>
    %663 = tpu.concatenate %658, %662 in 0 : vector<2x128xf32>, vector<2x128xf32> -> vector<4x128xf32>
    %664 = arith.addf %655, %663 : vector<4x128xf32>
    %665 = arith.negf %664 : vector<4x128xf32>
    %666 = math.exp %665 : vector<4x128xf32>
    %cst_367 = arith.constant 1.000000e+00 : f32
    %667 = vector.broadcast %cst_367 : f32 to vector<4x128xf32>
    %668 = arith.addf %667, %666 : vector<4x128xf32>
    %669 = arith.divf %667, %668 : vector<4x128xf32>
    %670 = math.tanh %664 : vector<4x128xf32>
    %671 = arith.select %5, %670, %669 : vector<4x128xi1>, vector<4x128xf32>
    %672 = vector.extract_strided_slice %671 {offsets = [0, 0], sizes = [4, 32], strides = [1, 1]} : vector<4x128xf32> to vector<4x32xf32>
    %673 = vector.extract_strided_slice %671 {offsets = [0, 32], sizes = [4, 32], strides = [1, 1]} : vector<4x128xf32> to vector<4x32xf32>
    %674 = vector.extract_strided_slice %671 {offsets = [0, 64], sizes = [4, 32], strides = [1, 1]} : vector<4x128xf32> to vector<4x32xf32>
    %675 = vector.extract_strided_slice %671 {offsets = [0, 96], sizes = [4, 32], strides = [1, 1]} : vector<4x128xf32> to vector<4x32xf32>
    %c0_368 = arith.constant 0 : index
    %c0_369 = arith.constant 0 : index
    %676 = vector.load %arg15[%c0_368, %c0_369] : memref<4x32xf32, #tpu.memory_space<vmem>>, vector<4x32xf32>
    %677 = arith.mulf %673, %676 : vector<4x32xf32>
    %678 = arith.mulf %672, %674 : vector<4x32xf32>
    %679 = arith.addf %677, %678 : vector<4x32xf32>
    %680 = math.tanh %679 : vector<4x32xf32>
    %681 = arith.mulf %675, %680 : vector<4x32xf32>
    %c0_370 = arith.constant 0 : index
    %c0_371 = arith.constant 0 : index
    %682 = vector.load %arg15[%c0_370, %c0_371] : memref<4x32xf32, #tpu.memory_space<vmem>>, vector<4x32xf32>
    tpu.vector_store %arg15[%c0_370, %c0_371], %679 {strides = array<i32>} : memref<4x32xf32, #tpu.memory_space<vmem>>, vector<4x32xf32>,
    %683 = tpu.concatenate %681, %681 in 1 : vector<4x32xf32>, vector<4x32xf32> -> vector<4x64xf32>
    %684 = arith.mulf %683, %15 : vector<4x64xf32>
    %c0_372 = arith.constant 0 : index
    %c0_373 = arith.constant 0 : index
    %685 = vector.load %arg14[%c0_372, %c0_373] : memref<4x64xf32, #tpu.memory_space<vmem>>, vector<4x64xf32>
    tpu.vector_store %arg14[%c0_372, %c0_373], %684 {strides = array<i32>} : memref<4x64xf32, #tpu.memory_space<vmem>>, vector<4x64xf32>,
    %686 = vector.extract_strided_slice %681 {offsets = [0, 0], sizes = [2, 32], strides = [1, 1]} : vector<4x32xf32> to vector<2x32xf32>
    %c2_i32_374 = arith.constant 2 : i32
    %687 = arith.muli %653, %c2_i32_374 : i32
    %688 = arith.index_cast %687 : i32 to index
    %c0_375 = arith.constant 0 : index
    %689 = vector.load %arg12[%688, %c0_375] : memref<16x32xf32, #tpu.memory_space<vmem>>, vector<2x32xf32>
    tpu.vector_store %arg12[%688, %c0_375], %686 {strides = array<i32>} : memref<16x32xf32, #tpu.memory_space<vmem>>, vector<2x32xf32>,
    %690 = vector.extract_strided_slice %681 {offsets = [2, 0], sizes = [2, 32], strides = [1, 1]} : vector<4x32xf32> to vector<2x32xf32>
    %c7_i32_376 = arith.constant 7 : i32
    %691 = arith.subi %c7_i32_376, %653 : i32
    %c2_i32_377 = arith.constant 2 : i32
    %692 = arith.muli %691, %c2_i32_377 : i32
    %693 = arith.index_cast %692 : i32 to index
    %c0_378 = arith.constant 0 : index
    %694 = vector.load %arg13[%693, %c0_378] : memref<16x32xf32, #tpu.memory_space<vmem>>, vector<2x32xf32>
    tpu.vector_store %arg13[%693, %c0_378], %690 {strides = array<i32>} : memref<16x32xf32, #tpu.memory_space<vmem>>, vector<2x32xf32>,
    %c7_i32_379 = arith.constant 7 : i32
    %c1_i32_380 = arith.constant 1 : i32
    %695 = arith.muli %c7_i32_379, %c1_i32_380 : i32
    %c0_i32_381 = arith.constant 0 : i32
    %696 = arith.addi %c0_i32_381, %695 : i32
    %c0_382 = arith.constant 0 : index
    %c0_383 = arith.constant 0 : index
    %697 = vector.load %arg14[%c0_382, %c0_383] : memref<4x64xf32, #tpu.memory_space<vmem>>, vector<4x64xf32>
    %cst_384 = arith.constant dense<0.000000e+00> : vector<4x128xf32>
    %698 = tpu.matmul %697, %393, %cst_384 {dimension_numbers = #tpu.dot_dimension_numbers<[1], [0], [0], [1], [0, 0, 1, 1], [], []>} : vector<4x64xf32>, vector<64x128xf32>, vector<4x128xf32> -> vector<4x128xf32>
    %c2_i32_385 = arith.constant 2 : i32
    %699 = arith.muli %696, %c2_i32_385 : i32
    %700 = arith.index_cast %699 : i32 to index
    %c0_386 = arith.constant 0 : index
    %701 = vector.load %arg10[%700, %c0_386] : memref<16x128xf32, #tpu.memory_space<vmem>>, vector<2x128xf32>
    %c7_i32_387 = arith.constant 7 : i32
    %702 = arith.subi %c7_i32_387, %696 : i32
    %c2_i32_388 = arith.constant 2 : i32
    %703 = arith.muli %702, %c2_i32_388 : i32
    %704 = arith.index_cast %703 : i32 to index
    %c0_389 = arith.constant 0 : index
    %705 = vector.load %arg11[%704, %c0_389] : memref<16x128xf32, #tpu.memory_space<vmem>>, vector<2x128xf32>
    %706 = tpu.concatenate %701, %705 in 0 : vector<2x128xf32>, vector<2x128xf32> -> vector<4x128xf32>
    %707 = arith.addf %698, %706 : vector<4x128xf32>
    %708 = arith.negf %707 : vector<4x128xf32>
    %709 = math.exp %708 : vector<4x128xf32>
    %cst_390 = arith.constant 1.000000e+00 : f32
    %710 = vector.broadcast %cst_390 : f32 to vector<4x128xf32>
    %711 = arith.addf %710, %709 : vector<4x128xf32>
    %712 = arith.divf %710, %711 : vector<4x128xf32>
    %713 = math.tanh %707 : vector<4x128xf32>
    %714 = arith.select %5, %713, %712 : vector<4x128xi1>, vector<4x128xf32>
    %715 = vector.extract_strided_slice %714 {offsets = [0, 0], sizes = [4, 32], strides = [1, 1]} : vector<4x128xf32> to vector<4x32xf32>
    %716 = vector.extract_strided_slice %714 {offsets = [0, 32], sizes = [4, 32], strides = [1, 1]} : vector<4x128xf32> to vector<4x32xf32>
    %717 = vector.extract_strided_slice %714 {offsets = [0, 64], sizes = [4, 32], strides = [1, 1]} : vector<4x128xf32> to vector<4x32xf32>
    %718 = vector.extract_strided_slice %714 {offsets = [0, 96], sizes = [4, 32], strides = [1, 1]} : vector<4x128xf32> to vector<4x32xf32>
    %c0_391 = arith.constant 0 : index
    %c0_392 = arith.constant 0 : index
    %719 = vector.load %arg15[%c0_391, %c0_392] : memref<4x32xf32, #tpu.memory_space<vmem>>, vector<4x32xf32>
    %720 = arith.mulf %716, %719 : vector<4x32xf32>
    %721 = arith.mulf %715, %717 : vector<4x32xf32>
    %722 = arith.addf %720, %721 : vector<4x32xf32>
    %723 = math.tanh %722 : vector<4x32xf32>
    %724 = arith.mulf %718, %723 : vector<4x32xf32>
    %c0_393 = arith.constant 0 : index
    %c0_394 = arith.constant 0 : index
    %725 = vector.load %arg15[%c0_393, %c0_394] : memref<4x32xf32, #tpu.memory_space<vmem>>, vector<4x32xf32>
    tpu.vector_store %arg15[%c0_393, %c0_394], %722 {strides = array<i32>} : memref<4x32xf32, #tpu.memory_space<vmem>>, vector<4x32xf32>,
    %726 = tpu.concatenate %724, %724 in 1 : vector<4x32xf32>, vector<4x32xf32> -> vector<4x64xf32>
    %727 = arith.mulf %726, %15 : vector<4x64xf32>
    %c0_395 = arith.constant 0 : index
    %c0_396 = arith.constant 0 : index
    %728 = vector.load %arg14[%c0_395, %c0_396] : memref<4x64xf32, #tpu.memory_space<vmem>>, vector<4x64xf32>
    tpu.vector_store %arg14[%c0_395, %c0_396], %727 {strides = array<i32>} : memref<4x64xf32, #tpu.memory_space<vmem>>, vector<4x64xf32>,
    %729 = vector.extract_strided_slice %724 {offsets = [0, 0], sizes = [2, 32], strides = [1, 1]} : vector<4x32xf32> to vector<2x32xf32>
    %c2_i32_397 = arith.constant 2 : i32
    %730 = arith.muli %696, %c2_i32_397 : i32
    %731 = arith.index_cast %730 : i32 to index
    %c0_398 = arith.constant 0 : index
    %732 = vector.load %arg12[%731, %c0_398] : memref<16x32xf32, #tpu.memory_space<vmem>>, vector<2x32xf32>
    tpu.vector_store %arg12[%731, %c0_398], %729 {strides = array<i32>} : memref<16x32xf32, #tpu.memory_space<vmem>>, vector<2x32xf32>,
    %733 = vector.extract_strided_slice %724 {offsets = [2, 0], sizes = [2, 32], strides = [1, 1]} : vector<4x32xf32> to vector<2x32xf32>
    %c7_i32_399 = arith.constant 7 : i32
    %734 = arith.subi %c7_i32_399, %696 : i32
    %c2_i32_400 = arith.constant 2 : i32
    %735 = arith.muli %734, %c2_i32_400 : i32
    %736 = arith.index_cast %735 : i32 to index
    %c0_401 = arith.constant 0 : index
    %737 = vector.load %arg13[%736, %c0_401] : memref<16x32xf32, #tpu.memory_space<vmem>>, vector<2x32xf32>
    tpu.vector_store %arg13[%736, %c0_401], %733 {strides = array<i32>} : memref<16x32xf32, #tpu.memory_space<vmem>>, vector<2x32xf32>,
    %c8_i32_402 = arith.constant 8 : i32
    %c0_403 = arith.constant 0 : index
    %c0_404 = arith.constant 0 : index
    %738 = vector.load %arg12[%c0_403, %c0_404] : memref<16x32xf32, #tpu.memory_space<vmem>>, vector<16x32xf32>
    %c0_405 = arith.constant 0 : index
    %c0_406 = arith.constant 0 : index
    %739 = vector.load %arg7[%c0_405, %c0_406] : memref<64x8xf32, #tpu.memory_space<vmem>>, vector<32x8xf32>
    %cst_407 = arith.constant dense<0.000000e+00> : vector<16x8xf32>
    %740 = tpu.matmul %738, %739, %cst_407 {dimension_numbers = #tpu.dot_dimension_numbers<[1], [0], [0], [1], [0, 0, 1, 1], [], []>} : vector<16x32xf32>, vector<32x8xf32>, vector<16x8xf32> -> vector<16x8xf32>
    %c0_408 = arith.constant 0 : index
    %c0_409 = arith.constant 0 : index
    %741 = vector.load %arg13[%c0_408, %c0_409] : memref<16x32xf32, #tpu.memory_space<vmem>>, vector<16x32xf32>
    %c32_410 = arith.constant 32 : index
    %c0_411 = arith.constant 0 : index
    %742 = vector.load %arg7[%c32_410, %c0_411] : memref<64x8xf32, #tpu.memory_space<vmem>>, vector<32x8xf32>
    %cst_412 = arith.constant dense<0.000000e+00> : vector<16x8xf32>
    %743 = tpu.matmul %741, %742, %cst_412 {dimension_numbers = #tpu.dot_dimension_numbers<[1], [0], [0], [1], [0, 0, 1, 1], [], []>} : vector<16x32xf32>, vector<32x8xf32>, vector<16x8xf32> -> vector<16x8xf32>
    %744 = arith.addf %740, %743 : vector<16x8xf32>
    %c0_413 = arith.constant 0 : index
    %c0_414 = arith.constant 0 : index
    %745 = vector.load %arg8[%c0_413, %c0_414] : memref<1x8xf32, #tpu.memory_space<vmem>>, vector<1x8xf32>
    %746 = vector.broadcast %745 : vector<1x8xf32> to vector<16x8xf32>
    %747 = arith.addf %744, %746 : vector<16x8xf32>
    %cst_415 = arith.constant 0.000000e+00 : f32
    %748 = vector.broadcast %cst_415 : f32 to vector<16x8xf32>
    %749 = arith.maximumf %747, %748 : vector<16x8xf32>
    %c0_416 = arith.constant 0 : index
    %c0_417 = arith.constant 0 : index
    %750 = vector.load %arg9[%c0_416, %c0_417] : memref<16x8xf32, #tpu.memory_space<vmem>>, vector<16x8xf32>
    tpu.vector_store %arg9[%c0_416, %c0_417], %749 {strides = array<i32>} : memref<16x8xf32, #tpu.memory_space<vmem>>, vector<16x8xf32>,
    return
  }
}

</mosaic_0001>

<llo_original>
// kernel: simple_lstm_forward.1
$region0: #{simple_lstm_forward.1}
  #allocation0 [shape = 'u32[]', space=smem, size = 0x4, offset = 0x4, fixed_abs, tag = 'smem constant byte address 0x4 - core index']
  #allocation1 [shape = 'u32[144,128]{1,0:T(1,128)}', space=vmem, size = 0x12000, scoped, tag = 'internal scratch']
  #allocation2 [shape = 'f32[16,128]{1,0:T(8,128)}', space=vmem, size = 0x2000, scoped, tag = 'scratch operand']
  #allocation3 [shape = 'f32[16,128]{1,0:T(8,128)}', space=vmem, size = 0x2000, scoped, tag = 'scratch operand']
  #allocation4 [shape = 'f32[16,32]{1,0:T(8,128)}', space=vmem, size = 0x2000, scoped, tag = 'scratch operand']
  #allocation5 [shape = 'f32[16,32]{1,0:T(8,128)}', space=vmem, size = 0x2000, scoped, tag = 'scratch operand']
  #allocation6 [shape = 'f32[4,64]{1,0:T(4,128)}', space=vmem, size = 0x800, scoped, tag = 'scratch operand']
  #allocation7 [shape = 'f32[4,32]{1,0:T(4,128)}', space=vmem, size = 0x800, scoped, tag = 'scratch operand']
  %s0 = inlined_call_operand.vmem [shape: f32[16,16], index: 0, kind: input, shape index: {}]
  %s1 = inlined_call_operand.hbm [shape: f32[16,256], index: 1, kind: input, shape index: {}]
  %s2 = inlined_call_operand.vmem [shape: f32[64,128], index: 2, kind: input, shape index: {}]
  %s3 = inlined_call_operand.vmem [shape: f32[1,256], index: 3, kind: input, shape index: {}]
  %s4 = inlined_call_operand.hbm [shape: f32[64,256], index: 4, kind: input, shape index: {}]
  %s5 = inlined_call_operand.hbm [shape: f32[64,128], index: 5, kind: input, shape index: {}]
  %s6 = inlined_call_operand.vmem [shape: f32[1,256], index: 6, kind: input, shape index: {}]
  %s7 = inlined_call_operand.vmem [shape: f32[64,8], index: 7, kind: input, shape index: {}]
  %s8 = inlined_call_operand.vmem [shape: f32[1,8], index: 8, kind: input, shape index: {}]
  %s9 = inlined_call_operand.hbm [shape: f32[16,8], index: 9, kind: output, shape index: {}]
  %s10 = sld [smem:[#allocation0]]
  $region58: #{simple_lstm_forward.1} parent=0
    _
  %s12 = ssub.s32 1, %s10
  %s13 = scalar_select 0, %s12, %s10
  $region1: #{simple_lstm_forward.1} parent=0
    #allocation8 [shape = 'u8[16384]{0}', space=vmem, size = 0x4000, scoped, tag = 'input window, operand 1, single buffered']
    #allocation9 [shape = 's32[1]{0}', space=sflag, size = 0x4, scoped, tag = 'scoped memory for simple_lstm_forward.1']
    #allocation10 [shape = 's32[1]{0}', space=sflag, size = 0x4, scoped, tag = 'scoped memory for simple_lstm_forward.1']
    #allocation11 [shape = 'u8[65536]{0}', space=vmem, size = 0x10000, scoped, tag = 'input window, operand 4, single buffered']
    #allocation12 [shape = 's32[1]{0}', space=sflag, size = 0x4, scoped, tag = 'scoped memory for simple_lstm_forward.1']
    #allocation13 [shape = 'u8[32768]{0}', space=vmem, size = 0x8000, scoped, tag = 'input window, operand 5, single buffered']
    #allocation14 [shape = 'u8[8192]{0}', space=vmem, size = 0x2000, scoped, tag = 'output window, operand 0, single buffered']
    %14 = vsyncpa [#allocation9], 0
    %15 = vsyncpa [#allocation12], 0
    %16 = vsyncpa [#allocation10], 0
    // Predicated region
    $region2: #{simple_lstm_forward.1} parent=1 // pred_check
      _
    $region3: #{simple_lstm_forward.1} parent=1 // pred_check_branch
      %18 = sbr.rel (0) target = $region5
    $region4: #{simple_lstm_forward.1} parent=1 // pred_region
      _
    $region5: #{simple_lstm_forward.1} parent=1 // pred_fallthru
      _
    // Predicated region
    $region6: #{simple_lstm_forward.1} parent=1 // pred_check
      _
    $region7: #{simple_lstm_forward.1} parent=1 // pred_check_branch
      %20 = sbr.rel (0) target = $region9
    $region8: #{simple_lstm_forward.1} parent=1 // pred_region
      %s22 = ssub.s32 512, 512
      %23 = vsyncadd [#allocation9], %s22
      %s24 = sshll.u32 [#allocation8], 4
      %s25 = int_to_ptr.vmem [resolvable:$true] %s24
      %30 = dma.hbm_to_vmem [thread:$0]  %s1, 512, %s25, [#allocation9], 256, 256, 16
    $region9: #{simple_lstm_forward.1} parent=1 // pred_fallthru
      _
    // Predicated region
    $region10: #{simple_lstm_forward.1} parent=1 // pred_check
      _
    $region11: #{simple_lstm_forward.1} parent=1 // pred_check_branch
      %32 = sbr.rel (0) target = $region13
    $region12: #{simple_lstm_forward.1} parent=1 // pred_region
      _
    $region13: #{simple_lstm_forward.1} parent=1 // pred_fallthru
      _
    // Predicated region
    $region14: #{simple_lstm_forward.1} parent=1 // pred_check
      _
    $region15: #{simple_lstm_forward.1} parent=1 // pred_check_branch
      %34 = sbr.rel (0) target = $region17
    $region16: #{simple_lstm_forward.1} parent=1 // pred_region
      _
    $region17: #{simple_lstm_forward.1} parent=1 // pred_fallthru
      _
    // Predicated region
    $region18: #{simple_lstm_forward.1} parent=1 // pred_check
      _
    $region19: #{simple_lstm_forward.1} parent=1 // pred_check_branch
      %36 = sbr.rel (0) target = $region21
    $region20: #{simple_lstm_forward.1} parent=1 // pred_region
      %s38 = ssub.s32 2048, 2048
      %39 = vsyncadd [#allocation12], %s38
      %s40 = sshll.u32 [#allocation11], 4
      %s41 = int_to_ptr.vmem [resolvable:$true] %s40
      %46 = dma.hbm_to_vmem [thread:$0]  %s4, 2048, %s41, [#allocation12], 256, 256, 16
    $region21: #{simple_lstm_forward.1} parent=1 // pred_fallthru
      _
    // Predicated region
    $region22: #{simple_lstm_forward.1} parent=1 // pred_check
      _
    $region23: #{simple_lstm_forward.1} parent=1 // pred_check_branch
      %48 = sbr.rel (0) target = $region25
    $region24: #{simple_lstm_forward.1} parent=1 // pred_region
      %s50 = ssub.s32 1024, 1024
      %51 = vsyncadd [#allocation12], %s50
      %s52 = sshll.u32 [#allocation13], 4
      %s53 = int_to_ptr.vmem [resolvable:$true] %s52
      %58 = dma.hbm_to_vmem [thread:$0]  %s5, 1024, %s53, [#allocation12], 128, 128, 8
    $region25: #{simple_lstm_forward.1} parent=1 // pred_fallthru
      _
    // Predicated region
    $region26: #{simple_lstm_forward.1} parent=1 // pred_check
      _
    $region27: #{simple_lstm_forward.1} parent=1 // pred_check_branch
      %60 = sbr.rel (0) target = $region29
    $region28: #{simple_lstm_forward.1} parent=1 // pred_region
      _
    $region29: #{simple_lstm_forward.1} parent=1 // pred_fallthru
      _
    // Predicated region
    $region30: #{simple_lstm_forward.1} parent=1 // pred_check
      _
    $region31: #{simple_lstm_forward.1} parent=1 // pred_check_branch
      %62 = sbr.rel (0) target = $region33
    $region32: #{simple_lstm_forward.1} parent=1 // pred_region
      _
    $region33: #{simple_lstm_forward.1} parent=1 // pred_fallthru
      _
    // Predicated region
    $region34: #{simple_lstm_forward.1} parent=1 // pred_check
      _
    $region35: #{simple_lstm_forward.1} parent=1 // pred_check_branch
      %64 = sbr.rel (0) target = $region37
    $region36: #{simple_lstm_forward.1} parent=1 // pred_region
      _
    $region37: #{simple_lstm_forward.1} parent=1 // pred_fallthru
      _
    // Predicated region
    $region38: #{simple_lstm_forward.1} parent=1 // pred_check
      _
    $region39: #{simple_lstm_forward.1} parent=1 // pred_check_branch
      %66 = sbr.rel (0) target = $region41
    $region40: #{simple_lstm_forward.1} parent=1 // pred_region
      %67 = dma.done [#allocation9], 512
    $region41: #{simple_lstm_forward.1} parent=1 // pred_fallthru
      _
    // Predicated region
    $region42: #{simple_lstm_forward.1} parent=1 // pred_check
      _
    $region43: #{simple_lstm_forward.1} parent=1 // pred_check_branch
      %69 = sbr.rel (0) target = $region45
    $region44: #{simple_lstm_forward.1} parent=1 // pred_region
      %70 = dma.done [#allocation12], 2048
    $region45: #{simple_lstm_forward.1} parent=1 // pred_fallthru
      _
    // Predicated region
    $region46: #{simple_lstm_forward.1} parent=1 // pred_check
      _
    $region47: #{simple_lstm_forward.1} parent=1 // pred_check_branch
      %72 = sbr.rel (0) target = $region49
    $region48: #{simple_lstm_forward.1} parent=1 // pred_region
      %73 = dma.done [#allocation12], 1024
    $region49: #{simple_lstm_forward.1} parent=1 // pred_fallthru
      _
    %v74 = vlaneseq
    %v75 = vand.u32 %v74, 127
    %vm76 = vcmp.ge.s32.totalorder %v75, 64
    %vm77 = vcmp.lt.s32.totalorder %v75, 96
    %vm78 = vmand %vm76, %vm77
    %v79 = vlaneseq
    %v80 = vshrl.u32 %v79, 7
    %vm81 = vcmp.lt.s32.totalorder %v80, 2
    %vm82 = vcmp.lt.s32.totalorder %v75, 32
    %vm83 = vmxor %vm81, %vm82
    %vm84 = vmxor %vm83, 1
    %v85 = vsel %vm84, 1, 0
    %v86 = vcvt.s32.f32 %v85
    %v87 = vld [vmem:[%s0] sm:$0xff]
    %v88 = vld [vmem:[%s0 + $0x8] sm:$0xff]
    %v89 = vld [vmem:[#allocation8] sm:$0xff]
    %v90 = vld [vmem:[#allocation8 + $0x8] sm:$0xff]
    %v91 = vld [vmem:[#allocation8 + $0x10] sm:$0xff]
    %v92 = vld [vmem:[#allocation8 + $0x18] sm:$0xff]
    %v93 = vld [vmem:[%s3] sm:$0x3]
    %v95 = vlaneseq
    %v96 = vshrl.u32 %v95, 7
    %v97 = vsub.s32 0, %v96
    %v98 = vrot.slane %v93, %v97
    %v99 = vlaneseq
    %v100 = vshrl.u32 %v99, 7
    %v101 = vsub.s32 1, %v100
    %v102 = vrot.slane %v93, %v101
    %vm105 = vcmask 130048
    %v107 = vsel %vm105, %v87, 0
    %v110 = vsel %vm105, %v88, 0
    %112 = vmatprep.subr.mxu0 %v90
    %113 = vmatpush1.msra.mxu0 %v89
    %114 = vmatprep.subr.mxu0 %v92
    %115 = vmatpush1.msra.mxu0 %v91
    %116 = vmatprep.subr.mxu0 0.0
    %117 = vmatpush1.msra.mxu0 0.0
    %118 = vmatprep.subr.mxu0 0.0
    %119 = vmatpush1.msra.mxu0 0.0
    %120 = vmatprep.subr.mxu0 0.0
    %121 = vmatpush1.msra.mxu0 0.0
    %122 = vmatprep.subr.mxu0 0.0
    %123 = vmatpush1.msra.mxu0 0.0
    %124 = vmatprep.subr.mxu0 0.0
    %125 = vmatpush1.msra.mxu0 0.0
    %126 = vmatprep.subr.mxu0 0.0
    %127 = vmatpush1.msra.mxu0 0.0
    %128 = vmatprep.subr.mxu0 0.0
    %129 = vmatpush1.msra.mxu0 0.0
    %130 = vmatprep.subr.mxu0 0.0
    %131 = vmatpush1.msra.mxu0 0.0
    %132 = vmatprep.subr.mxu0 0.0
    %133 = vmatpush1.msra.mxu0 0.0
    %134 = vmatprep.subr.mxu0 0.0
    %135 = vmatpush1.msra.mxu0 0.0
    %136 = vmatprep.subr.mxu0 0.0
    %137 = vmatpush1.msra.mxu0 0.0
    %138 = vmatprep.subr.mxu0 0.0
    %139 = vmatpush1.msra.mxu0 0.0
    %140 = vmatprep.subr.mxu0 0.0
    %141 = vmatpush1.msra.mxu0 0.0
    %142 = vmatprep.subr.mxu0 0.0
    %143 = vmatpush1.msra.mxu0 0.0
    %144 = vmatprep.subr.mxu0 0.0
    %145 = vmatpush1.msra.mxu0 0.0
    %146 = vmatprep.subr.mxu0 0.0
    %147 = vmatpush1.msra.mxu0 0.0
    %148 = vmatprep.subr.mxu0 0.0
    %149 = vmatpush1.msra.mxu0 0.0
    %150 = vmatprep.subr.mxu0 0.0
    %151 = vmatpush1.msra.mxu0 0.0
    %152 = vmatprep.subr.mxu0 0.0
    %153 = vmatpush1.msra.mxu0 0.0
    %154 = vmatprep.subr.mxu0 0.0
    %155 = vmatpush1.msra.mxu0 0.0
    %156 = vmatprep.subr.mxu0 0.0
    %157 = vmatpush1.msra.mxu0 0.0
    %158 = vmatprep.subr.mxu0 0.0
    %159 = vmatpush1.msra.mxu0 0.0
    %160 = vmatprep.subr.mxu0 0.0
    %161 = vmatpush1.msra.mxu0 0.0
    %162 = vmatprep.subr.mxu0 0.0
    %163 = vmatpush1.msra.mxu0 0.0
    %164 = vmatprep.subr.mxu0 0.0
    %165 = vmatpush1.msra.mxu0 0.0
    %166 = vmatprep.subr.mxu0 0.0
    %167 = vmatpush1.msra.mxu0 0.0
    %168 = vmatprep.subr.mxu0 0.0
    %169 = vmatpush1.msra.mxu0 0.0
    %170 = vmatprep.subr.mxu0 0.0
    %171 = vmatpush1.msra.mxu0 0.0
    %172 = vmatprep.subr.mxu0 0.0
    %173 = vmatpush1.msra.mxu0 0.0
    %174 = vmatprep.subr.mxu0 0.0
    %175 = vmatpush1.msra.mxu0 0.0
    %176 = vmatprep.mubr.f32.mxu0 0.0
    %177 = vmatmul.mubr.f32.gmra.mrb[0].mxu0 %v107
    %v178 = vpop.f32.mrb[0].mxu0
    %v179 = vadd.f32 %v98, %v178
    %v180 = vpop.f32.mrb[0].mxu0
    %v181 = vadd.f32 %v102, %v180
    %182 = vmatprep.mubr.f32.mxu0 0.0
    %183 = vmatmul.mubr.f32.gmra.mrb[0].mxu0 %v110
    %v184 = vpop.f32.mrb[0].mxu0
    %v185 = vadd.f32 %v98, %v184
    %v186 = vpop.f32.mrb[0].mxu0
    %v187 = vadd.f32 %v102, %v186
    %188 = vdwg.mxu0
    %189 = vst [vmem:[#allocation2] sm:$0xff] %v179
    %190 = vst [vmem:[#allocation2 + $0x8] sm:$0xff] %v185
    %191 = vst [vmem:[#allocation3] sm:$0xff] %v181
    %192 = vst [vmem:[#allocation3 + $0x8] sm:$0xff] %v187
    %vm193 = vcmask 519168
    %194 = vst.msk [vmem:[#allocation6] sm:$0xf] %vm193, 0.0
    %vm195 = vcmask 257024
    %196 = vst.msk [vmem:[#allocation7] sm:$0xf] %vm195, 0.0
    %v197 = vld [vmem:[%s2] sm:$0xff]
    %v198 = vld [vmem:[%s2 + $0x8] sm:$0xff]
    %v199 = vld [vmem:[%s2 + $0x10] sm:$0xff]
    %v200 = vld [vmem:[%s2 + $0x18] sm:$0xff]
    %v201 = vld [vmem:[%s2 + $0x20] sm:$0xff]
    %v202 = vld [vmem:[%s2 + $0x28] sm:$0xff]
    %v203 = vld [vmem:[%s2 + $0x30] sm:$0xff]
    %v204 = vld [vmem:[%s2 + $0x38] sm:$0xff]
    %v205 = vld [vmem:[#allocation6] sm:$0xf]
    %v206 = vld [vmem:[#allocation2] sm:$0x3]
    %v207 = vld [vmem:[#allocation3 + $0xe] sm:$0x3]
    %v209 = vrot.slane %v207, 6
    %vm211 = vcmask 1041408
    %v212 = vsel %vm211, %v206, %v209
    %vm213 = vcmask 523264
    %v215 = vsel %vm213, %v205, 0
    %217 = vmatprep.subr.mxu0 0.0
    %218 = vmatpush1.msra.mxu0 %v197
    %219 = vmatprep.subr.mxu0 0.0
    %220 = vmatpush1.msra.mxu0 %v198
    %221 = vmatprep.subr.mxu0 0.0
    %222 = vmatpush1.msra.mxu0 %v199
    %223 = vmatprep.subr.mxu0 0.0
    %224 = vmatpush1.msra.mxu0 %v200
    %225 = vmatprep.subr.mxu0 0.0
    %226 = vmatpush1.msra.mxu0 %v201
    %227 = vmatprep.subr.mxu0 0.0
    %228 = vmatpush1.msra.mxu0 %v202
    %229 = vmatprep.subr.mxu0 0.0
    %230 = vmatpush1.msra.mxu0 %v203
    %231 = vmatprep.subr.mxu0 0.0
    %232 = vmatpush1.msra.mxu0 %v204
    %233 = vmatprep.subr.mxu0 0.0
    %234 = vmatpush1.msra.mxu0 0.0
    %235 = vmatprep.subr.mxu0 0.0
    %236 = vmatpush1.msra.mxu0 0.0
    %237 = vmatprep.subr.mxu0 0.0
    %238 = vmatpush1.msra.mxu0 0.0
    %239 = vmatprep.subr.mxu0 0.0
    %240 = vmatpush1.msra.mxu0 0.0
    %241 = vmatprep.subr.mxu0 0.0
    %242 = vmatpush1.msra.mxu0 0.0
    %243 = vmatprep.subr.mxu0 0.0
    %244 = vmatpush1.msra.mxu0 0.0
    %245 = vmatprep.subr.mxu0 0.0
    %246 = vmatpush1.msra.mxu0 0.0
    %247 = vmatprep.subr.mxu0 0.0
    %248 = vmatpush1.msra.mxu0 0.0
    %249 = vmatprep.subr.mxu0 0.0
    %250 = vmatpush1.msra.mxu0 0.0
    %251 = vmatprep.subr.mxu0 0.0
    %252 = vmatpush1.msra.mxu0 0.0
    %253 = vmatprep.subr.mxu0 0.0
    %254 = vmatpush1.msra.mxu0 0.0
    %255 = vmatprep.subr.mxu0 0.0
    %256 = vmatpush1.msra.mxu0 0.0
    %257 = vmatprep.subr.mxu0 0.0
    %258 = vmatpush1.msra.mxu0 0.0
    %259 = vmatprep.subr.mxu0 0.0
    %260 = vmatpush1.msra.mxu0 0.0
    %261 = vmatprep.subr.mxu0 0.0
    %262 = vmatpush1.msra.mxu0 0.0
    %263 = vmatprep.subr.mxu0 0.0
    %264 = vmatpush1.msra.mxu0 0.0
    %265 = vmatprep.subr.mxu0 0.0
    %266 = vmatpush1.msra.mxu0 0.0
    %267 = vmatprep.subr.mxu0 0.0
    %268 = vmatpush1.msra.mxu0 0.0
    %269 = vmatprep.subr.mxu0 0.0
    %270 = vmatpush1.msra.mxu0 0.0
    %271 = vmatprep.subr.mxu0 0.0
    %272 = vmatpush1.msra.mxu0 0.0
    %273 = vmatprep.subr.mxu0 0.0
    %274 = vmatpush1.msra.mxu0 0.0
    %275 = vmatprep.subr.mxu0 0.0
    %276 = vmatpush1.msra.mxu0 0.0
    %277 = vmatprep.subr.mxu0 0.0
    %278 = vmatpush1.msra.mxu0 0.0
    %279 = vmatprep.subr.mxu0 0.0
    %280 = vmatpush1.msra.mxu0 0.0
    %281 = vmatprep.mubr.f32.mxu0 0.0
    %282 = vmatmul.mubr.f32.gmra.mrb[0].mxu0 %v215
    %v283 = vpop.f32.mrb[0].mxu0
    %v284 = vadd.f32 %v212, %v283
    %v285 = vpop.f32.mrb[0].mxu0
    %286 = vdwg.mxu0
    %v287 = vxor.u32 %v284, 2147483648
    %v288 = vmul.f32 %v287, 1.442695
    %v289 = vpow.pop %v288
    %v290 = vadd.f32 %v289, 1.0
    %v291 = vrcp.pop %v290
    %v292 = vmul.f32 1.0, %v291
    %v293 = vtanh.pop %v284
    %v294 = vsel %vm78, %v293, %v292
    %v295 = vld [vmem:[#allocation7] sm:$0xf]
    %297 = vrot.lane.b32.xlu0 %v295, 32
    %v298 = vpop.permute.xlu0 %297
    %v300 = vmul.f32 %v294, %v298
    %302 = vrot.lane.b32.xlu0 %v294, 64
    %v303 = vpop.permute.xlu0 %302
    %v305 = vmul.f32 %v294, %v303
    %307 = vrot.lane.b32.xlu0 %v305, 32
    %v308 = vpop.permute.xlu0 %307
    %v310 = vadd.f32 %v300, %v308
    %v311 = vtanh.pop %v310
    %313 = vrot.lane.b32.xlu0 %v311, 64
    %v314 = vpop.permute.xlu0 %313
    %v316 = vmul.f32 %v294, %v314
    %318 = vrot.lane.b32.xlu0 %v310, 96
    %v319 = vpop.permute.xlu0 %318
    %321 = vst.msk [vmem:[#allocation7] sm:$0xf] %vm195, %v319
    %323 = vrot.lane.b32.xlu0 %v316, 32
    %v324 = vpop.permute.xlu0 %323
    %326 = vrot.lane.b32.xlu0 %v316, 64
    %v327 = vpop.permute.xlu0 %326
    %vm329 = vcmask 261120
    %v330 = vsel %vm329, %v324, %v327
    %v331 = vmul.f32 %v330, %v86
    %332 = vst.msk [vmem:[#allocation6] sm:$0xf] %vm193, %v331
    %vm333 = vcmask 254976
    %334 = vst.msk [vmem:[#allocation4] sm:$0x3] %vm333, %v324
    %vm335 = vcmask 257026
    %336 = vst.msk [vmem:[#allocation5 + $0xc] sm:$0xc] %vm335, %v324
    %v337 = vld [vmem:[#allocation6] sm:$0xf]
    %v338 = vld [vmem:[#allocation2 + $0x2] sm:$0x3]
    %v339 = vld [vmem:[#allocation3 + $0xc] sm:$0x3]
    %v341 = vrot.slane %v339, 6
    %v343 = vsel %vm211, %v338, %v341
    %v345 = vsel %vm213, %v337, 0
    %347 = vmatprep.subr.mxu0 0.0
    %348 = vmatpush1.msra.mxu0 %v197
    %349 = vmatprep.subr.mxu0 0.0
    %350 = vmatpush1.msra.mxu0 %v198
    %351 = vmatprep.subr.mxu0 0.0
    %352 = vmatpush1.msra.mxu0 %v199
    %353 = vmatprep.subr.mxu0 0.0
    %354 = vmatpush1.msra.mxu0 %v200
    %355 = vmatprep.subr.mxu0 0.0
    %356 = vmatpush1.msra.mxu0 %v201
    %357 = vmatprep.subr.mxu0 0.0
    %358 = vmatpush1.msra.mxu0 %v202
    %359 = vmatprep.subr.mxu0 0.0
    %360 = vmatpush1.msra.mxu0 %v203
    %361 = vmatprep.subr.mxu0 0.0
    %362 = vmatpush1.msra.mxu0 %v204
    %363 = vmatprep.subr.mxu0 0.0
    %364 = vmatpush1.msra.mxu0 0.0
    %365 = vmatprep.subr.mxu0 0.0
    %366 = vmatpush1.msra.mxu0 0.0
    %367 = vmatprep.subr.mxu0 0.0
    %368 = vmatpush1.msra.mxu0 0.0
    %369 = vmatprep.subr.mxu0 0.0
    %370 = vmatpush1.msra.mxu0 0.0
    %371 = vmatprep.subr.mxu0 0.0
    %372 = vmatpush1.msra.mxu0 0.0
    %373 = vmatprep.subr.mxu0 0.0
    %374 = vmatpush1.msra.mxu0 0.0
    %375 = vmatprep.subr.mxu0 0.0
    %376 = vmatpush1.msra.mxu0 0.0
    %377 = vmatprep.subr.mxu0 0.0
    %378 = vmatpush1.msra.mxu0 0.0
    %379 = vmatprep.subr.mxu0 0.0
    %380 = vmatpush1.msra.mxu0 0.0
    %381 = vmatprep.subr.mxu0 0.0
    %382 = vmatpush1.msra.mxu0 0.0
    %383 = vmatprep.subr.mxu0 0.0
    %384 = vmatpush1.msra.mxu0 0.0
    %385 = vmatprep.subr.mxu0 0.0
    %386 = vmatpush1.msra.mxu0 0.0
    %387 = vmatprep.subr.mxu0 0.0
    %388 = vmatpush1.msra.mxu0 0.0
    %389 = vmatprep.subr.mxu0 0.0
    %390 = vmatpush1.msra.mxu0 0.0
    %391 = vmatprep.subr.mxu0 0.0
    %392 = vmatpush1.msra.mxu0 0.0
    %393 = vmatprep.subr.mxu0 0.0
    %394 = vmatpush1.msra.mxu0 0.0
    %395 = vmatprep.subr.mxu0 0.0
    %396 = vmatpush1.msra.mxu0 0.0
    %397 = vmatprep.subr.mxu0 0.0
    %398 = vmatpush1.msra.mxu0 0.0
    %399 = vmatprep.subr.mxu0 0.0
    %400 = vmatpush1.msra.mxu0 0.0
    %401 = vmatprep.subr.mxu0 0.0
    %402 = vmatpush1.msra.mxu0 0.0
    %403 = vmatprep.subr.mxu0 0.0
    %404 = vmatpush1.msra.mxu0 0.0
    %405 = vmatprep.subr.mxu0 0.0
    %406 = vmatpush1.msra.mxu0 0.0
    %407 = vmatprep.subr.mxu0 0.0
    %408 = vmatpush1.msra.mxu0 0.0
    %409 = vmatprep.subr.mxu0 0.0
    %410 = vmatpush1.msra.mxu0 0.0
    %411 = vmatprep.mubr.f32.mxu0 0.0
    %412 = vmatmul.mubr.f32.gmra.mrb[0].mxu0 %v345
    %v413 = vpop.f32.mrb[0].mxu0
    %v414 = vadd.f32 %v343, %v413
    %v415 = vpop.f32.mrb[0].mxu0
    %416 = vdwg.mxu0
    %v417 = vxor.u32 %v414, 2147483648
    %v418 = vmul.f32 %v417, 1.442695
    %v419 = vpow.pop %v418
    %v420 = vadd.f32 %v419, 1.0
    %v421 = vrcp.pop %v420
    %v422 = vmul.f32 1.0, %v421
    %v423 = vtanh.pop %v414
    %v424 = vsel %vm78, %v423, %v422
    %v425 = vld [vmem:[#allocation7] sm:$0xf]
    %427 = vrot.lane.b32.xlu0 %v425, 32
    %v428 = vpop.permute.xlu0 %427
    %v430 = vmul.f32 %v424, %v428
    %432 = vrot.lane.b32.xlu0 %v424, 64
    %v433 = vpop.permute.xlu0 %432
    %v435 = vmul.f32 %v424, %v433
    %437 = vrot.lane.b32.xlu0 %v435, 32
    %v438 = vpop.permute.xlu0 %437
    %v440 = vadd.f32 %v430, %v438
    %v441 = vtanh.pop %v440
    %443 = vrot.lane.b32.xlu0 %v441, 64
    %v444 = vpop.permute.xlu0 %443
    %v446 = vmul.f32 %v424, %v444
    %448 = vrot.lane.b32.xlu0 %v440, 96
    %v449 = vpop.permute.xlu0 %448
    %451 = vst.msk [vmem:[#allocation7] sm:$0xf] %vm195, %v449
    %453 = vrot.lane.b32.xlu0 %v446, 32
    %v454 = vpop.permute.xlu0 %453
    %456 = vrot.lane.b32.xlu0 %v446, 64
    %v457 = vpop.permute.xlu0 %456
    %v459 = vsel %vm329, %v454, %v457
    %v460 = vmul.f32 %v459, %v86
    %461 = vst.msk [vmem:[#allocation6] sm:$0xf] %vm193, %v460
    %462 = vst.msk [vmem:[#allocation4 + $0x2] sm:$0x3] %vm333, %v454
    %463 = vst.msk [vmem:[#allocation5 + $0xa] sm:$0xc] %vm335, %v454
    %v464 = vld [vmem:[#allocation6] sm:$0xf]
    %v465 = vld [vmem:[#allocation2 + $0x4] sm:$0x3]
    %v466 = vld [vmem:[#allocation3 + $0xa] sm:$0x3]
    %v468 = vrot.slane %v466, 6
    %v470 = vsel %vm211, %v465, %v468
    %v472 = vsel %vm213, %v464, 0
    %474 = vmatprep.subr.mxu0 0.0
    %475 = vmatpush1.msra.mxu0 %v197
    %476 = vmatprep.subr.mxu0 0.0
    %477 = vmatpush1.msra.mxu0 %v198
    %478 = vmatprep.subr.mxu0 0.0
    %479 = vmatpush1.msra.mxu0 %v199
    %480 = vmatprep.subr.mxu0 0.0
    %481 = vmatpush1.msra.mxu0 %v200
    %482 = vmatprep.subr.mxu0 0.0
    %483 = vmatpush1.msra.mxu0 %v201
    %484 = vmatprep.subr.mxu0 0.0
    %485 = vmatpush1.msra.mxu0 %v202
    %486 = vmatprep.subr.mxu0 0.0
    %487 = vmatpush1.msra.mxu0 %v203
    %488 = vmatprep.subr.mxu0 0.0
    %489 = vmatpush1.msra.mxu0 %v204
    %490 = vmatprep.subr.mxu0 0.0
    %491 = vmatpush1.msra.mxu0 0.0
    %492 = vmatprep.subr.mxu0 0.0
    %493 = vmatpush1.msra.mxu0 0.0
    %494 = vmatprep.subr.mxu0 0.0
    %495 = vmatpush1.msra.mxu0 0.0
    %496 = vmatprep.subr.mxu0 0.0
    %497 = vmatpush1.msra.mxu0 0.0
    %498 = vmatprep.subr.mxu0 0.0
    %499 = vmatpush1.msra.mxu0 0.0
    %500 = vmatprep.subr.mxu0 0.0
    %501 = vmatpush1.msra.mxu0 0.0
    %502 = vmatprep.subr.mxu0 0.0
    %503 = vmatpush1.msra.mxu0 0.0
    %504 = vmatprep.subr.mxu0 0.0
    %505 = vmatpush1.msra.mxu0 0.0
    %506 = vmatprep.subr.mxu0 0.0
    %507 = vmatpush1.msra.mxu0 0.0
    %508 = vmatprep.subr.mxu0 0.0
    %509 = vmatpush1.msra.mxu0 0.0
    %510 = vmatprep.subr.mxu0 0.0
    %511 = vmatpush1.msra.mxu0 0.0
    %512 = vmatprep.subr.mxu0 0.0
    %513 = vmatpush1.msra.mxu0 0.0
    %514 = vmatprep.subr.mxu0 0.0
    %515 = vmatpush1.msra.mxu0 0.0
    %516 = vmatprep.subr.mxu0 0.0
    %517 = vmatpush1.msra.mxu0 0.0
    %518 = vmatprep.subr.mxu0 0.0
    %519 = vmatpush1.msra.mxu0 0.0
    %520 = vmatprep.subr.mxu0 0.0
    %521 = vmatpush1.msra.mxu0 0.0
    %522 = vmatprep.subr.mxu0 0.0
    %523 = vmatpush1.msra.mxu0 0.0
    %524 = vmatprep.subr.mxu0 0.0
    %525 = vmatpush1.msra.mxu0 0.0
    %526 = vmatprep.subr.mxu0 0.0
    %527 = vmatpush1.msra.mxu0 0.0
    %528 = vmatprep.subr.mxu0 0.0
    %529 = vmatpush1.msra.mxu0 0.0
    %530 = vmatprep.subr.mxu0 0.0
    %531 = vmatpush1.msra.mxu0 0.0
    %532 = vmatprep.subr.mxu0 0.0
    %533 = vmatpush1.msra.mxu0 0.0
    %534 = vmatprep.subr.mxu0 0.0
    %535 = vmatpush1.msra.mxu0 0.0
    %536 = vmatprep.subr.mxu0 0.0
    %537 = vmatpush1.msra.mxu0 0.0
    %538 = vmatprep.mubr.f32.mxu0 0.0
    %539 = vmatmul.mubr.f32.gmra.mrb[0].mxu0 %v472
    %v540 = vpop.f32.mrb[0].mxu0
    %v541 = vadd.f32 %v470, %v540
    %v542 = vpop.f32.mrb[0].mxu0
    %543 = vdwg.mxu0
    %v544 = vxor.u32 %v541, 2147483648
    %v545 = vmul.f32 %v544, 1.442695
    %v546 = vpow.pop %v545
    %v547 = vadd.f32 %v546, 1.0
    %v548 = vrcp.pop %v547
    %v549 = vmul.f32 1.0, %v548
    %v550 = vtanh.pop %v541
    %v551 = vsel %vm78, %v550, %v549
    %v552 = vld [vmem:[#allocation7] sm:$0xf]
    %554 = vrot.lane.b32.xlu0 %v552, 32
    %v555 = vpop.permute.xlu0 %554
    %v557 = vmul.f32 %v551, %v555
    %559 = vrot.lane.b32.xlu0 %v551, 64
    %v560 = vpop.permute.xlu0 %559
    %v562 = vmul.f32 %v551, %v560
    %564 = vrot.lane.b32.xlu0 %v562, 32
    %v565 = vpop.permute.xlu0 %564
    %v567 = vadd.f32 %v557, %v565
    %v568 = vtanh.pop %v567
    %570 = vrot.lane.b32.xlu0 %v568, 64
    %v571 = vpop.permute.xlu0 %570
    %v573 = vmul.f32 %v551, %v571
    %575 = vrot.lane.b32.xlu0 %v567, 96
    %v576 = vpop.permute.xlu0 %575
    %578 = vst.msk [vmem:[#allocation7] sm:$0xf] %vm195, %v576
    %580 = vrot.lane.b32.xlu0 %v573, 32
    %v581 = vpop.permute.xlu0 %580
    %583 = vrot.lane.b32.xlu0 %v573, 64
    %v584 = vpop.permute.xlu0 %583
    %v586 = vsel %vm329, %v581, %v584
    %v587 = vmul.f32 %v586, %v86
    %588 = vst.msk [vmem:[#allocation6] sm:$0xf] %vm193, %v587
    %589 = vst.msk [vmem:[#allocation4 + $0x4] sm:$0x3] %vm333, %v581
    %590 = vst.msk [vmem:[#allocation5 + $0x8] sm:$0xc] %vm335, %v581
    %v591 = vld [vmem:[#allocation6] sm:$0xf]
    %v592 = vld [vmem:[#allocation2 + $0x6] sm:$0x3]
    %v593 = vld [vmem:[#allocation3 + $0x8] sm:$0x3]
    %v595 = vrot.slane %v593, 6
    %v597 = vsel %vm211, %v592, %v595
    %v599 = vsel %vm213, %v591, 0
    %601 = vmatprep.subr.mxu0 0.0
    %602 = vmatpush1.msra.mxu0 %v197
    %603 = vmatprep.subr.mxu0 0.0
    %604 = vmatpush1.msra.mxu0 %v198
    %605 = vmatprep.subr.mxu0 0.0
    %606 = vmatpush1.msra.mxu0 %v199
    %607 = vmatprep.subr.mxu0 0.0
    %608 = vmatpush1.msra.mxu0 %v200
    %609 = vmatprep.subr.mxu0 0.0
    %610 = vmatpush1.msra.mxu0 %v201
    %611 = vmatprep.subr.mxu0 0.0
    %612 = vmatpush1.msra.mxu0 %v202
    %613 = vmatprep.subr.mxu0 0.0
    %614 = vmatpush1.msra.mxu0 %v203
    %615 = vmatprep.subr.mxu0 0.0
    %616 = vmatpush1.msra.mxu0 %v204
    %617 = vmatprep.subr.mxu0 0.0
    %618 = vmatpush1.msra.mxu0 0.0
    %619 = vmatprep.subr.mxu0 0.0
    %620 = vmatpush1.msra.mxu0 0.0
    %621 = vmatprep.subr.mxu0 0.0
    %622 = vmatpush1.msra.mxu0 0.0
    %623 = vmatprep.subr.mxu0 0.0
    %624 = vmatpush1.msra.mxu0 0.0
    %625 = vmatprep.subr.mxu0 0.0
    %626 = vmatpush1.msra.mxu0 0.0
    %627 = vmatprep.subr.mxu0 0.0
    %628 = vmatpush1.msra.mxu0 0.0
    %629 = vmatprep.subr.mxu0 0.0
    %630 = vmatpush1.msra.mxu0 0.0
    %631 = vmatprep.subr.mxu0 0.0
    %632 = vmatpush1.msra.mxu0 0.0
    %633 = vmatprep.subr.mxu0 0.0
    %634 = vmatpush1.msra.mxu0 0.0
    %635 = vmatprep.subr.mxu0 0.0
    %636 = vmatpush1.msra.mxu0 0.0
    %637 = vmatprep.subr.mxu0 0.0
    %638 = vmatpush1.msra.mxu0 0.0
    %639 = vmatprep.subr.mxu0 0.0
    %640 = vmatpush1.msra.mxu0 0.0
    %641 = vmatprep.subr.mxu0 0.0
    %642 = vmatpush1.msra.mxu0 0.0
    %643 = vmatprep.subr.mxu0 0.0
    %644 = vmatpush1.msra.mxu0 0.0
    %645 = vmatprep.subr.mxu0 0.0
    %646 = vmatpush1.msra.mxu0 0.0
    %647 = vmatprep.subr.mxu0 0.0
    %648 = vmatpush1.msra.mxu0 0.0
    %649 = vmatprep.subr.mxu0 0.0
    %650 = vmatpush1.msra.mxu0 0.0
    %651 = vmatprep.subr.mxu0 0.0
    %652 = vmatpush1.msra.mxu0 0.0
    %653 = vmatprep.subr.mxu0 0.0
    %654 = vmatpush1.msra.mxu0 0.0
    %655 = vmatprep.subr.mxu0 0.0
    %656 = vmatpush1.msra.mxu0 0.0
    %657 = vmatprep.subr.mxu0 0.0
    %658 = vmatpush1.msra.mxu0 0.0
    %659 = vmatprep.subr.mxu0 0.0
    %660 = vmatpush1.msra.mxu0 0.0
    %661 = vmatprep.subr.mxu0 0.0
    %662 = vmatpush1.msra.mxu0 0.0
    %663 = vmatprep.subr.mxu0 0.0
    %664 = vmatpush1.msra.mxu0 0.0
    %665 = vmatprep.mubr.f32.mxu0 0.0
    %666 = vmatmul.mubr.f32.gmra.mrb[0].mxu0 %v599
    %v667 = vpop.f32.mrb[0].mxu0
    %v668 = vadd.f32 %v597, %v667
    %v669 = vpop.f32.mrb[0].mxu0
    %670 = vdwg.mxu0
    %v671 = vxor.u32 %v668, 2147483648
    %v672 = vmul.f32 %v671, 1.442695
    %v673 = vpow.pop %v672
    %v674 = vadd.f32 %v673, 1.0
    %v675 = vrcp.pop %v674
    %v676 = vmul.f32 1.0, %v675
    %v677 = vtanh.pop %v668
    %v678 = vsel %vm78, %v677, %v676
    %v679 = vld [vmem:[#allocation7] sm:$0xf]
    %681 = vrot.lane.b32.xlu0 %v679, 32
    %v682 = vpop.permute.xlu0 %681
    %v684 = vmul.f32 %v678, %v682
    %686 = vrot.lane.b32.xlu0 %v678, 64
    %v687 = vpop.permute.xlu0 %686
    %v689 = vmul.f32 %v678, %v687
    %691 = vrot.lane.b32.xlu0 %v689, 32
    %v692 = vpop.permute.xlu0 %691
    %v694 = vadd.f32 %v684, %v692
    %v695 = vtanh.pop %v694
    %697 = vrot.lane.b32.xlu0 %v695, 64
    %v698 = vpop.permute.xlu0 %697
    %v700 = vmul.f32 %v678, %v698
    %702 = vrot.lane.b32.xlu0 %v694, 96
    %v703 = vpop.permute.xlu0 %702
    %705 = vst.msk [vmem:[#allocation7] sm:$0xf] %vm195, %v703
    %707 = vrot.lane.b32.xlu0 %v700, 32
    %v708 = vpop.permute.xlu0 %707
    %710 = vrot.lane.b32.xlu0 %v700, 64
    %v711 = vpop.permute.xlu0 %710
    %v713 = vsel %vm329, %v708, %v711
    %v714 = vmul.f32 %v713, %v86
    %715 = vst.msk [vmem:[#allocation6] sm:$0xf] %vm193, %v714
    %716 = vst.msk [vmem:[#allocation4 + $0x6] sm:$0x3] %vm333, %v708
    %717 = vst.msk [vmem:[#allocation5 + $0x6] sm:$0xc] %vm335, %v708
    %v718 = vld [vmem:[#allocation6] sm:$0xf]
    %v719 = vld [vmem:[#allocation2 + $0x8] sm:$0x3]
    %v720 = vld [vmem:[#allocation3 + $0x6] sm:$0x3]
    %v722 = vrot.slane %v720, 6
    %v724 = vsel %vm211, %v719, %v722
    %v726 = vsel %vm213, %v718, 0
    %728 = vmatprep.subr.mxu0 0.0
    %729 = vmatpush1.msra.mxu0 %v197
    %730 = vmatprep.subr.mxu0 0.0
    %731 = vmatpush1.msra.mxu0 %v198
    %732 = vmatprep.subr.mxu0 0.0
    %733 = vmatpush1.msra.mxu0 %v199
    %734 = vmatprep.subr.mxu0 0.0
    %735 = vmatpush1.msra.mxu0 %v200
    %736 = vmatprep.subr.mxu0 0.0
    %737 = vmatpush1.msra.mxu0 %v201
    %738 = vmatprep.subr.mxu0 0.0
    %739 = vmatpush1.msra.mxu0 %v202
    %740 = vmatprep.subr.mxu0 0.0
    %741 = vmatpush1.msra.mxu0 %v203
    %742 = vmatprep.subr.mxu0 0.0
    %743 = vmatpush1.msra.mxu0 %v204
    %744 = vmatprep.subr.mxu0 0.0
    %745 = vmatpush1.msra.mxu0 0.0
    %746 = vmatprep.subr.mxu0 0.0
    %747 = vmatpush1.msra.mxu0 0.0
    %748 = vmatprep.subr.mxu0 0.0
    %749 = vmatpush1.msra.mxu0 0.0
    %750 = vmatprep.subr.mxu0 0.0
    %751 = vmatpush1.msra.mxu0 0.0
    %752 = vmatprep.subr.mxu0 0.0
    %753 = vmatpush1.msra.mxu0 0.0
    %754 = vmatprep.subr.mxu0 0.0
    %755 = vmatpush1.msra.mxu0 0.0
    %756 = vmatprep.subr.mxu0 0.0
    %757 = vmatpush1.msra.mxu0 0.0
    %758 = vmatprep.subr.mxu0 0.0
    %759 = vmatpush1.msra.mxu0 0.0
    %760 = vmatprep.subr.mxu0 0.0
    %761 = vmatpush1.msra.mxu0 0.0
    %762 = vmatprep.subr.mxu0 0.0
    %763 = vmatpush1.msra.mxu0 0.0
    %764 = vmatprep.subr.mxu0 0.0
    %765 = vmatpush1.msra.mxu0 0.0
    %766 = vmatprep.subr.mxu0 0.0
    %767 = vmatpush1.msra.mxu0 0.0
    %768 = vmatprep.subr.mxu0 0.0
    %769 = vmatpush1.msra.mxu0 0.0
    %770 = vmatprep.subr.mxu0 0.0
    %771 = vmatpush1.msra.mxu0 0.0
    %772 = vmatprep.subr.mxu0 0.0
    %773 = vmatpush1.msra.mxu0 0.0
    %774 = vmatprep.subr.mxu0 0.0
    %775 = vmatpush1.msra.mxu0 0.0
    %776 = vmatprep.subr.mxu0 0.0
    %777 = vmatpush1.msra.mxu0 0.0
    %778 = vmatprep.subr.mxu0 0.0
    %779 = vmatpush1.msra.mxu0 0.0
    %780 = vmatprep.subr.mxu0 0.0
    %781 = vmatpush1.msra.mxu0 0.0
    %782 = vmatprep.subr.mxu0 0.0
    %783 = vmatpush1.msra.mxu0 0.0
    %784 = vmatprep.subr.mxu0 0.0
    %785 = vmatpush1.msra.mxu0 0.0
    %786 = vmatprep.subr.mxu0 0.0
    %787 = vmatpush1.msra.mxu0 0.0
    %788 = vmatprep.subr.mxu0 0.0
    %789 = vmatpush1.msra.mxu0 0.0
    %790 = vmatprep.subr.mxu0 0.0
    %791 = vmatpush1.msra.mxu0 0.0
    %792 = vmatprep.mubr.f32.mxu0 0.0
    %793 = vmatmul.mubr.f32.gmra.mrb[0].mxu0 %v726
    %v794 = vpop.f32.mrb[0].mxu0
    %v795 = vadd.f32 %v724, %v794
    %v796 = vpop.f32.mrb[0].mxu0
    %797 = vdwg.mxu0
    %v798 = vxor.u32 %v795, 2147483648
    %v799 = vmul.f32 %v798, 1.442695
    %v800 = vpow.pop %v799
    %v801 = vadd.f32 %v800, 1.0
    %v802 = vrcp.pop %v801
    %v803 = vmul.f32 1.0, %v802
    %v804 = vtanh.pop %v795
    %v805 = vsel %vm78, %v804, %v803
    %v806 = vld [vmem:[#allocation7] sm:$0xf]
    %808 = vrot.lane.b32.xlu0 %v806, 32
    %v809 = vpop.permute.xlu0 %808
    %v811 = vmul.f32 %v805, %v809
    %813 = vrot.lane.b32.xlu0 %v805, 64
    %v814 = vpop.permute.xlu0 %813
    %v816 = vmul.f32 %v805, %v814
    %818 = vrot.lane.b32.xlu0 %v816, 32
    %v819 = vpop.permute.xlu0 %818
    %v821 = vadd.f32 %v811, %v819
    %v822 = vtanh.pop %v821
    %824 = vrot.lane.b32.xlu0 %v822, 64
    %v825 = vpop.permute.xlu0 %824
    %v827 = vmul.f32 %v805, %v825
    %829 = vrot.lane.b32.xlu0 %v821, 96
    %v830 = vpop.permute.xlu0 %829
    %832 = vst.msk [vmem:[#allocation7] sm:$0xf] %vm195, %v830
    %834 = vrot.lane.b32.xlu0 %v827, 32
    %v835 = vpop.permute.xlu0 %834
    %837 = vrot.lane.b32.xlu0 %v827, 64
    %v838 = vpop.permute.xlu0 %837
    %v840 = vsel %vm329, %v835, %v838
    %v841 = vmul.f32 %v840, %v86
    %842 = vst.msk [vmem:[#allocation6] sm:$0xf] %vm193, %v841
    %843 = vst.msk [vmem:[#allocation4 + $0x8] sm:$0x3] %vm333, %v835
    %844 = vst.msk [vmem:[#allocation5 + $0x4] sm:$0xc] %vm335, %v835
    %v845 = vld [vmem:[#allocation6] sm:$0xf]
    %v846 = vld [vmem:[#allocation2 + $0xa] sm:$0x3]
    %v847 = vld [vmem:[#allocation3 + $0x4] sm:$0x3]
    %v849 = vrot.slane %v847, 6
    %v851 = vsel %vm211, %v846, %v849
    %v853 = vsel %vm213, %v845, 0
    %855 = vmatprep.subr.mxu0 0.0
    %856 = vmatpush1.msra.mxu0 %v197
    %857 = vmatprep.subr.mxu0 0.0
    %858 = vmatpush1.msra.mxu0 %v198
    %859 = vmatprep.subr.mxu0 0.0
    %860 = vmatpush1.msra.mxu0 %v199
    %861 = vmatprep.subr.mxu0 0.0
    %862 = vmatpush1.msra.mxu0 %v200
    %863 = vmatprep.subr.mxu0 0.0
    %864 = vmatpush1.msra.mxu0 %v201
    %865 = vmatprep.subr.mxu0 0.0
    %866 = vmatpush1.msra.mxu0 %v202
    %867 = vmatprep.subr.mxu0 0.0
    %868 = vmatpush1.msra.mxu0 %v203
    %869 = vmatprep.subr.mxu0 0.0
    %870 = vmatpush1.msra.mxu0 %v204
    %871 = vmatprep.subr.mxu0 0.0
    %872 = vmatpush1.msra.mxu0 0.0
    %873 = vmatprep.subr.mxu0 0.0
    %874 = vmatpush1.msra.mxu0 0.0
    %875 = vmatprep.subr.mxu0 0.0
    %876 = vmatpush1.msra.mxu0 0.0
    %877 = vmatprep.subr.mxu0 0.0
    %878 = vmatpush1.msra.mxu0 0.0
    %879 = vmatprep.subr.mxu0 0.0
    %880 = vmatpush1.msra.mxu0 0.0
    %881 = vmatprep.subr.mxu0 0.0
    %882 = vmatpush1.msra.mxu0 0.0
    %883 = vmatprep.subr.mxu0 0.0
    %884 = vmatpush1.msra.mxu0 0.0
    %885 = vmatprep.subr.mxu0 0.0
    %886 = vmatpush1.msra.mxu0 0.0
    %887 = vmatprep.subr.mxu0 0.0
    %888 = vmatpush1.msra.mxu0 0.0
    %889 = vmatprep.subr.mxu0 0.0
    %890 = vmatpush1.msra.mxu0 0.0
    %891 = vmatprep.subr.mxu0 0.0
    %892 = vmatpush1.msra.mxu0 0.0
    %893 = vmatprep.subr.mxu0 0.0
    %894 = vmatpush1.msra.mxu0 0.0
    %895 = vmatprep.subr.mxu0 0.0
    %896 = vmatpush1.msra.mxu0 0.0
    %897 = vmatprep.subr.mxu0 0.0
    %898 = vmatpush1.msra.mxu0 0.0
    %899 = vmatprep.subr.mxu0 0.0
    %900 = vmatpush1.msra.mxu0 0.0
    %901 = vmatprep.subr.mxu0 0.0
    %902 = vmatpush1.msra.mxu0 0.0
    %903 = vmatprep.subr.mxu0 0.0
    %904 = vmatpush1.msra.mxu0 0.0
    %905 = vmatprep.subr.mxu0 0.0
    %906 = vmatpush1.msra.mxu0 0.0
    %907 = vmatprep.subr.mxu0 0.0
    %908 = vmatpush1.msra.mxu0 0.0
    %909 = vmatprep.subr.mxu0 0.0
    %910 = vmatpush1.msra.mxu0 0.0
    %911 = vmatprep.subr.mxu0 0.0
    %912 = vmatpush1.msra.mxu0 0.0
    %913 = vmatprep.subr.mxu0 0.0
    %914 = vmatpush1.msra.mxu0 0.0
    %915 = vmatprep.subr.mxu0 0.0
    %916 = vmatpush1.msra.mxu0 0.0
    %917 = vmatprep.subr.mxu0 0.0
    %918 = vmatpush1.msra.mxu0 0.0
    %919 = vmatprep.mubr.f32.mxu0 0.0
    %920 = vmatmul.mubr.f32.gmra.mrb[0].mxu0 %v853
    %v921 = vpop.f32.mrb[0].mxu0
    %v922 = vadd.f32 %v851, %v921
    %v923 = vpop.f32.mrb[0].mxu0
    %924 = vdwg.mxu0
    %v925 = vxor.u32 %v922, 2147483648
    %v926 = vmul.f32 %v925, 1.442695
    %v927 = vpow.pop %v926
    %v928 = vadd.f32 %v927, 1.0
    %v929 = vrcp.pop %v928
    %v930 = vmul.f32 1.0, %v929
    %v931 = vtanh.pop %v922
    %v932 = vsel %vm78, %v931, %v930
    %v933 = vld [vmem:[#allocation7] sm:$0xf]
    %935 = vrot.lane.b32.xlu0 %v933, 32
    %v936 = vpop.permute.xlu0 %935
    %v938 = vmul.f32 %v932, %v936
    %940 = vrot.lane.b32.xlu0 %v932, 64
    %v941 = vpop.permute.xlu0 %940
    %v943 = vmul.f32 %v932, %v941
    %945 = vrot.lane.b32.xlu0 %v943, 32
    %v946 = vpop.permute.xlu0 %945
    %v948 = vadd.f32 %v938, %v946
    %v949 = vtanh.pop %v948
    %951 = vrot.lane.b32.xlu0 %v949, 64
    %v952 = vpop.permute.xlu0 %951
    %v954 = vmul.f32 %v932, %v952
    %956 = vrot.lane.b32.xlu0 %v948, 96
    %v957 = vpop.permute.xlu0 %956
    %959 = vst.msk [vmem:[#allocation7] sm:$0xf] %vm195, %v957
    %961 = vrot.lane.b32.xlu0 %v954, 32
    %v962 = vpop.permute.xlu0 %961
    %964 = vrot.lane.b32.xlu0 %v954, 64
    %v965 = vpop.permute.xlu0 %964
    %v967 = vsel %vm329, %v962, %v965
    %v968 = vmul.f32 %v967, %v86
    %969 = vst.msk [vmem:[#allocation6] sm:$0xf] %vm193, %v968
    %970 = vst.msk [vmem:[#allocation4 + $0xa] sm:$0x3] %vm333, %v962
    %971 = vst.msk [vmem:[#allocation5 + $0x2] sm:$0xc] %vm335, %v962
    %v972 = vld [vmem:[#allocation6] sm:$0xf]
    %v973 = vld [vmem:[#allocation2 + $0xc] sm:$0x3]
    %v974 = vld [vmem:[#allocation3 + $0x2] sm:$0x3]
    %v976 = vrot.slane %v974, 6
    %v978 = vsel %vm211, %v973, %v976
    %v980 = vsel %vm213, %v972, 0
    %982 = vmatprep.subr.mxu0 0.0
    %983 = vmatpush1.msra.mxu0 %v197
    %984 = vmatprep.subr.mxu0 0.0
    %985 = vmatpush1.msra.mxu0 %v198
    %986 = vmatprep.subr.mxu0 0.0
    %987 = vmatpush1.msra.mxu0 %v199
    %988 = vmatprep.subr.mxu0 0.0
    %989 = vmatpush1.msra.mxu0 %v200
    %990 = vmatprep.subr.mxu0 0.0
    %991 = vmatpush1.msra.mxu0 %v201
    %992 = vmatprep.subr.mxu0 0.0
    %993 = vmatpush1.msra.mxu0 %v202
    %994 = vmatprep.subr.mxu0 0.0
    %995 = vmatpush1.msra.mxu0 %v203
    %996 = vmatprep.subr.mxu0 0.0
    %997 = vmatpush1.msra.mxu0 %v204
    %998 = vmatprep.subr.mxu0 0.0
    %999 = vmatpush1.msra.mxu0 0.0
    %1000 = vmatprep.subr.mxu0 0.0
    %1001 = vmatpush1.msra.mxu0 0.0
    %1002 = vmatprep.subr.mxu0 0.0
    %1003 = vmatpush1.msra.mxu0 0.0
    %1004 = vmatprep.subr.mxu0 0.0
    %1005 = vmatpush1.msra.mxu0 0.0
    %1006 = vmatprep.subr.mxu0 0.0
    %1007 = vmatpush1.msra.mxu0 0.0
    %1008 = vmatprep.subr.mxu0 0.0
    %1009 = vmatpush1.msra.mxu0 0.0
    %1010 = vmatprep.subr.mxu0 0.0
    %1011 = vmatpush1.msra.mxu0 0.0
    %1012 = vmatprep.subr.mxu0 0.0
    %1013 = vmatpush1.msra.mxu0 0.0
    %1014 = vmatprep.subr.mxu0 0.0
    %1015 = vmatpush1.msra.mxu0 0.0
    %1016 = vmatprep.subr.mxu0 0.0
    %1017 = vmatpush1.msra.mxu0 0.0
    %1018 = vmatprep.subr.mxu0 0.0
    %1019 = vmatpush1.msra.mxu0 0.0
    %1020 = vmatprep.subr.mxu0 0.0
    %1021 = vmatpush1.msra.mxu0 0.0
    %1022 = vmatprep.subr.mxu0 0.0
    %1023 = vmatpush1.msra.mxu0 0.0
    %1024 = vmatprep.subr.mxu0 0.0
    %1025 = vmatpush1.msra.mxu0 0.0
    %1026 = vmatprep.subr.mxu0 0.0
    %1027 = vmatpush1.msra.mxu0 0.0
    %1028 = vmatprep.subr.mxu0 0.0
    %1029 = vmatpush1.msra.mxu0 0.0
    %1030 = vmatprep.subr.mxu0 0.0
    %1031 = vmatpush1.msra.mxu0 0.0
    %1032 = vmatprep.subr.mxu0 0.0
    %1033 = vmatpush1.msra.mxu0 0.0
    %1034 = vmatprep.subr.mxu0 0.0
    %1035 = vmatpush1.msra.mxu0 0.0
    %1036 = vmatprep.subr.mxu0 0.0
    %1037 = vmatpush1.msra.mxu0 0.0
    %1038 = vmatprep.subr.mxu0 0.0
    %1039 = vmatpush1.msra.mxu0 0.0
    %1040 = vmatprep.subr.mxu0 0.0
    %1041 = vmatpush1.msra.mxu0 0.0
    %1042 = vmatprep.subr.mxu0 0.0
    %1043 = vmatpush1.msra.mxu0 0.0
    %1044 = vmatprep.subr.mxu0 0.0
    %1045 = vmatpush1.msra.mxu0 0.0
    %1046 = vmatprep.mubr.f32.mxu0 0.0
    %1047 = vmatmul.mubr.f32.gmra.mrb[0].mxu0 %v980
    %v1048 = vpop.f32.mrb[0].mxu0
    %v1049 = vadd.f32 %v978, %v1048
    %v1050 = vpop.f32.mrb[0].mxu0
    %1051 = vdwg.mxu0
    %v1052 = vxor.u32 %v1049, 2147483648
    %v1053 = vmul.f32 %v1052, 1.442695
    %v1054 = vpow.pop %v1053
    %v1055 = vadd.f32 %v1054, 1.0
    %v1056 = vrcp.pop %v1055
    %v1057 = vmul.f32 1.0, %v1056
    %v1058 = vtanh.pop %v1049
    %v1059 = vsel %vm78, %v1058, %v1057
    %v1060 = vld [vmem:[#allocation7] sm:$0xf]
    %1062 = vrot.lane.b32.xlu0 %v1060, 32
    %v1063 = vpop.permute.xlu0 %1062
    %v1065 = vmul.f32 %v1059, %v1063
    %1067 = vrot.lane.b32.xlu0 %v1059, 64
    %v1068 = vpop.permute.xlu0 %1067
    %v1070 = vmul.f32 %v1059, %v1068
    %1072 = vrot.lane.b32.xlu0 %v1070, 32
    %v1073 = vpop.permute.xlu0 %1072
    %v1075 = vadd.f32 %v1065, %v1073
    %v1076 = vtanh.pop %v1075
    %1078 = vrot.lane.b32.xlu0 %v1076, 64
    %v1079 = vpop.permute.xlu0 %1078
    %v1081 = vmul.f32 %v1059, %v1079
    %1083 = vrot.lane.b32.xlu0 %v1075, 96
    %v1084 = vpop.permute.xlu0 %1083
    %1086 = vst.msk [vmem:[#allocation7] sm:$0xf] %vm195, %v1084
    %1088 = vrot.lane.b32.xlu0 %v1081, 32
    %v1089 = vpop.permute.xlu0 %1088
    %1091 = vrot.lane.b32.xlu0 %v1081, 64
    %v1092 = vpop.permute.xlu0 %1091
    %v1094 = vsel %vm329, %v1089, %v1092
    %v1095 = vmul.f32 %v1094, %v86
    %1096 = vst.msk [vmem:[#allocation6] sm:$0xf] %vm193, %v1095
    %1097 = vst.msk [vmem:[#allocation4 + $0xc] sm:$0x3] %vm333, %v1089
    %1098 = vst.msk [vmem:[#allocation5] sm:$0xc] %vm335, %v1089
    %v1099 = vld [vmem:[#allocation6] sm:$0xf]
    %v1100 = vld [vmem:[#allocation2 + $0xe] sm:$0x3]
    %v1101 = vld [vmem:[#allocation3] sm:$0x3]
    %v1103 = vrot.slane %v1101, 6
    %v1105 = vsel %vm211, %v1100, %v1103
    %v1107 = vsel %vm213, %v1099, 0
    %1109 = vmatprep.subr.mxu0 0.0
    %1110 = vmatpush1.msra.mxu0 %v197
    %1111 = vmatprep.subr.mxu0 0.0
    %1112 = vmatpush1.msra.mxu0 %v198
    %1113 = vmatprep.subr.mxu0 0.0
    %1114 = vmatpush1.msra.mxu0 %v199
    %1115 = vmatprep.subr.mxu0 0.0
    %1116 = vmatpush1.msra.mxu0 %v200
    %1117 = vmatprep.subr.mxu0 0.0
    %1118 = vmatpush1.msra.mxu0 %v201
    %1119 = vmatprep.subr.mxu0 0.0
    %1120 = vmatpush1.msra.mxu0 %v202
    %1121 = vmatprep.subr.mxu0 0.0
    %1122 = vmatpush1.msra.mxu0 %v203
    %1123 = vmatprep.subr.mxu0 0.0
    %1124 = vmatpush1.msra.mxu0 %v204
    %1125 = vmatprep.subr.mxu0 0.0
    %1126 = vmatpush1.msra.mxu0 0.0
    %1127 = vmatprep.subr.mxu0 0.0
    %1128 = vmatpush1.msra.mxu0 0.0
    %1129 = vmatprep.subr.mxu0 0.0
    %1130 = vmatpush1.msra.mxu0 0.0
    %1131 = vmatprep.subr.mxu0 0.0
    %1132 = vmatpush1.msra.mxu0 0.0
    %1133 = vmatprep.subr.mxu0 0.0
    %1134 = vmatpush1.msra.mxu0 0.0
    %1135 = vmatprep.subr.mxu0 0.0
    %1136 = vmatpush1.msra.mxu0 0.0
    %1137 = vmatprep.subr.mxu0 0.0
    %1138 = vmatpush1.msra.mxu0 0.0
    %1139 = vmatprep.subr.mxu0 0.0
    %1140 = vmatpush1.msra.mxu0 0.0
    %1141 = vmatprep.subr.mxu0 0.0
    %1142 = vmatpush1.msra.mxu0 0.0
    %1143 = vmatprep.subr.mxu0 0.0
    %1144 = vmatpush1.msra.mxu0 0.0
    %1145 = vmatprep.subr.mxu0 0.0
    %1146 = vmatpush1.msra.mxu0 0.0
    %1147 = vmatprep.subr.mxu0 0.0
    %1148 = vmatpush1.msra.mxu0 0.0
    %1149 = vmatprep.subr.mxu0 0.0
    %1150 = vmatpush1.msra.mxu0 0.0
    %1151 = vmatprep.subr.mxu0 0.0
    %1152 = vmatpush1.msra.mxu0 0.0
    %1153 = vmatprep.subr.mxu0 0.0
    %1154 = vmatpush1.msra.mxu0 0.0
    %1155 = vmatprep.subr.mxu0 0.0
    %1156 = vmatpush1.msra.mxu0 0.0
    %1157 = vmatprep.subr.mxu0 0.0
    %1158 = vmatpush1.msra.mxu0 0.0
    %1159 = vmatprep.subr.mxu0 0.0
    %1160 = vmatpush1.msra.mxu0 0.0
    %1161 = vmatprep.subr.mxu0 0.0
    %1162 = vmatpush1.msra.mxu0 0.0
    %1163 = vmatprep.subr.mxu0 0.0
    %1164 = vmatpush1.msra.mxu0 0.0
    %1165 = vmatprep.subr.mxu0 0.0
    %1166 = vmatpush1.msra.mxu0 0.0
    %1167 = vmatprep.subr.mxu0 0.0
    %1168 = vmatpush1.msra.mxu0 0.0
    %1169 = vmatprep.subr.mxu0 0.0
    %1170 = vmatpush1.msra.mxu0 0.0
    %1171 = vmatprep.subr.mxu0 0.0
    %1172 = vmatpush1.msra.mxu0 0.0
    %1173 = vmatprep.mubr.f32.mxu0 0.0
    %1174 = vmatmul.mubr.f32.gmra.mrb[0].mxu0 %v1107
    %v1175 = vpop.f32.mrb[0].mxu0
    %v1176 = vadd.f32 %v1105, %v1175
    %v1177 = vpop.f32.mrb[0].mxu0
    %1178 = vdwg.mxu0
    %v1179 = vxor.u32 %v1176, 2147483648
    %v1180 = vmul.f32 %v1179, 1.442695
    %v1181 = vpow.pop %v1180
    %v1182 = vadd.f32 %v1181, 1.0
    %v1183 = vrcp.pop %v1182
    %v1184 = vmul.f32 1.0, %v1183
    %v1185 = vtanh.pop %v1176
    %v1186 = vsel %vm78, %v1185, %v1184
    %v1187 = vld [vmem:[#allocation7] sm:$0xf]
    %1189 = vrot.lane.b32.xlu0 %v1187, 32
    %v1190 = vpop.permute.xlu0 %1189
    %v1192 = vmul.f32 %v1186, %v1190
    %1194 = vrot.lane.b32.xlu0 %v1186, 64
    %v1195 = vpop.permute.xlu0 %1194
    %v1197 = vmul.f32 %v1186, %v1195
    %1199 = vrot.lane.b32.xlu0 %v1197, 32
    %v1200 = vpop.permute.xlu0 %1199
    %v1202 = vadd.f32 %v1192, %v1200
    %v1203 = vtanh.pop %v1202
    %1205 = vrot.lane.b32.xlu0 %v1203, 64
    %v1206 = vpop.permute.xlu0 %1205
    %v1208 = vmul.f32 %v1186, %v1206
    %1210 = vrot.lane.b32.xlu0 %v1202, 96
    %v1211 = vpop.permute.xlu0 %1210
    %1213 = vst.msk [vmem:[#allocation7] sm:$0xf] %vm195, %v1211
    %1215 = vrot.lane.b32.xlu0 %v1208, 32
    %v1216 = vpop.permute.xlu0 %1215
    %1218 = vrot.lane.b32.xlu0 %v1208, 64
    %v1219 = vpop.permute.xlu0 %1218
    %v1221 = vsel %vm329, %v1216, %v1219
    %v1222 = vmul.f32 %v1221, %v86
    %1223 = vst.msk [vmem:[#allocation6] sm:$0xf] %vm193, %v1222
    %1224 = vst.msk [vmem:[#allocation4 + $0xe] sm:$0x3] %vm333, %v1216
    %1225 = vst.msk [vmem:[#allocation5 - $0x2] sm:$0xc] %vm335, %v1216
    %v1226 = vld [vmem:[#allocation4] sm:$0xff]
    %v1227 = vld [vmem:[#allocation4 + $0x8] sm:$0xff]
    %v1228 = vld [vmem:[#allocation11] sm:$0xff]
    %v1229 = vld [vmem:[#allocation11 + $0x8] sm:$0xff]
    %v1230 = vld [vmem:[#allocation11 + $0x10] sm:$0xff]
    %v1231 = vld [vmem:[#allocation11 + $0x18] sm:$0xff]
    %v1232 = vld [vmem:[#allocation11 + $0x20] sm:$0xff]
    %v1233 = vld [vmem:[#allocation11 + $0x28] sm:$0xff]
    %v1234 = vld [vmem:[#allocation11 + $0x30] sm:$0xff]
    %v1235 = vld [vmem:[#allocation11 + $0x38] sm:$0xff]
    %v1236 = vld [vmem:[%s6] sm:$0x3]
    %v1238 = vlaneseq
    %v1239 = vshrl.u32 %v1238, 7
    %v1240 = vsub.s32 0, %v1239
    %v1241 = vrot.slane %v1236, %v1240
    %v1242 = vlaneseq
    %v1243 = vshrl.u32 %v1242, 7
    %v1244 = vsub.s32 1, %v1243
    %v1245 = vrot.slane %v1236, %v1244
    %v1249 = vsel %vm329, %v1226, 0
    %v1252 = vsel %vm329, %v1227, 0
    %1254 = vmatprep.subr.mxu0 %v1229
    %1255 = vmatpush1.msra.mxu0 %v1228
    %1256 = vmatprep.subr.mxu0 %v1231
    %1257 = vmatpush1.msra.mxu0 %v1230
    %1258 = vmatprep.subr.mxu0 %v1233
    %1259 = vmatpush1.msra.mxu0 %v1232
    %1260 = vmatprep.subr.mxu0 %v1235
    %1261 = vmatpush1.msra.mxu0 %v1234
    %1262 = vmatprep.subr.mxu0 0.0
    %1263 = vmatpush1.msra.mxu0 0.0
    %1264 = vmatprep.subr.mxu0 0.0
    %1265 = vmatpush1.msra.mxu0 0.0
    %1266 = vmatprep.subr.mxu0 0.0
    %1267 = vmatpush1.msra.mxu0 0.0
    %1268 = vmatprep.subr.mxu0 0.0
    %1269 = vmatpush1.msra.mxu0 0.0
    %1270 = vmatprep.subr.mxu0 0.0
    %1271 = vmatpush1.msra.mxu0 0.0
    %1272 = vmatprep.subr.mxu0 0.0
    %1273 = vmatpush1.msra.mxu0 0.0
    %1274 = vmatprep.subr.mxu0 0.0
    %1275 = vmatpush1.msra.mxu0 0.0
    %1276 = vmatprep.subr.mxu0 0.0
    %1277 = vmatpush1.msra.mxu0 0.0
    %1278 = vmatprep.subr.mxu0 0.0
    %1279 = vmatpush1.msra.mxu0 0.0
    %1280 = vmatprep.subr.mxu0 0.0
    %1281 = vmatpush1.msra.mxu0 0.0
    %1282 = vmatprep.subr.mxu0 0.0
    %1283 = vmatpush1.msra.mxu0 0.0
    %1284 = vmatprep.subr.mxu0 0.0
    %1285 = vmatpush1.msra.mxu0 0.0
    %1286 = vmatprep.subr.mxu0 0.0
    %1287 = vmatpush1.msra.mxu0 0.0
    %1288 = vmatprep.subr.mxu0 0.0
    %1289 = vmatpush1.msra.mxu0 0.0
    %1290 = vmatprep.subr.mxu0 0.0
    %1291 = vmatpush1.msra.mxu0 0.0
    %1292 = vmatprep.subr.mxu0 0.0
    %1293 = vmatpush1.msra.mxu0 0.0
    %1294 = vmatprep.subr.mxu0 0.0
    %1295 = vmatpush1.msra.mxu0 0.0
    %1296 = vmatprep.subr.mxu0 0.0
    %1297 = vmatpush1.msra.mxu0 0.0
    %1298 = vmatprep.subr.mxu0 0.0
    %1299 = vmatpush1.msra.mxu0 0.0
    %1300 = vmatprep.subr.mxu0 0.0
    %1301 = vmatpush1.msra.mxu0 0.0
    %1302 = vmatprep.subr.mxu0 0.0
    %1303 = vmatpush1.msra.mxu0 0.0
    %1304 = vmatprep.subr.mxu0 0.0
    %1305 = vmatpush1.msra.mxu0 0.0
    %1306 = vmatprep.subr.mxu0 0.0
    %1307 = vmatpush1.msra.mxu0 0.0
    %1308 = vmatprep.subr.mxu0 0.0
    %1309 = vmatpush1.msra.mxu0 0.0
    %1310 = vmatprep.subr.mxu0 0.0
    %1311 = vmatpush1.msra.mxu0 0.0
    %1312 = vmatprep.subr.mxu0 0.0
    %1313 = vmatpush1.msra.mxu0 0.0
    %1314 = vmatprep.subr.mxu0 0.0
    %1315 = vmatpush1.msra.mxu0 0.0
    %1316 = vmatprep.subr.mxu0 0.0
    %1317 = vmatpush1.msra.mxu0 0.0
    %1318 = vmatprep.mubr.f32.mxu0 0.0
    %1319 = vmatmul.mubr.f32.gmra.mrb[0].mxu0 %v1249
    %v1320 = vpop.f32.mrb[0].mxu0
    %v1321 = vadd.f32 %v1241, %v1320
    %v1322 = vpop.f32.mrb[0].mxu0
    %v1323 = vadd.f32 %v1245, %v1322
    %1324 = vmatprep.mubr.f32.mxu0 0.0
    %1325 = vmatmul.mubr.f32.gmra.mrb[0].mxu0 %v1252
    %v1326 = vpop.f32.mrb[0].mxu0
    %v1327 = vadd.f32 %v1241, %v1326
    %v1328 = vpop.f32.mrb[0].mxu0
    %v1329 = vadd.f32 %v1245, %v1328
    %1330 = vdwg.mxu0
    %v1331 = vld [vmem:[#allocation5] sm:$0xff]
    %v1332 = vld [vmem:[#allocation5 + $0x8] sm:$0xff]
    %v1333 = vld [vmem:[#allocation11 + $0x40] sm:$0xff]
    %v1334 = vld [vmem:[#allocation11 + $0x48] sm:$0xff]
    %v1335 = vld [vmem:[#allocation11 + $0x50] sm:$0xff]
    %v1336 = vld [vmem:[#allocation11 + $0x58] sm:$0xff]
    %v1337 = vld [vmem:[#allocation11 + $0x60] sm:$0xff]
    %v1338 = vld [vmem:[#allocation11 + $0x68] sm:$0xff]
    %v1339 = vld [vmem:[#allocation11 + $0x70] sm:$0xff]
    %v1340 = vld [vmem:[#allocation11 + $0x78] sm:$0xff]
    %v1342 = vsel %vm329, %v1331, 0
    %v1345 = vsel %vm329, %v1332, 0
    %1347 = vmatprep.subr.mxu0 %v1334
    %1348 = vmatpush1.msra.mxu0 %v1333
    %1349 = vmatprep.subr.mxu0 %v1336
    %1350 = vmatpush1.msra.mxu0 %v1335
    %1351 = vmatprep.subr.mxu0 %v1338
    %1352 = vmatpush1.msra.mxu0 %v1337
    %1353 = vmatprep.subr.mxu0 %v1340
    %1354 = vmatpush1.msra.mxu0 %v1339
    %1355 = vmatprep.subr.mxu0 0.0
    %1356 = vmatpush1.msra.mxu0 0.0
    %1357 = vmatprep.subr.mxu0 0.0
    %1358 = vmatpush1.msra.mxu0 0.0
    %1359 = vmatprep.subr.mxu0 0.0
    %1360 = vmatpush1.msra.mxu0 0.0
    %1361 = vmatprep.subr.mxu0 0.0
    %1362 = vmatpush1.msra.mxu0 0.0
    %1363 = vmatprep.subr.mxu0 0.0
    %1364 = vmatpush1.msra.mxu0 0.0
    %1365 = vmatprep.subr.mxu0 0.0
    %1366 = vmatpush1.msra.mxu0 0.0
    %1367 = vmatprep.subr.mxu0 0.0
    %1368 = vmatpush1.msra.mxu0 0.0
    %1369 = vmatprep.subr.mxu0 0.0
    %1370 = vmatpush1.msra.mxu0 0.0
    %1371 = vmatprep.subr.mxu0 0.0
    %1372 = vmatpush1.msra.mxu0 0.0
    %1373 = vmatprep.subr.mxu0 0.0
    %1374 = vmatpush1.msra.mxu0 0.0
    %1375 = vmatprep.subr.mxu0 0.0
    %1376 = vmatpush1.msra.mxu0 0.0
    %1377 = vmatprep.subr.mxu0 0.0
    %1378 = vmatpush1.msra.mxu0 0.0
    %1379 = vmatprep.subr.mxu0 0.0
    %1380 = vmatpush1.msra.mxu0 0.0
    %1381 = vmatprep.subr.mxu0 0.0
    %1382 = vmatpush1.msra.mxu0 0.0
    %1383 = vmatprep.subr.mxu0 0.0
    %1384 = vmatpush1.msra.mxu0 0.0
    %1385 = vmatprep.subr.mxu0 0.0
    %1386 = vmatpush1.msra.mxu0 0.0
    %1387 = vmatprep.subr.mxu0 0.0
    %1388 = vmatpush1.msra.mxu0 0.0
    %1389 = vmatprep.subr.mxu0 0.0
    %1390 = vmatpush1.msra.mxu0 0.0
    %1391 = vmatprep.subr.mxu0 0.0
    %1392 = vmatpush1.msra.mxu0 0.0
    %1393 = vmatprep.subr.mxu0 0.0
    %1394 = vmatpush1.msra.mxu0 0.0
    %1395 = vmatprep.subr.mxu0 0.0
    %1396 = vmatpush1.msra.mxu0 0.0
    %1397 = vmatprep.subr.mxu0 0.0
    %1398 = vmatpush1.msra.mxu0 0.0
    %1399 = vmatprep.subr.mxu0 0.0
    %1400 = vmatpush1.msra.mxu0 0.0
    %1401 = vmatprep.subr.mxu0 0.0
    %1402 = vmatpush1.msra.mxu0 0.0
    %1403 = vmatprep.subr.mxu0 0.0
    %1404 = vmatpush1.msra.mxu0 0.0
    %1405 = vmatprep.subr.mxu0 0.0
    %1406 = vmatpush1.msra.mxu0 0.0
    %1407 = vmatprep.subr.mxu0 0.0
    %1408 = vmatpush1.msra.mxu0 0.0
    %1409 = vmatprep.subr.mxu0 0.0
    %1410 = vmatpush1.msra.mxu0 0.0
    %1411 = vmatprep.mubr.f32.mxu0 0.0
    %1412 = vmatmul.mubr.f32.gmra.mrb[0].mxu0 %v1342
    %v1413 = vpop.f32.mrb[0].mxu0
    %v1414 = vadd.f32 0.0, %v1413
    %v1415 = vpop.f32.mrb[0].mxu0
    %v1416 = vadd.f32 0.0, %v1415
    %1417 = vmatprep.mubr.f32.mxu0 0.0
    %1418 = vmatmul.mubr.f32.gmra.mrb[0].mxu0 %v1345
    %v1419 = vpop.f32.mrb[0].mxu0
    %v1420 = vadd.f32 0.0, %v1419
    %v1421 = vpop.f32.mrb[0].mxu0
    %v1422 = vadd.f32 0.0, %v1421
    %1423 = vdwg.mxu0
    %v1424 = vadd.f32 %v1321, %v1414
    %v1425 = vadd.f32 %v1323, %v1416
    %v1426 = vadd.f32 %v1327, %v1420
    %v1427 = vadd.f32 %v1329, %v1422
    %1428 = vst [vmem:[#allocation2] sm:$0xff] %v1424
    %1429 = vst [vmem:[#allocation2 + $0x8] sm:$0xff] %v1426
    %1430 = vst [vmem:[#allocation3] sm:$0xff] %v1425
    %1431 = vst [vmem:[#allocation3 + $0x8] sm:$0xff] %v1427
    %1432 = vst.msk [vmem:[#allocation6] sm:$0xf] %vm193, 0.0
    %1433 = vst.msk [vmem:[#allocation7] sm:$0xf] %vm195, 0.0
    %v1434 = vld [vmem:[#allocation13] sm:$0xff]
    %v1435 = vld [vmem:[#allocation13 + $0x8] sm:$0xff]
    %v1436 = vld [vmem:[#allocation13 + $0x10] sm:$0xff]
    %v1437 = vld [vmem:[#allocation13 + $0x18] sm:$0xff]
    %v1438 = vld [vmem:[#allocation13 + $0x20] sm:$0xff]
    %v1439 = vld [vmem:[#allocation13 + $0x28] sm:$0xff]
    %v1440 = vld [vmem:[#allocation13 + $0x30] sm:$0xff]
    %v1441 = vld [vmem:[#allocation13 + $0x38] sm:$0xff]
    %v1442 = vld [vmem:[#allocation6] sm:$0xf]
    %v1443 = vld [vmem:[#allocation2] sm:$0x3]
    %v1444 = vld [vmem:[#allocation3 + $0xe] sm:$0x3]
    %v1446 = vrot.slane %v1444, 6
    %v1448 = vsel %vm211, %v1443, %v1446
    %v1450 = vsel %vm213, %v1442, 0
    %1452 = vmatprep.subr.mxu0 0.0
    %1453 = vmatpush1.msra.mxu0 %v1434
    %1454 = vmatprep.subr.mxu0 0.0
    %1455 = vmatpush1.msra.mxu0 %v1435
    %1456 = vmatprep.subr.mxu0 0.0
    %1457 = vmatpush1.msra.mxu0 %v1436
    %1458 = vmatprep.subr.mxu0 0.0
    %1459 = vmatpush1.msra.mxu0 %v1437
    %1460 = vmatprep.subr.mxu0 0.0
    %1461 = vmatpush1.msra.mxu0 %v1438
    %1462 = vmatprep.subr.mxu0 0.0
    %1463 = vmatpush1.msra.mxu0 %v1439
    %1464 = vmatprep.subr.mxu0 0.0
    %1465 = vmatpush1.msra.mxu0 %v1440
    %1466 = vmatprep.subr.mxu0 0.0
    %1467 = vmatpush1.msra.mxu0 %v1441
    %1468 = vmatprep.subr.mxu0 0.0
    %1469 = vmatpush1.msra.mxu0 0.0
    %1470 = vmatprep.subr.mxu0 0.0
    %1471 = vmatpush1.msra.mxu0 0.0
    %1472 = vmatprep.subr.mxu0 0.0
    %1473 = vmatpush1.msra.mxu0 0.0
    %1474 = vmatprep.subr.mxu0 0.0
    %1475 = vmatpush1.msra.mxu0 0.0
    %1476 = vmatprep.subr.mxu0 0.0
    %1477 = vmatpush1.msra.mxu0 0.0
    %1478 = vmatprep.subr.mxu0 0.0
    %1479 = vmatpush1.msra.mxu0 0.0
    %1480 = vmatprep.subr.mxu0 0.0
    %1481 = vmatpush1.msra.mxu0 0.0
    %1482 = vmatprep.subr.mxu0 0.0
    %1483 = vmatpush1.msra.mxu0 0.0
    %1484 = vmatprep.subr.mxu0 0.0
    %1485 = vmatpush1.msra.mxu0 0.0
    %1486 = vmatprep.subr.mxu0 0.0
    %1487 = vmatpush1.msra.mxu0 0.0
    %1488 = vmatprep.subr.mxu0 0.0
    %1489 = vmatpush1.msra.mxu0 0.0
    %1490 = vmatprep.subr.mxu0 0.0
    %1491 = vmatpush1.msra.mxu0 0.0
    %1492 = vmatprep.subr.mxu0 0.0
    %1493 = vmatpush1.msra.mxu0 0.0
    %1494 = vmatprep.subr.mxu0 0.0
    %1495 = vmatpush1.msra.mxu0 0.0
    %1496 = vmatprep.subr.mxu0 0.0
    %1497 = vmatpush1.msra.mxu0 0.0
    %1498 = vmatprep.subr.mxu0 0.0
    %1499 = vmatpush1.msra.mxu0 0.0
    %1500 = vmatprep.subr.mxu0 0.0
    %1501 = vmatpush1.msra.mxu0 0.0
    %1502 = vmatprep.subr.mxu0 0.0
    %1503 = vmatpush1.msra.mxu0 0.0
    %1504 = vmatprep.subr.mxu0 0.0
    %1505 = vmatpush1.msra.mxu0 0.0
    %1506 = vmatprep.subr.mxu0 0.0
    %1507 = vmatpush1.msra.mxu0 0.0
    %1508 = vmatprep.subr.mxu0 0.0
    %1509 = vmatpush1.msra.mxu0 0.0
    %1510 = vmatprep.subr.mxu0 0.0
    %1511 = vmatpush1.msra.mxu0 0.0
    %1512 = vmatprep.subr.mxu0 0.0
    %1513 = vmatpush1.msra.mxu0 0.0
    %1514 = vmatprep.subr.mxu0 0.0
    %1515 = vmatpush1.msra.mxu0 0.0
    %1516 = vmatprep.mubr.f32.mxu0 0.0
    %1517 = vmatmul.mubr.f32.gmra.mrb[0].mxu0 %v1450
    %v1518 = vpop.f32.mrb[0].mxu0
    %v1519 = vadd.f32 %v1448, %v1518
    %v1520 = vpop.f32.mrb[0].mxu0
    %1521 = vdwg.mxu0
    %v1522 = vxor.u32 %v1519, 2147483648
    %v1523 = vmul.f32 %v1522, 1.442695
    %v1524 = vpow.pop %v1523
    %v1525 = vadd.f32 %v1524, 1.0
    %v1526 = vrcp.pop %v1525
    %v1527 = vmul.f32 1.0, %v1526
    %v1528 = vtanh.pop %v1519
    %v1529 = vsel %vm78, %v1528, %v1527
    %v1530 = vld [vmem:[#allocation7] sm:$0xf]
    %1532 = vrot.lane.b32.xlu0 %v1530, 32
    %v1533 = vpop.permute.xlu0 %1532
    %v1535 = vmul.f32 %v1529, %v1533
    %1537 = vrot.lane.b32.xlu0 %v1529, 64
    %v1538 = vpop.permute.xlu0 %1537
    %v1540 = vmul.f32 %v1529, %v1538
    %1542 = vrot.lane.b32.xlu0 %v1540, 32
    %v1543 = vpop.permute.xlu0 %1542
    %v1545 = vadd.f32 %v1535, %v1543
    %v1546 = vtanh.pop %v1545
    %1548 = vrot.lane.b32.xlu0 %v1546, 64
    %v1549 = vpop.permute.xlu0 %1548
    %v1551 = vmul.f32 %v1529, %v1549
    %1553 = vrot.lane.b32.xlu0 %v1545, 96
    %v1554 = vpop.permute.xlu0 %1553
    %1556 = vst.msk [vmem:[#allocation7] sm:$0xf] %vm195, %v1554
    %1558 = vrot.lane.b32.xlu0 %v1551, 32
    %v1559 = vpop.permute.xlu0 %1558
    %1561 = vrot.lane.b32.xlu0 %v1551, 64
    %v1562 = vpop.permute.xlu0 %1561
    %v1564 = vsel %vm329, %v1559, %v1562
    %v1565 = vmul.f32 %v1564, %v86
    %1566 = vst.msk [vmem:[#allocation6] sm:$0xf] %vm193, %v1565
    %1567 = vst.msk [vmem:[#allocation4] sm:$0x3] %vm333, %v1559
    %1568 = vst.msk [vmem:[#allocation5 + $0xc] sm:$0xc] %vm335, %v1559
    %v1569 = vld [vmem:[#allocation6] sm:$0xf]
    %v1570 = vld [vmem:[#allocation2 + $0x2] sm:$0x3]
    %v1571 = vld [vmem:[#allocation3 + $0xc] sm:$0x3]
    %v1573 = vrot.slane %v1571, 6
    %v1575 = vsel %vm211, %v1570, %v1573
    %v1577 = vsel %vm213, %v1569, 0
    %1579 = vmatprep.subr.mxu0 0.0
    %1580 = vmatpush1.msra.mxu0 %v1434
    %1581 = vmatprep.subr.mxu0 0.0
    %1582 = vmatpush1.msra.mxu0 %v1435
    %1583 = vmatprep.subr.mxu0 0.0
    %1584 = vmatpush1.msra.mxu0 %v1436
    %1585 = vmatprep.subr.mxu0 0.0
    %1586 = vmatpush1.msra.mxu0 %v1437
    %1587 = vmatprep.subr.mxu0 0.0
    %1588 = vmatpush1.msra.mxu0 %v1438
    %1589 = vmatprep.subr.mxu0 0.0
    %1590 = vmatpush1.msra.mxu0 %v1439
    %1591 = vmatprep.subr.mxu0 0.0
    %1592 = vmatpush1.msra.mxu0 %v1440
    %1593 = vmatprep.subr.mxu0 0.0
    %1594 = vmatpush1.msra.mxu0 %v1441
    %1595 = vmatprep.subr.mxu0 0.0
    %1596 = vmatpush1.msra.mxu0 0.0
    %1597 = vmatprep.subr.mxu0 0.0
    %1598 = vmatpush1.msra.mxu0 0.0
    %1599 = vmatprep.subr.mxu0 0.0
    %1600 = vmatpush1.msra.mxu0 0.0
    %1601 = vmatprep.subr.mxu0 0.0
    %1602 = vmatpush1.msra.mxu0 0.0
    %1603 = vmatprep.subr.mxu0 0.0
    %1604 = vmatpush1.msra.mxu0 0.0
    %1605 = vmatprep.subr.mxu0 0.0
    %1606 = vmatpush1.msra.mxu0 0.0
    %1607 = vmatprep.subr.mxu0 0.0
    %1608 = vmatpush1.msra.mxu0 0.0
    %1609 = vmatprep.subr.mxu0 0.0
    %1610 = vmatpush1.msra.mxu0 0.0
    %1611 = vmatprep.subr.mxu0 0.0
    %1612 = vmatpush1.msra.mxu0 0.0
    %1613 = vmatprep.subr.mxu0 0.0
    %1614 = vmatpush1.msra.mxu0 0.0
    %1615 = vmatprep.subr.mxu0 0.0
    %1616 = vmatpush1.msra.mxu0 0.0
    %1617 = vmatprep.subr.mxu0 0.0
    %1618 = vmatpush1.msra.mxu0 0.0
    %1619 = vmatprep.subr.mxu0 0.0
    %1620 = vmatpush1.msra.mxu0 0.0
    %1621 = vmatprep.subr.mxu0 0.0
    %1622 = vmatpush1.msra.mxu0 0.0
    %1623 = vmatprep.subr.mxu0 0.0
    %1624 = vmatpush1.msra.mxu0 0.0
    %1625 = vmatprep.subr.mxu0 0.0
    %1626 = vmatpush1.msra.mxu0 0.0
    %1627 = vmatprep.subr.mxu0 0.0
    %1628 = vmatpush1.msra.mxu0 0.0
    %1629 = vmatprep.subr.mxu0 0.0
    %1630 = vmatpush1.msra.mxu0 0.0
    %1631 = vmatprep.subr.mxu0 0.0
    %1632 = vmatpush1.msra.mxu0 0.0
    %1633 = vmatprep.subr.mxu0 0.0
    %1634 = vmatpush1.msra.mxu0 0.0
    %1635 = vmatprep.subr.mxu0 0.0
    %1636 = vmatpush1.msra.mxu0 0.0
    %1637 = vmatprep.subr.mxu0 0.0
    %1638 = vmatpush1.msra.mxu0 0.0
    %1639 = vmatprep.subr.mxu0 0.0
    %1640 = vmatpush1.msra.mxu0 0.0
    %1641 = vmatprep.subr.mxu0 0.0
    %1642 = vmatpush1.msra.mxu0 0.0
    %1643 = vmatprep.mubr.f32.mxu0 0.0
    %1644 = vmatmul.mubr.f32.gmra.mrb[0].mxu0 %v1577
    %v1645 = vpop.f32.mrb[0].mxu0
    %v1646 = vadd.f32 %v1575, %v1645
    %v1647 = vpop.f32.mrb[0].mxu0
    %1648 = vdwg.mxu0
    %v1649 = vxor.u32 %v1646, 2147483648
    %v1650 = vmul.f32 %v1649, 1.442695
    %v1651 = vpow.pop %v1650
    %v1652 = vadd.f32 %v1651, 1.0
    %v1653 = vrcp.pop %v1652
    %v1654 = vmul.f32 1.0, %v1653
    %v1655 = vtanh.pop %v1646
    %v1656 = vsel %vm78, %v1655, %v1654
    %v1657 = vld [vmem:[#allocation7] sm:$0xf]
    %1659 = vrot.lane.b32.xlu0 %v1657, 32
    %v1660 = vpop.permute.xlu0 %1659
    %v1662 = vmul.f32 %v1656, %v1660
    %1664 = vrot.lane.b32.xlu0 %v1656, 64
    %v1665 = vpop.permute.xlu0 %1664
    %v1667 = vmul.f32 %v1656, %v1665
    %1669 = vrot.lane.b32.xlu0 %v1667, 32
    %v1670 = vpop.permute.xlu0 %1669
    %v1672 = vadd.f32 %v1662, %v1670
    %v1673 = vtanh.pop %v1672
    %1675 = vrot.lane.b32.xlu0 %v1673, 64
    %v1676 = vpop.permute.xlu0 %1675
    %v1678 = vmul.f32 %v1656, %v1676
    %1680 = vrot.lane.b32.xlu0 %v1672, 96
    %v1681 = vpop.permute.xlu0 %1680
    %1683 = vst.msk [vmem:[#allocation7] sm:$0xf] %vm195, %v1681
    %1685 = vrot.lane.b32.xlu0 %v1678, 32
    %v1686 = vpop.permute.xlu0 %1685
    %1688 = vrot.lane.b32.xlu0 %v1678, 64
    %v1689 = vpop.permute.xlu0 %1688
    %v1691 = vsel %vm329, %v1686, %v1689
    %v1692 = vmul.f32 %v1691, %v86
    %1693 = vst.msk [vmem:[#allocation6] sm:$0xf] %vm193, %v1692
    %1694 = vst.msk [vmem:[#allocation4 + $0x2] sm:$0x3] %vm333, %v1686
    %1695 = vst.msk [vmem:[#allocation5 + $0xa] sm:$0xc] %vm335, %v1686
    %v1696 = vld [vmem:[#allocation6] sm:$0xf]
    %v1697 = vld [vmem:[#allocation2 + $0x4] sm:$0x3]
    %v1698 = vld [vmem:[#allocation3 + $0xa] sm:$0x3]
    %v1700 = vrot.slane %v1698, 6
    %v1702 = vsel %vm211, %v1697, %v1700
    %v1704 = vsel %vm213, %v1696, 0
    %1706 = vmatprep.subr.mxu0 0.0
    %1707 = vmatpush1.msra.mxu0 %v1434
    %1708 = vmatprep.subr.mxu0 0.0
    %1709 = vmatpush1.msra.mxu0 %v1435
    %1710 = vmatprep.subr.mxu0 0.0
    %1711 = vmatpush1.msra.mxu0 %v1436
    %1712 = vmatprep.subr.mxu0 0.0
    %1713 = vmatpush1.msra.mxu0 %v1437
    %1714 = vmatprep.subr.mxu0 0.0
    %1715 = vmatpush1.msra.mxu0 %v1438
    %1716 = vmatprep.subr.mxu0 0.0
    %1717 = vmatpush1.msra.mxu0 %v1439
    %1718 = vmatprep.subr.mxu0 0.0
    %1719 = vmatpush1.msra.mxu0 %v1440
    %1720 = vmatprep.subr.mxu0 0.0
    %1721 = vmatpush1.msra.mxu0 %v1441
    %1722 = vmatprep.subr.mxu0 0.0
    %1723 = vmatpush1.msra.mxu0 0.0
    %1724 = vmatprep.subr.mxu0 0.0
    %1725 = vmatpush1.msra.mxu0 0.0
    %1726 = vmatprep.subr.mxu0 0.0
    %1727 = vmatpush1.msra.mxu0 0.0
    %1728 = vmatprep.subr.mxu0 0.0
    %1729 = vmatpush1.msra.mxu0 0.0
    %1730 = vmatprep.subr.mxu0 0.0
    %1731 = vmatpush1.msra.mxu0 0.0
    %1732 = vmatprep.subr.mxu0 0.0
    %1733 = vmatpush1.msra.mxu0 0.0
    %1734 = vmatprep.subr.mxu0 0.0
    %1735 = vmatpush1.msra.mxu0 0.0
    %1736 = vmatprep.subr.mxu0 0.0
    %1737 = vmatpush1.msra.mxu0 0.0
    %1738 = vmatprep.subr.mxu0 0.0
    %1739 = vmatpush1.msra.mxu0 0.0
    %1740 = vmatprep.subr.mxu0 0.0
    %1741 = vmatpush1.msra.mxu0 0.0
    %1742 = vmatprep.subr.mxu0 0.0
    %1743 = vmatpush1.msra.mxu0 0.0
    %1744 = vmatprep.subr.mxu0 0.0
    %1745 = vmatpush1.msra.mxu0 0.0
    %1746 = vmatprep.subr.mxu0 0.0
    %1747 = vmatpush1.msra.mxu0 0.0
    %1748 = vmatprep.subr.mxu0 0.0
    %1749 = vmatpush1.msra.mxu0 0.0
    %1750 = vmatprep.subr.mxu0 0.0
    %1751 = vmatpush1.msra.mxu0 0.0
    %1752 = vmatprep.subr.mxu0 0.0
    %1753 = vmatpush1.msra.mxu0 0.0
    %1754 = vmatprep.subr.mxu0 0.0
    %1755 = vmatpush1.msra.mxu0 0.0
    %1756 = vmatprep.subr.mxu0 0.0
    %1757 = vmatpush1.msra.mxu0 0.0
    %1758 = vmatprep.subr.mxu0 0.0
    %1759 = vmatpush1.msra.mxu0 0.0
    %1760 = vmatprep.subr.mxu0 0.0
    %1761 = vmatpush1.msra.mxu0 0.0
    %1762 = vmatprep.subr.mxu0 0.0
    %1763 = vmatpush1.msra.mxu0 0.0
    %1764 = vmatprep.subr.mxu0 0.0
    %1765 = vmatpush1.msra.mxu0 0.0
    %1766 = vmatprep.subr.mxu0 0.0
    %1767 = vmatpush1.msra.mxu0 0.0
    %1768 = vmatprep.subr.mxu0 0.0
    %1769 = vmatpush1.msra.mxu0 0.0
    %1770 = vmatprep.mubr.f32.mxu0 0.0
    %1771 = vmatmul.mubr.f32.gmra.mrb[0].mxu0 %v1704
    %v1772 = vpop.f32.mrb[0].mxu0
    %v1773 = vadd.f32 %v1702, %v1772
    %v1774 = vpop.f32.mrb[0].mxu0
    %1775 = vdwg.mxu0
    %v1776 = vxor.u32 %v1773, 2147483648
    %v1777 = vmul.f32 %v1776, 1.442695
    %v1778 = vpow.pop %v1777
    %v1779 = vadd.f32 %v1778, 1.0
    %v1780 = vrcp.pop %v1779
    %v1781 = vmul.f32 1.0, %v1780
    %v1782 = vtanh.pop %v1773
    %v1783 = vsel %vm78, %v1782, %v1781
    %v1784 = vld [vmem:[#allocation7] sm:$0xf]
    %1786 = vrot.lane.b32.xlu0 %v1784, 32
    %v1787 = vpop.permute.xlu0 %1786
    %v1789 = vmul.f32 %v1783, %v1787
    %1791 = vrot.lane.b32.xlu0 %v1783, 64
    %v1792 = vpop.permute.xlu0 %1791
    %v1794 = vmul.f32 %v1783, %v1792
    %1796 = vrot.lane.b32.xlu0 %v1794, 32
    %v1797 = vpop.permute.xlu0 %1796
    %v1799 = vadd.f32 %v1789, %v1797
    %v1800 = vtanh.pop %v1799
    %1802 = vrot.lane.b32.xlu0 %v1800, 64
    %v1803 = vpop.permute.xlu0 %1802
    %v1805 = vmul.f32 %v1783, %v1803
    %1807 = vrot.lane.b32.xlu0 %v1799, 96
    %v1808 = vpop.permute.xlu0 %1807
    %1810 = vst.msk [vmem:[#allocation7] sm:$0xf] %vm195, %v1808
    %1812 = vrot.lane.b32.xlu0 %v1805, 32
    %v1813 = vpop.permute.xlu0 %1812
    %1815 = vrot.lane.b32.xlu0 %v1805, 64
    %v1816 = vpop.permute.xlu0 %1815
    %v1818 = vsel %vm329, %v1813, %v1816
    %v1819 = vmul.f32 %v1818, %v86
    %1820 = vst.msk [vmem:[#allocation6] sm:$0xf] %vm193, %v1819
    %1821 = vst.msk [vmem:[#allocation4 + $0x4] sm:$0x3] %vm333, %v1813
    %1822 = vst.msk [vmem:[#allocation5 + $0x8] sm:$0xc] %vm335, %v1813
    %v1823 = vld [vmem:[#allocation6] sm:$0xf]
    %v1824 = vld [vmem:[#allocation2 + $0x6] sm:$0x3]
    %v1825 = vld [vmem:[#allocation3 + $0x8] sm:$0x3]
    %v1827 = vrot.slane %v1825, 6
    %v1829 = vsel %vm211, %v1824, %v1827
    %v1831 = vsel %vm213, %v1823, 0
    %1833 = vmatprep.subr.mxu0 0.0
    %1834 = vmatpush1.msra.mxu0 %v1434
    %1835 = vmatprep.subr.mxu0 0.0
    %1836 = vmatpush1.msra.mxu0 %v1435
    %1837 = vmatprep.subr.mxu0 0.0
    %1838 = vmatpush1.msra.mxu0 %v1436
    %1839 = vmatprep.subr.mxu0 0.0
    %1840 = vmatpush1.msra.mxu0 %v1437
    %1841 = vmatprep.subr.mxu0 0.0
    %1842 = vmatpush1.msra.mxu0 %v1438
    %1843 = vmatprep.subr.mxu0 0.0
    %1844 = vmatpush1.msra.mxu0 %v1439
    %1845 = vmatprep.subr.mxu0 0.0
    %1846 = vmatpush1.msra.mxu0 %v1440
    %1847 = vmatprep.subr.mxu0 0.0
    %1848 = vmatpush1.msra.mxu0 %v1441
    %1849 = vmatprep.subr.mxu0 0.0
    %1850 = vmatpush1.msra.mxu0 0.0
    %1851 = vmatprep.subr.mxu0 0.0
    %1852 = vmatpush1.msra.mxu0 0.0
    %1853 = vmatprep.subr.mxu0 0.0
    %1854 = vmatpush1.msra.mxu0 0.0
    %1855 = vmatprep.subr.mxu0 0.0
    %1856 = vmatpush1.msra.mxu0 0.0
    %1857 = vmatprep.subr.mxu0 0.0
    %1858 = vmatpush1.msra.mxu0 0.0
    %1859 = vmatprep.subr.mxu0 0.0
    %1860 = vmatpush1.msra.mxu0 0.0
    %1861 = vmatprep.subr.mxu0 0.0
    %1862 = vmatpush1.msra.mxu0 0.0
    %1863 = vmatprep.subr.mxu0 0.0
    %1864 = vmatpush1.msra.mxu0 0.0
    %1865 = vmatprep.subr.mxu0 0.0
    %1866 = vmatpush1.msra.mxu0 0.0
    %1867 = vmatprep.subr.mxu0 0.0
    %1868 = vmatpush1.msra.mxu0 0.0
    %1869 = vmatprep.subr.mxu0 0.0
    %1870 = vmatpush1.msra.mxu0 0.0
    %1871 = vmatprep.subr.mxu0 0.0
    %1872 = vmatpush1.msra.mxu0 0.0
    %1873 = vmatprep.subr.mxu0 0.0
    %1874 = vmatpush1.msra.mxu0 0.0
    %1875 = vmatprep.subr.mxu0 0.0
    %1876 = vmatpush1.msra.mxu0 0.0
    %1877 = vmatprep.subr.mxu0 0.0
    %1878 = vmatpush1.msra.mxu0 0.0
    %1879 = vmatprep.subr.mxu0 0.0
    %1880 = vmatpush1.msra.mxu0 0.0
    %1881 = vmatprep.subr.mxu0 0.0
    %1882 = vmatpush1.msra.mxu0 0.0
    %1883 = vmatprep.subr.mxu0 0.0
    %1884 = vmatpush1.msra.mxu0 0.0
    %1885 = vmatprep.subr.mxu0 0.0
    %1886 = vmatpush1.msra.mxu0 0.0
    %1887 = vmatprep.subr.mxu0 0.0
    %1888 = vmatpush1.msra.mxu0 0.0
    %1889 = vmatprep.subr.mxu0 0.0
    %1890 = vmatpush1.msra.mxu0 0.0
    %1891 = vmatprep.subr.mxu0 0.0
    %1892 = vmatpush1.msra.mxu0 0.0
    %1893 = vmatprep.subr.mxu0 0.0
    %1894 = vmatpush1.msra.mxu0 0.0
    %1895 = vmatprep.subr.mxu0 0.0
    %1896 = vmatpush1.msra.mxu0 0.0
    %1897 = vmatprep.mubr.f32.mxu0 0.0
    %1898 = vmatmul.mubr.f32.gmra.mrb[0].mxu0 %v1831
    %v1899 = vpop.f32.mrb[0].mxu0
    %v1900 = vadd.f32 %v1829, %v1899
    %v1901 = vpop.f32.mrb[0].mxu0
    %1902 = vdwg.mxu0
    %v1903 = vxor.u32 %v1900, 2147483648
    %v1904 = vmul.f32 %v1903, 1.442695
    %v1905 = vpow.pop %v1904
    %v1906 = vadd.f32 %v1905, 1.0
    %v1907 = vrcp.pop %v1906
    %v1908 = vmul.f32 1.0, %v1907
    %v1909 = vtanh.pop %v1900
    %v1910 = vsel %vm78, %v1909, %v1908
    %v1911 = vld [vmem:[#allocation7] sm:$0xf]
    %1913 = vrot.lane.b32.xlu0 %v1911, 32
    %v1914 = vpop.permute.xlu0 %1913
    %v1916 = vmul.f32 %v1910, %v1914
    %1918 = vrot.lane.b32.xlu0 %v1910, 64
    %v1919 = vpop.permute.xlu0 %1918
    %v1921 = vmul.f32 %v1910, %v1919
    %1923 = vrot.lane.b32.xlu0 %v1921, 32
    %v1924 = vpop.permute.xlu0 %1923
    %v1926 = vadd.f32 %v1916, %v1924
    %v1927 = vtanh.pop %v1926
    %1929 = vrot.lane.b32.xlu0 %v1927, 64
    %v1930 = vpop.permute.xlu0 %1929
    %v1932 = vmul.f32 %v1910, %v1930
    %1934 = vrot.lane.b32.xlu0 %v1926, 96
    %v1935 = vpop.permute.xlu0 %1934
    %1937 = vst.msk [vmem:[#allocation7] sm:$0xf] %vm195, %v1935
    %1939 = vrot.lane.b32.xlu0 %v1932, 32
    %v1940 = vpop.permute.xlu0 %1939
    %1942 = vrot.lane.b32.xlu0 %v1932, 64
    %v1943 = vpop.permute.xlu0 %1942
    %v1945 = vsel %vm329, %v1940, %v1943
    %v1946 = vmul.f32 %v1945, %v86
    %1947 = vst.msk [vmem:[#allocation6] sm:$0xf] %vm193, %v1946
    %1948 = vst.msk [vmem:[#allocation4 + $0x6] sm:$0x3] %vm333, %v1940
    %1949 = vst.msk [vmem:[#allocation5 + $0x6] sm:$0xc] %vm335, %v1940
    %v1950 = vld [vmem:[#allocation6] sm:$0xf]
    %v1951 = vld [vmem:[#allocation2 + $0x8] sm:$0x3]
    %v1952 = vld [vmem:[#allocation3 + $0x6] sm:$0x3]
    %v1954 = vrot.slane %v1952, 6
    %v1956 = vsel %vm211, %v1951, %v1954
    %v1958 = vsel %vm213, %v1950, 0
    %1960 = vmatprep.subr.mxu0 0.0
    %1961 = vmatpush1.msra.mxu0 %v1434
    %1962 = vmatprep.subr.mxu0 0.0
    %1963 = vmatpush1.msra.mxu0 %v1435
    %1964 = vmatprep.subr.mxu0 0.0
    %1965 = vmatpush1.msra.mxu0 %v1436
    %1966 = vmatprep.subr.mxu0 0.0
    %1967 = vmatpush1.msra.mxu0 %v1437
    %1968 = vmatprep.subr.mxu0 0.0
    %1969 = vmatpush1.msra.mxu0 %v1438
    %1970 = vmatprep.subr.mxu0 0.0
    %1971 = vmatpush1.msra.mxu0 %v1439
    %1972 = vmatprep.subr.mxu0 0.0
    %1973 = vmatpush1.msra.mxu0 %v1440
    %1974 = vmatprep.subr.mxu0 0.0
    %1975 = vmatpush1.msra.mxu0 %v1441
    %1976 = vmatprep.subr.mxu0 0.0
    %1977 = vmatpush1.msra.mxu0 0.0
    %1978 = vmatprep.subr.mxu0 0.0
    %1979 = vmatpush1.msra.mxu0 0.0
    %1980 = vmatprep.subr.mxu0 0.0
    %1981 = vmatpush1.msra.mxu0 0.0
    %1982 = vmatprep.subr.mxu0 0.0
    %1983 = vmatpush1.msra.mxu0 0.0
    %1984 = vmatprep.subr.mxu0 0.0
    %1985 = vmatpush1.msra.mxu0 0.0
    %1986 = vmatprep.subr.mxu0 0.0
    %1987 = vmatpush1.msra.mxu0 0.0
    %1988 = vmatprep.subr.mxu0 0.0
    %1989 = vmatpush1.msra.mxu0 0.0
    %1990 = vmatprep.subr.mxu0 0.0
    %1991 = vmatpush1.msra.mxu0 0.0
    %1992 = vmatprep.subr.mxu0 0.0
    %1993 = vmatpush1.msra.mxu0 0.0
    %1994 = vmatprep.subr.mxu0 0.0
    %1995 = vmatpush1.msra.mxu0 0.0
    %1996 = vmatprep.subr.mxu0 0.0
    %1997 = vmatpush1.msra.mxu0 0.0
    %1998 = vmatprep.subr.mxu0 0.0
    %1999 = vmatpush1.msra.mxu0 0.0
    %2000 = vmatprep.subr.mxu0 0.0
    %2001 = vmatpush1.msra.mxu0 0.0
    %2002 = vmatprep.subr.mxu0 0.0
    %2003 = vmatpush1.msra.mxu0 0.0
    %2004 = vmatprep.subr.mxu0 0.0
    %2005 = vmatpush1.msra.mxu0 0.0
    %2006 = vmatprep.subr.mxu0 0.0
    %2007 = vmatpush1.msra.mxu0 0.0
    %2008 = vmatprep.subr.mxu0 0.0
    %2009 = vmatpush1.msra.mxu0 0.0
    %2010 = vmatprep.subr.mxu0 0.0
    %2011 = vmatpush1.msra.mxu0 0.0
    %2012 = vmatprep.subr.mxu0 0.0
    %2013 = vmatpush1.msra.mxu0 0.0
    %2014 = vmatprep.subr.mxu0 0.0
    %2015 = vmatpush1.msra.mxu0 0.0
    %2016 = vmatprep.subr.mxu0 0.0
    %2017 = vmatpush1.msra.mxu0 0.0
    %2018 = vmatprep.subr.mxu0 0.0
    %2019 = vmatpush1.msra.mxu0 0.0
    %2020 = vmatprep.subr.mxu0 0.0
    %2021 = vmatpush1.msra.mxu0 0.0
    %2022 = vmatprep.subr.mxu0 0.0
    %2023 = vmatpush1.msra.mxu0 0.0
    %2024 = vmatprep.mubr.f32.mxu0 0.0
    %2025 = vmatmul.mubr.f32.gmra.mrb[0].mxu0 %v1958
    %v2026 = vpop.f32.mrb[0].mxu0
    %v2027 = vadd.f32 %v1956, %v2026
    %v2028 = vpop.f32.mrb[0].mxu0
    %2029 = vdwg.mxu0
    %v2030 = vxor.u32 %v2027, 2147483648
    %v2031 = vmul.f32 %v2030, 1.442695
    %v2032 = vpow.pop %v2031
    %v2033 = vadd.f32 %v2032, 1.0
    %v2034 = vrcp.pop %v2033
    %v2035 = vmul.f32 1.0, %v2034
    %v2036 = vtanh.pop %v2027
    %v2037 = vsel %vm78, %v2036, %v2035
    %v2038 = vld [vmem:[#allocation7] sm:$0xf]
    %2040 = vrot.lane.b32.xlu0 %v2038, 32
    %v2041 = vpop.permute.xlu0 %2040
    %v2043 = vmul.f32 %v2037, %v2041
    %2045 = vrot.lane.b32.xlu0 %v2037, 64
    %v2046 = vpop.permute.xlu0 %2045
    %v2048 = vmul.f32 %v2037, %v2046
    %2050 = vrot.lane.b32.xlu0 %v2048, 32
    %v2051 = vpop.permute.xlu0 %2050
    %v2053 = vadd.f32 %v2043, %v2051
    %v2054 = vtanh.pop %v2053
    %2056 = vrot.lane.b32.xlu0 %v2054, 64
    %v2057 = vpop.permute.xlu0 %2056
    %v2059 = vmul.f32 %v2037, %v2057
    %2061 = vrot.lane.b32.xlu0 %v2053, 96
    %v2062 = vpop.permute.xlu0 %2061
    %2064 = vst.msk [vmem:[#allocation7] sm:$0xf] %vm195, %v2062
    %2066 = vrot.lane.b32.xlu0 %v2059, 32
    %v2067 = vpop.permute.xlu0 %2066
    %2069 = vrot.lane.b32.xlu0 %v2059, 64
    %v2070 = vpop.permute.xlu0 %2069
    %v2072 = vsel %vm329, %v2067, %v2070
    %v2073 = vmul.f32 %v2072, %v86
    %2074 = vst.msk [vmem:[#allocation6] sm:$0xf] %vm193, %v2073
    %2075 = vst.msk [vmem:[#allocation4 + $0x8] sm:$0x3] %vm333, %v2067
    %2076 = vst.msk [vmem:[#allocation5 + $0x4] sm:$0xc] %vm335, %v2067
    %v2077 = vld [vmem:[#allocation6] sm:$0xf]
    %v2078 = vld [vmem:[#allocation2 + $0xa] sm:$0x3]
    %v2079 = vld [vmem:[#allocation3 + $0x4] sm:$0x3]
    %v2081 = vrot.slane %v2079, 6
    %v2083 = vsel %vm211, %v2078, %v2081
    %v2085 = vsel %vm213, %v2077, 0
    %2087 = vmatprep.subr.mxu0 0.0
    %2088 = vmatpush1.msra.mxu0 %v1434
    %2089 = vmatprep.subr.mxu0 0.0
    %2090 = vmatpush1.msra.mxu0 %v1435
    %2091 = vmatprep.subr.mxu0 0.0
    %2092 = vmatpush1.msra.mxu0 %v1436
    %2093 = vmatprep.subr.mxu0 0.0
    %2094 = vmatpush1.msra.mxu0 %v1437
    %2095 = vmatprep.subr.mxu0 0.0
    %2096 = vmatpush1.msra.mxu0 %v1438
    %2097 = vmatprep.subr.mxu0 0.0
    %2098 = vmatpush1.msra.mxu0 %v1439
    %2099 = vmatprep.subr.mxu0 0.0
    %2100 = vmatpush1.msra.mxu0 %v1440
    %2101 = vmatprep.subr.mxu0 0.0
    %2102 = vmatpush1.msra.mxu0 %v1441
    %2103 = vmatprep.subr.mxu0 0.0
    %2104 = vmatpush1.msra.mxu0 0.0
    %2105 = vmatprep.subr.mxu0 0.0
    %2106 = vmatpush1.msra.mxu0 0.0
    %2107 = vmatprep.subr.mxu0 0.0
    %2108 = vmatpush1.msra.mxu0 0.0
    %2109 = vmatprep.subr.mxu0 0.0
    %2110 = vmatpush1.msra.mxu0 0.0
    %2111 = vmatprep.subr.mxu0 0.0
    %2112 = vmatpush1.msra.mxu0 0.0
    %2113 = vmatprep.subr.mxu0 0.0
    %2114 = vmatpush1.msra.mxu0 0.0
    %2115 = vmatprep.subr.mxu0 0.0
    %2116 = vmatpush1.msra.mxu0 0.0
    %2117 = vmatprep.subr.mxu0 0.0
    %2118 = vmatpush1.msra.mxu0 0.0
    %2119 = vmatprep.subr.mxu0 0.0
    %2120 = vmatpush1.msra.mxu0 0.0
    %2121 = vmatprep.subr.mxu0 0.0
    %2122 = vmatpush1.msra.mxu0 0.0
    %2123 = vmatprep.subr.mxu0 0.0
    %2124 = vmatpush1.msra.mxu0 0.0
    %2125 = vmatprep.subr.mxu0 0.0
    %2126 = vmatpush1.msra.mxu0 0.0
    %2127 = vmatprep.subr.mxu0 0.0
    %2128 = vmatpush1.msra.mxu0 0.0
    %2129 = vmatprep.subr.mxu0 0.0
    %2130 = vmatpush1.msra.mxu0 0.0
    %2131 = vmatprep.subr.mxu0 0.0
    %2132 = vmatpush1.msra.mxu0 0.0
    %2133 = vmatprep.subr.mxu0 0.0
    %2134 = vmatpush1.msra.mxu0 0.0
    %2135 = vmatprep.subr.mxu0 0.0
    %2136 = vmatpush1.msra.mxu0 0.0
    %2137 = vmatprep.subr.mxu0 0.0
    %2138 = vmatpush1.msra.mxu0 0.0
    %2139 = vmatprep.subr.mxu0 0.0
    %2140 = vmatpush1.msra.mxu0 0.0
    %2141 = vmatprep.subr.mxu0 0.0
    %2142 = vmatpush1.msra.mxu0 0.0
    %2143 = vmatprep.subr.mxu0 0.0
    %2144 = vmatpush1.msra.mxu0 0.0
    %2145 = vmatprep.subr.mxu0 0.0
    %2146 = vmatpush1.msra.mxu0 0.0
    %2147 = vmatprep.subr.mxu0 0.0
    %2148 = vmatpush1.msra.mxu0 0.0
    %2149 = vmatprep.subr.mxu0 0.0
    %2150 = vmatpush1.msra.mxu0 0.0
    %2151 = vmatprep.mubr.f32.mxu0 0.0
    %2152 = vmatmul.mubr.f32.gmra.mrb[0].mxu0 %v2085
    %v2153 = vpop.f32.mrb[0].mxu0
    %v2154 = vadd.f32 %v2083, %v2153
    %v2155 = vpop.f32.mrb[0].mxu0
    %2156 = vdwg.mxu0
    %v2157 = vxor.u32 %v2154, 2147483648
    %v2158 = vmul.f32 %v2157, 1.442695
    %v2159 = vpow.pop %v2158
    %v2160 = vadd.f32 %v2159, 1.0
    %v2161 = vrcp.pop %v2160
    %v2162 = vmul.f32 1.0, %v2161
    %v2163 = vtanh.pop %v2154
    %v2164 = vsel %vm78, %v2163, %v2162
    %v2165 = vld [vmem:[#allocation7] sm:$0xf]
    %2167 = vrot.lane.b32.xlu0 %v2165, 32
    %v2168 = vpop.permute.xlu0 %2167
    %v2170 = vmul.f32 %v2164, %v2168
    %2172 = vrot.lane.b32.xlu0 %v2164, 64
    %v2173 = vpop.permute.xlu0 %2172
    %v2175 = vmul.f32 %v2164, %v2173
    %2177 = vrot.lane.b32.xlu0 %v2175, 32
    %v2178 = vpop.permute.xlu0 %2177
    %v2180 = vadd.f32 %v2170, %v2178
    %v2181 = vtanh.pop %v2180
    %2183 = vrot.lane.b32.xlu0 %v2181, 64
    %v2184 = vpop.permute.xlu0 %2183
    %v2186 = vmul.f32 %v2164, %v2184
    %2188 = vrot.lane.b32.xlu0 %v2180, 96
    %v2189 = vpop.permute.xlu0 %2188
    %2191 = vst.msk [vmem:[#allocation7] sm:$0xf] %vm195, %v2189
    %2193 = vrot.lane.b32.xlu0 %v2186, 32
    %v2194 = vpop.permute.xlu0 %2193
    %2196 = vrot.lane.b32.xlu0 %v2186, 64
    %v2197 = vpop.permute.xlu0 %2196
    %v2199 = vsel %vm329, %v2194, %v2197
    %v2200 = vmul.f32 %v2199, %v86
    %2201 = vst.msk [vmem:[#allocation6] sm:$0xf] %vm193, %v2200
    %2202 = vst.msk [vmem:[#allocation4 + $0xa] sm:$0x3] %vm333, %v2194
    %2203 = vst.msk [vmem:[#allocation5 + $0x2] sm:$0xc] %vm335, %v2194
    %v2204 = vld [vmem:[#allocation6] sm:$0xf]
    %v2205 = vld [vmem:[#allocation2 + $0xc] sm:$0x3]
    %v2206 = vld [vmem:[#allocation3 + $0x2] sm:$0x3]
    %v2208 = vrot.slane %v2206, 6
    %v2210 = vsel %vm211, %v2205, %v2208
    %v2212 = vsel %vm213, %v2204, 0
    %2214 = vmatprep.subr.mxu0 0.0
    %2215 = vmatpush1.msra.mxu0 %v1434
    %2216 = vmatprep.subr.mxu0 0.0
    %2217 = vmatpush1.msra.mxu0 %v1435
    %2218 = vmatprep.subr.mxu0 0.0
    %2219 = vmatpush1.msra.mxu0 %v1436
    %2220 = vmatprep.subr.mxu0 0.0
    %2221 = vmatpush1.msra.mxu0 %v1437
    %2222 = vmatprep.subr.mxu0 0.0
    %2223 = vmatpush1.msra.mxu0 %v1438
    %2224 = vmatprep.subr.mxu0 0.0
    %2225 = vmatpush1.msra.mxu0 %v1439
    %2226 = vmatprep.subr.mxu0 0.0
    %2227 = vmatpush1.msra.mxu0 %v1440
    %2228 = vmatprep.subr.mxu0 0.0
    %2229 = vmatpush1.msra.mxu0 %v1441
    %2230 = vmatprep.subr.mxu0 0.0
    %2231 = vmatpush1.msra.mxu0 0.0
    %2232 = vmatprep.subr.mxu0 0.0
    %2233 = vmatpush1.msra.mxu0 0.0
    %2234 = vmatprep.subr.mxu0 0.0
    %2235 = vmatpush1.msra.mxu0 0.0
    %2236 = vmatprep.subr.mxu0 0.0
    %2237 = vmatpush1.msra.mxu0 0.0
    %2238 = vmatprep.subr.mxu0 0.0
    %2239 = vmatpush1.msra.mxu0 0.0
    %2240 = vmatprep.subr.mxu0 0.0
    %2241 = vmatpush1.msra.mxu0 0.0
    %2242 = vmatprep.subr.mxu0 0.0
    %2243 = vmatpush1.msra.mxu0 0.0
    %2244 = vmatprep.subr.mxu0 0.0
    %2245 = vmatpush1.msra.mxu0 0.0
    %2246 = vmatprep.subr.mxu0 0.0
    %2247 = vmatpush1.msra.mxu0 0.0
    %2248 = vmatprep.subr.mxu0 0.0
    %2249 = vmatpush1.msra.mxu0 0.0
    %2250 = vmatprep.subr.mxu0 0.0
    %2251 = vmatpush1.msra.mxu0 0.0
    %2252 = vmatprep.subr.mxu0 0.0
    %2253 = vmatpush1.msra.mxu0 0.0
    %2254 = vmatprep.subr.mxu0 0.0
    %2255 = vmatpush1.msra.mxu0 0.0
    %2256 = vmatprep.subr.mxu0 0.0
    %2257 = vmatpush1.msra.mxu0 0.0
    %2258 = vmatprep.subr.mxu0 0.0
    %2259 = vmatpush1.msra.mxu0 0.0
    %2260 = vmatprep.subr.mxu0 0.0
    %2261 = vmatpush1.msra.mxu0 0.0
    %2262 = vmatprep.subr.mxu0 0.0
    %2263 = vmatpush1.msra.mxu0 0.0
    %2264 = vmatprep.subr.mxu0 0.0
    %2265 = vmatpush1.msra.mxu0 0.0
    %2266 = vmatprep.subr.mxu0 0.0
    %2267 = vmatpush1.msra.mxu0 0.0
    %2268 = vmatprep.subr.mxu0 0.0
    %2269 = vmatpush1.msra.mxu0 0.0
    %2270 = vmatprep.subr.mxu0 0.0
    %2271 = vmatpush1.msra.mxu0 0.0
    %2272 = vmatprep.subr.mxu0 0.0
    %2273 = vmatpush1.msra.mxu0 0.0
    %2274 = vmatprep.subr.mxu0 0.0
    %2275 = vmatpush1.msra.mxu0 0.0
    %2276 = vmatprep.subr.mxu0 0.0
    %2277 = vmatpush1.msra.mxu0 0.0
    %2278 = vmatprep.mubr.f32.mxu0 0.0
    %2279 = vmatmul.mubr.f32.gmra.mrb[0].mxu0 %v2212
    %v2280 = vpop.f32.mrb[0].mxu0
    %v2281 = vadd.f32 %v2210, %v2280
    %v2282 = vpop.f32.mrb[0].mxu0
    %2283 = vdwg.mxu0
    %v2284 = vxor.u32 %v2281, 2147483648
    %v2285 = vmul.f32 %v2284, 1.442695
    %v2286 = vpow.pop %v2285
    %v2287 = vadd.f32 %v2286, 1.0
    %v2288 = vrcp.pop %v2287
    %v2289 = vmul.f32 1.0, %v2288
    %v2290 = vtanh.pop %v2281
    %v2291 = vsel %vm78, %v2290, %v2289
    %v2292 = vld [vmem:[#allocation7] sm:$0xf]
    %2294 = vrot.lane.b32.xlu0 %v2292, 32
    %v2295 = vpop.permute.xlu0 %2294
    %v2297 = vmul.f32 %v2291, %v2295
    %2299 = vrot.lane.b32.xlu0 %v2291, 64
    %v2300 = vpop.permute.xlu0 %2299
    %v2302 = vmul.f32 %v2291, %v2300
    %2304 = vrot.lane.b32.xlu0 %v2302, 32
    %v2305 = vpop.permute.xlu0 %2304
    %v2307 = vadd.f32 %v2297, %v2305
    %v2308 = vtanh.pop %v2307
    %2310 = vrot.lane.b32.xlu0 %v2308, 64
    %v2311 = vpop.permute.xlu0 %2310
    %v2313 = vmul.f32 %v2291, %v2311
    %2315 = vrot.lane.b32.xlu0 %v2307, 96
    %v2316 = vpop.permute.xlu0 %2315
    %2318 = vst.msk [vmem:[#allocation7] sm:$0xf] %vm195, %v2316
    %2320 = vrot.lane.b32.xlu0 %v2313, 32
    %v2321 = vpop.permute.xlu0 %2320
    %2323 = vrot.lane.b32.xlu0 %v2313, 64
    %v2324 = vpop.permute.xlu0 %2323
    %v2326 = vsel %vm329, %v2321, %v2324
    %v2327 = vmul.f32 %v2326, %v86
    %2328 = vst.msk [vmem:[#allocation6] sm:$0xf] %vm193, %v2327
    %2329 = vst.msk [vmem:[#allocation4 + $0xc] sm:$0x3] %vm333, %v2321
    %2330 = vst.msk [vmem:[#allocation5] sm:$0xc] %vm335, %v2321
    %v2331 = vld [vmem:[#allocation6] sm:$0xf]
    %v2332 = vld [vmem:[#allocation2 + $0xe] sm:$0x3]
    %v2333 = vld [vmem:[#allocation3] sm:$0x3]
    %v2335 = vrot.slane %v2333, 6
    %v2337 = vsel %vm211, %v2332, %v2335
    %v2339 = vsel %vm213, %v2331, 0
    %2341 = vmatprep.subr.mxu0 0.0
    %2342 = vmatpush1.msra.mxu0 %v1434
    %2343 = vmatprep.subr.mxu0 0.0
    %2344 = vmatpush1.msra.mxu0 %v1435
    %2345 = vmatprep.subr.mxu0 0.0
    %2346 = vmatpush1.msra.mxu0 %v1436
    %2347 = vmatprep.subr.mxu0 0.0
    %2348 = vmatpush1.msra.mxu0 %v1437
    %2349 = vmatprep.subr.mxu0 0.0
    %2350 = vmatpush1.msra.mxu0 %v1438
    %2351 = vmatprep.subr.mxu0 0.0
    %2352 = vmatpush1.msra.mxu0 %v1439
    %2353 = vmatprep.subr.mxu0 0.0
    %2354 = vmatpush1.msra.mxu0 %v1440
    %2355 = vmatprep.subr.mxu0 0.0
    %2356 = vmatpush1.msra.mxu0 %v1441
    %2357 = vmatprep.subr.mxu0 0.0
    %2358 = vmatpush1.msra.mxu0 0.0
    %2359 = vmatprep.subr.mxu0 0.0
    %2360 = vmatpush1.msra.mxu0 0.0
    %2361 = vmatprep.subr.mxu0 0.0
    %2362 = vmatpush1.msra.mxu0 0.0
    %2363 = vmatprep.subr.mxu0 0.0
    %2364 = vmatpush1.msra.mxu0 0.0
    %2365 = vmatprep.subr.mxu0 0.0
    %2366 = vmatpush1.msra.mxu0 0.0
    %2367 = vmatprep.subr.mxu0 0.0
    %2368 = vmatpush1.msra.mxu0 0.0
    %2369 = vmatprep.subr.mxu0 0.0
    %2370 = vmatpush1.msra.mxu0 0.0
    %2371 = vmatprep.subr.mxu0 0.0
    %2372 = vmatpush1.msra.mxu0 0.0
    %2373 = vmatprep.subr.mxu0 0.0
    %2374 = vmatpush1.msra.mxu0 0.0
    %2375 = vmatprep.subr.mxu0 0.0
    %2376 = vmatpush1.msra.mxu0 0.0
    %2377 = vmatprep.subr.mxu0 0.0
    %2378 = vmatpush1.msra.mxu0 0.0
    %2379 = vmatprep.subr.mxu0 0.0
    %2380 = vmatpush1.msra.mxu0 0.0
    %2381 = vmatprep.subr.mxu0 0.0
    %2382 = vmatpush1.msra.mxu0 0.0
    %2383 = vmatprep.subr.mxu0 0.0
    %2384 = vmatpush1.msra.mxu0 0.0
    %2385 = vmatprep.subr.mxu0 0.0
    %2386 = vmatpush1.msra.mxu0 0.0
    %2387 = vmatprep.subr.mxu0 0.0
    %2388 = vmatpush1.msra.mxu0 0.0
    %2389 = vmatprep.subr.mxu0 0.0
    %2390 = vmatpush1.msra.mxu0 0.0
    %2391 = vmatprep.subr.mxu0 0.0
    %2392 = vmatpush1.msra.mxu0 0.0
    %2393 = vmatprep.subr.mxu0 0.0
    %2394 = vmatpush1.msra.mxu0 0.0
    %2395 = vmatprep.subr.mxu0 0.0
    %2396 = vmatpush1.msra.mxu0 0.0
    %2397 = vmatprep.subr.mxu0 0.0
    %2398 = vmatpush1.msra.mxu0 0.0
    %2399 = vmatprep.subr.mxu0 0.0
    %2400 = vmatpush1.msra.mxu0 0.0
    %2401 = vmatprep.subr.mxu0 0.0
    %2402 = vmatpush1.msra.mxu0 0.0
    %2403 = vmatprep.subr.mxu0 0.0
    %2404 = vmatpush1.msra.mxu0 0.0
    %2405 = vmatprep.mubr.f32.mxu0 0.0
    %2406 = vmatmul.mubr.f32.gmra.mrb[0].mxu0 %v2339
    %v2407 = vpop.f32.mrb[0].mxu0
    %v2408 = vadd.f32 %v2337, %v2407
    %v2409 = vpop.f32.mrb[0].mxu0
    %2410 = vdwg.mxu0
    %v2411 = vxor.u32 %v2408, 2147483648
    %v2412 = vmul.f32 %v2411, 1.442695
    %v2413 = vpow.pop %v2412
    %v2414 = vadd.f32 %v2413, 1.0
    %v2415 = vrcp.pop %v2414
    %v2416 = vmul.f32 1.0, %v2415
    %v2417 = vtanh.pop %v2408
    %v2418 = vsel %vm78, %v2417, %v2416
    %v2419 = vld [vmem:[#allocation7] sm:$0xf]
    %2421 = vrot.lane.b32.xlu0 %v2419, 32
    %v2422 = vpop.permute.xlu0 %2421
    %v2424 = vmul.f32 %v2418, %v2422
    %2426 = vrot.lane.b32.xlu0 %v2418, 64
    %v2427 = vpop.permute.xlu0 %2426
    %v2429 = vmul.f32 %v2418, %v2427
    %2431 = vrot.lane.b32.xlu0 %v2429, 32
    %v2432 = vpop.permute.xlu0 %2431
    %v2434 = vadd.f32 %v2424, %v2432
    %v2435 = vtanh.pop %v2434
    %2437 = vrot.lane.b32.xlu0 %v2435, 64
    %v2438 = vpop.permute.xlu0 %2437
    %v2440 = vmul.f32 %v2418, %v2438
    %2442 = vrot.lane.b32.xlu0 %v2434, 96
    %v2443 = vpop.permute.xlu0 %2442
    %2445 = vst.msk [vmem:[#allocation7] sm:$0xf] %vm195, %v2443
    %2447 = vrot.lane.b32.xlu0 %v2440, 32
    %v2448 = vpop.permute.xlu0 %2447
    %2450 = vrot.lane.b32.xlu0 %v2440, 64
    %v2451 = vpop.permute.xlu0 %2450
    %v2453 = vsel %vm329, %v2448, %v2451
    %v2454 = vmul.f32 %v2453, %v86
    %2455 = vst.msk [vmem:[#allocation6] sm:$0xf] %vm193, %v2454
    %2456 = vst.msk [vmem:[#allocation4 + $0xe] sm:$0x3] %vm333, %v2448
    %2457 = vst.msk [vmem:[#allocation5 - $0x2] sm:$0xc] %vm335, %v2448
    %v2458 = vld [vmem:[#allocation4] sm:$0xff]
    %v2459 = vld [vmem:[#allocation4 + $0x8] sm:$0xff]
    %v2460 = vld [vmem:[%s7] sm:$0xff]
    %v2461 = vld [vmem:[%s7 + $0x8] sm:$0xff]
    %v2462 = vld [vmem:[%s7 + $0x10] sm:$0xff]
    %v2463 = vld [vmem:[%s7 + $0x18] sm:$0xff]
    %v2464 = vld [vmem:[#allocation5] sm:$0xff]
    %v2465 = vld [vmem:[#allocation5 + $0x8] sm:$0xff]
    %v2466 = vld [vmem:[%s7 + $0x20] sm:$0xff]
    %v2467 = vld [vmem:[%s7 + $0x28] sm:$0xff]
    %v2468 = vld [vmem:[%s7 + $0x30] sm:$0xff]
    %v2469 = vld [vmem:[%s7 + $0x38] sm:$0xff]
    %v2471 = vsel %vm329, %v2464, 0
    %v2474 = vsel %vm329, %v2465, 0
    %2476 = vmatprep.subr.mxu0 0.0
    %2477 = vmatpush1.msra.mxu0 %v2466
    %2478 = vmatprep.subr.mxu0 0.0
    %2479 = vmatpush1.msra.mxu0 %v2467
    %2480 = vmatprep.subr.mxu0 0.0
    %2481 = vmatpush1.msra.mxu0 %v2468
    %2482 = vmatprep.subr.mxu0 0.0
    %2483 = vmatpush1.msra.mxu0 %v2469
    %2484 = vmatprep.subr.mxu0 0.0
    %2485 = vmatpush1.msra.mxu0 0.0
    %2486 = vmatprep.subr.mxu0 0.0
    %2487 = vmatpush1.msra.mxu0 0.0
    %2488 = vmatprep.subr.mxu0 0.0
    %2489 = vmatpush1.msra.mxu0 0.0
    %2490 = vmatprep.subr.mxu0 0.0
    %2491 = vmatpush1.msra.mxu0 0.0
    %2492 = vmatprep.subr.mxu0 0.0
    %2493 = vmatpush1.msra.mxu0 0.0
    %2494 = vmatprep.subr.mxu0 0.0
    %2495 = vmatpush1.msra.mxu0 0.0
    %2496 = vmatprep.subr.mxu0 0.0
    %2497 = vmatpush1.msra.mxu0 0.0
    %2498 = vmatprep.subr.mxu0 0.0
    %2499 = vmatpush1.msra.mxu0 0.0
    %2500 = vmatprep.subr.mxu0 0.0
    %2501 = vmatpush1.msra.mxu0 0.0
    %2502 = vmatprep.subr.mxu0 0.0
    %2503 = vmatpush1.msra.mxu0 0.0
    %2504 = vmatprep.subr.mxu0 0.0
    %2505 = vmatpush1.msra.mxu0 0.0
    %2506 = vmatprep.subr.mxu0 0.0
    %2507 = vmatpush1.msra.mxu0 0.0
    %2508 = vmatprep.subr.mxu0 0.0
    %2509 = vmatpush1.msra.mxu0 0.0
    %2510 = vmatprep.subr.mxu0 0.0
    %2511 = vmatpush1.msra.mxu0 0.0
    %2512 = vmatprep.subr.mxu0 0.0
    %2513 = vmatpush1.msra.mxu0 0.0
    %2514 = vmatprep.subr.mxu0 0.0
    %2515 = vmatpush1.msra.mxu0 0.0
    %2516 = vmatprep.subr.mxu0 0.0
    %2517 = vmatpush1.msra.mxu0 0.0
    %2518 = vmatprep.subr.mxu0 0.0
    %2519 = vmatpush1.msra.mxu0 0.0
    %2520 = vmatprep.subr.mxu0 0.0
    %2521 = vmatpush1.msra.mxu0 0.0
    %2522 = vmatprep.subr.mxu0 0.0
    %2523 = vmatpush1.msra.mxu0 0.0
    %2524 = vmatprep.subr.mxu0 0.0
    %2525 = vmatpush1.msra.mxu0 0.0
    %2526 = vmatprep.subr.mxu0 0.0
    %2527 = vmatpush1.msra.mxu0 0.0
    %2528 = vmatprep.subr.mxu0 0.0
    %2529 = vmatpush1.msra.mxu0 0.0
    %2530 = vmatprep.subr.mxu0 0.0
    %2531 = vmatpush1.msra.mxu0 0.0
    %2532 = vmatprep.subr.mxu0 0.0
    %2533 = vmatpush1.msra.mxu0 0.0
    %2534 = vmatprep.subr.mxu0 0.0
    %2535 = vmatpush1.msra.mxu0 0.0
    %2536 = vmatprep.subr.mxu0 0.0
    %2537 = vmatpush1.msra.mxu0 0.0
    %2538 = vmatprep.subr.mxu0 0.0
    %2539 = vmatpush1.msra.mxu0 0.0
    %2540 = vmatprep.mubr.f32.mxu0 0.0
    %2541 = vmatmul.mubr.f32.gmra.mrb[0].mxu0 %v2471
    %v2542 = vpop.f32.mrb[0].mxu0
    %v2543 = vadd.f32 0.0, %v2542
    %v2544 = vpop.f32.mrb[0].mxu0
    %2545 = vmatprep.mubr.f32.mxu0 0.0
    %2546 = vmatmul.mubr.f32.gmra.mrb[0].mxu0 %v2474
    %v2547 = vpop.f32.mrb[0].mxu0
    %v2548 = vadd.f32 0.0, %v2547
    %v2549 = vpop.f32.mrb[0].mxu0
    %2550 = vdwg.mxu0
    %v2552 = vsel %vm329, %v2458, 0
    %v2555 = vsel %vm329, %v2459, 0
    %2557 = vmatprep.subr.mxu0 0.0
    %2558 = vmatpush1.msra.mxu0 %v2460
    %2559 = vmatprep.subr.mxu0 0.0
    %2560 = vmatpush1.msra.mxu0 %v2461
    %2561 = vmatprep.subr.mxu0 0.0
    %2562 = vmatpush1.msra.mxu0 %v2462
    %2563 = vmatprep.subr.mxu0 0.0
    %2564 = vmatpush1.msra.mxu0 %v2463
    %2565 = vmatprep.subr.mxu0 0.0
    %2566 = vmatpush1.msra.mxu0 0.0
    %2567 = vmatprep.subr.mxu0 0.0
    %2568 = vmatpush1.msra.mxu0 0.0
    %2569 = vmatprep.subr.mxu0 0.0
    %2570 = vmatpush1.msra.mxu0 0.0
    %2571 = vmatprep.subr.mxu0 0.0
    %2572 = vmatpush1.msra.mxu0 0.0
    %2573 = vmatprep.subr.mxu0 0.0
    %2574 = vmatpush1.msra.mxu0 0.0
    %2575 = vmatprep.subr.mxu0 0.0
    %2576 = vmatpush1.msra.mxu0 0.0
    %2577 = vmatprep.subr.mxu0 0.0
    %2578 = vmatpush1.msra.mxu0 0.0
    %2579 = vmatprep.subr.mxu0 0.0
    %2580 = vmatpush1.msra.mxu0 0.0
    %2581 = vmatprep.subr.mxu0 0.0
    %2582 = vmatpush1.msra.mxu0 0.0
    %2583 = vmatprep.subr.mxu0 0.0
    %2584 = vmatpush1.msra.mxu0 0.0
    %2585 = vmatprep.subr.mxu0 0.0
    %2586 = vmatpush1.msra.mxu0 0.0
    %2587 = vmatprep.subr.mxu0 0.0
    %2588 = vmatpush1.msra.mxu0 0.0
    %2589 = vmatprep.subr.mxu0 0.0
    %2590 = vmatpush1.msra.mxu0 0.0
    %2591 = vmatprep.subr.mxu0 0.0
    %2592 = vmatpush1.msra.mxu0 0.0
    %2593 = vmatprep.subr.mxu0 0.0
    %2594 = vmatpush1.msra.mxu0 0.0
    %2595 = vmatprep.subr.mxu0 0.0
    %2596 = vmatpush1.msra.mxu0 0.0
    %2597 = vmatprep.subr.mxu0 0.0
    %2598 = vmatpush1.msra.mxu0 0.0
    %2599 = vmatprep.subr.mxu0 0.0
    %2600 = vmatpush1.msra.mxu0 0.0
    %2601 = vmatprep.subr.mxu0 0.0
    %2602 = vmatpush1.msra.mxu0 0.0
    %2603 = vmatprep.subr.mxu0 0.0
    %2604 = vmatpush1.msra.mxu0 0.0
    %2605 = vmatprep.subr.mxu0 0.0
    %2606 = vmatpush1.msra.mxu0 0.0
    %2607 = vmatprep.subr.mxu0 0.0
    %2608 = vmatpush1.msra.mxu0 0.0
    %2609 = vmatprep.subr.mxu0 0.0
    %2610 = vmatpush1.msra.mxu0 0.0
    %2611 = vmatprep.subr.mxu0 0.0
    %2612 = vmatpush1.msra.mxu0 0.0
    %2613 = vmatprep.subr.mxu0 0.0
    %2614 = vmatpush1.msra.mxu0 0.0
    %2615 = vmatprep.subr.mxu0 0.0
    %2616 = vmatpush1.msra.mxu0 0.0
    %2617 = vmatprep.subr.mxu0 0.0
    %2618 = vmatpush1.msra.mxu0 0.0
    %2619 = vmatprep.subr.mxu0 0.0
    %2620 = vmatpush1.msra.mxu0 0.0
    %2621 = vmatprep.mubr.f32.mxu0 0.0
    %2622 = vmatmul.mubr.f32.gmra.mrb[0].mxu0 %v2552
    %v2623 = vpop.f32.mrb[0].mxu0
    %v2624 = vadd.f32 %v2543, %v2623
    %v2625 = vpop.f32.mrb[0].mxu0
    %2626 = vmatprep.mubr.f32.mxu0 0.0
    %2627 = vmatmul.mubr.f32.gmra.mrb[0].mxu0 %v2555
    %v2628 = vpop.f32.mrb[0].mxu0
    %v2629 = vadd.f32 %v2548, %v2628
    %v2630 = vpop.f32.mrb[0].mxu0
    %2631 = vdwg.mxu0
    %v2632 = vld [vmem:[%s8] sm:$0x1]
    %v2634 = vlaneseq
    %v2635 = vshrl.u32 %v2634, 7
    %v2636 = vsub.s32 0, %v2635
    %v2637 = vrot.slane %v2632, %v2636
    %v2639 = vadd.f32 %v2624, %v2637
    %v2640 = vadd.f32 %v2629, %v2637
    %v2641 = vmax.f32 %v2639, 0.0
    %v2642 = vmax.f32 %v2640, 0.0
    %vm2643 = vcmask 64512
    %2644 = vst.msk [vmem:[#allocation14] sm:$0xff] %vm2643, %v2641
    %2645 = vst.msk [vmem:[#allocation14 + $0x8] sm:$0xff] %vm2643, %v2642
    // Predicated region
    $region50: #{simple_lstm_forward.1} parent=1 // pred_check
      _
    $region51: #{simple_lstm_forward.1} parent=1 // pred_check_branch
      %2647 = sbr.rel (0) target = $region53
    $region52: #{simple_lstm_forward.1} parent=1 // pred_region
      %s2649 = ssub.s32 256, 256
      %2650 = vsyncadd [#allocation10], %s2649
      %s2651 = sshll.u32 [#allocation14], 4
      %s2652 = int_to_ptr.vmem [resolvable:$true] %s2651
      %2657 = dma.vmem_to_hbm [thread:$0]  %s2652, 256, %s9, [#allocation10], 128, 128, 8
    $region53: #{simple_lstm_forward.1} parent=1 // pred_fallthru
      _
    // Predicated region
    $region54: #{simple_lstm_forward.1} parent=1 // pred_check
      _
    $region55: #{simple_lstm_forward.1} parent=1 // pred_check_branch
      %2659 = sbr.rel (0) target = $region57
    $region56: #{simple_lstm_forward.1} parent=1 // pred_region
      %2660 = dma.done [#allocation10], 256
    $region57: #{simple_lstm_forward.1} parent=1 // pred_fallthru
      _
    %2661 = vsyncpa [#allocation9], 1
    %2662 = vsyncpa [#allocation12], 1
    %2663 = vsyncpa [#allocation10], 1

</llo_original>
